<compile_context>
chip_gen: v5e
topology: v5e:2x2
jax: 0.10.0
libtpu: 0.0.40
codegen_flags: <defaults>
</compile_context>

<pallas_src>
import numpy as np
import jax
import jax.numpy as jnp
from jax.experimental import pallas as pl
from jax.experimental.pallas import tpu as pltpu


def _round_up(x, m):
    return ((x + m - 1) // m) * m


def _dft_corner_mats(n, corner):
    """Rows of the ortho-normalized DFT matrix corresponding to the LAST
    `corner` indices AFTER fftshift, i.e. fftshift(fft(x, norm='ortho'))[-corner:].
    np.fft.fftshift(y)[k] == y[(k - n//2) % n]  (correct for even AND odd n)."""
    ks = np.arange(n - corner, n)
    orig = (ks - n // 2) % n
    idx = np.arange(n)
    ang = -2.0 * np.pi * np.outer(orig, idx) / n
    scale = 1.0 / np.sqrt(n)
    return ((np.cos(ang) * scale).astype(np.float32),
            (np.sin(ang) * scale).astype(np.float32))


def _make_kernel(H, W, CH, CW, CHp, HC, WC):
    f32 = jnp.float32
    inv_3hw = 1.0 / (3.0 * H * W)
    inv_smooth = 1.0 / ((H + 1) * (W + 1))
    inv_tvh = 1.0 / (3.0 * (H - 1) * W)
    inv_tvw = 1.0 / (3.0 * H * (W - 1))
    inv_freq = 1.0 / (3.0 * CH * CW)

    def kernel(q1l_ref, q2l_ref, inl_ref, q1h_ref, q2h_ref, inh_ref,
               arai_ref, bblk_ref, o_ref, canvas_ref):
        # One batch item per grid step.
        Q1l = q1l_ref[0].astype(f32)      # (4, H, W)
        Q2l = q2l_ref[0].astype(f32)
        Inl = inl_ref[0].astype(f32)      # (3, H, W)
        Q1h = q1h_ref[0].astype(f32)
        Q2h = q2h_ref[0].astype(f32)
        Inh = inh_ref[0].astype(f32)
        ArAi = arai_ref[...]              # (2*CHp, H)  [Ar ; Ai] (zero-padded rows)
        Bblk = bblk_ref[...]              # (6*W, 12*CW) block-diag of [BrT | BiT]

        def quat(Q):
            return Q[0], Q[1], Q[2], Q[3]

        # ----- Hamilton product (imaginary / channel 1:4 part only) -----
        def ham_channels(Q1, Q2):
            a, b, c, d = quat(Q1)
            e, f, g, h = quat(Q2)
            return (a * f + b * e + c * h - d * g,
                    a * g - b * h + c * e + d * f,
                    a * h + b * g - c * f + d * e)

        def ham_l1(Q1, Q2, In):
            # Fused Hamilton + L1: mutal reconstructions are reduced
            # immediately, channel by channel, and never kept around.
            a, b, c, d = quat(Q1)
            e, f, g, h = quat(Q2)
            s = jnp.sum(jnp.abs(a * f + b * e + c * h - d * g - In[0]))
            s = s + jnp.sum(jnp.abs(a * g - b * h + c * e + d * f - In[1]))
            s = s + jnp.sum(jnp.abs(a * h + b * g - c * f + d * e - In[2]))
            return s * inv_3hw

        recon_low = ham_channels(Q1l, Q2l)     # kept: needed for L1 + freq term
        recon_high = ham_channels(Q1h, Q2h)

        def l1_vs(comps, In):
            s = jnp.sum(jnp.abs(comps[0] - In[0]))
            s = s + jnp.sum(jnp.abs(comps[1] - In[1]))
            s = s + jnp.sum(jnp.abs(comps[2] - In[2]))
            return s * inv_3hw

        recon_loss_low = l1_vs(recon_low, Inl)
        recon_loss_high = l1_vs(recon_high, Inh)
        recon_loss_mutal_low = ham_l1(Q1h, Q2l, Inl)
        recon_loss_mutal_high = ham_l1(Q1l, Q2h, Inh)

        R_low = Q1l[1:4]
        R_high = Q1h[1:4]
        I_low = Q2l[1:4]
        I_high = Q2h[1:4]

        equal_R_loss = jnp.sum(jnp.abs(R_low - R_high)) * inv_3hw

        # ----- smoothness term (2x2 gradient conv + 3x3 avg pool) -----
        def embed(g):
            # Place (H, W) gray image in the top-left corner of a zeroed
            # (HC, WC) canvas (HC >= H+2, WC >= W+2).  The zero border makes
            # circular rolls behave exactly like zero-padding below.
            canvas_ref[...] = jnp.zeros((HC, WC), f32)
            canvas_ref[0:H, 0:W] = g
            return canvas_ref[...]

        def grads(P):
            gx = jnp.abs(P - pltpu.roll(P, 1, 1))   # conv with [[0,0],[-1,1]], pad 1
            gy = jnp.abs(P - pltpu.roll(P, 1, 0))   # conv with [[0,-1],[0,1]], pad 1
            return gx, gy

        def pool3(A):
            # 3x3 avg pool, stride 1, pad 1, count_include_pad=True (always /9),
            # done separably with 4 XLU rolls (wrap lands outside the valid
            # window where the I-gradient is exactly zero).
            s1 = A + pltpu.roll(A, 1, 0) + pltpu.roll(A, HC - 1, 0)
            s2 = s1 + pltpu.roll(s1, 1, 1) + pltpu.roll(s1, WC - 1, 1)
            return s2 * (1.0 / 9.0)

        def gray(X3):
            return 0.299 * X3[0] + 0.587 * X3[1] + 0.114 * X3[2]

        def smooth(I3, R3):
            gxi, gyi = grads(embed(gray(I3)))
            gxr, gyr = grads(embed(gray(R3)))
            term = (gxi * jnp.exp(-10.0 * pool3(gxr))
                    + gyi * jnp.exp(-10.0 * pool3(gyr)))
            # gxi/gyi vanish outside the (H+1, W+1) conv-output window, so the
            # canvas-wide sum equals the true sum.
            return jnp.sum(term) * inv_smooth

        def total_variation(R3, weight=0.1):
            rows = jax.lax.broadcasted_iota(jnp.int32, (3, H, W), 1)
            cols = jax.lax.broadcasted_iota(jnp.int32, (3, H, W), 2)
            dh = jnp.abs(R3 - pltpu.roll(R3, 1, 1))
            dw = jnp.abs(R3 - pltpu.roll(R3, 1, 2))
            tv_h = jnp.sum(jnp.where(rows > 0, dh, 0.0)) * inv_tvh
            tv_w = jnp.sum(jnp.where(cols > 0, dw, 0.0)) * inv_tvw
            return weight * (tv_h + tv_w)

        Ismooth_loss_low = smooth(I_low, R_low) + total_variation(R_low)
        Ismooth_loss_high = smooth(I_high, R_high) + total_variation(R_high)

        # ----- frequency regularization: exact DFT corner, 2 MXU matmuls -----
        Xrow = jnp.concatenate(list(recon_low) + list(recon_high), axis=1)  # (H, 6W)
        U = jnp.dot(ArAi, Xrow, preferred_element_type=f32)                 # (2CHp, 6W)
        Y = jnp.dot(U, Bblk, preferred_element_type=f32)                    # (2CHp, 12CW)
        Yt = Y[0:CHp]          # Ar @ X @ [BrT | BiT]  per channel block
        Yb = Y[CHp:2 * CHp]    # Ai @ X @ [BrT | BiT]
        fsum = jnp.float32(0.0)
        for c in range(6):
            o = c * 2 * CW
            yr = Yt[:, o:o + CW] - Yb[:, o + CW:o + 2 * CW]
            yi = Yt[:, o + CW:o + 2 * CW] + Yb[:, o:o + CW]
            fsum = fsum + jnp.sum(jnp.sqrt(yr * yr + yi * yi))
        freq_loss = 0.01 * fsum * inv_freq

        # ----- lane-dense output row: 8 per-batch partial means -----
        lane = jax.lax.broadcasted_iota(jnp.int32, (1, 1, 128), 2)
        vals = (recon_loss_low, recon_loss_high,
                recon_loss_mutal_low, recon_loss_mutal_high,
                equal_R_loss, Ismooth_loss_low, Ismooth_loss_high, freq_loss)
        row = jnp.zeros((1, 1, 128), f32)
        for k, v in enumerate(vals):
            row = jnp.where(lane == k, v, row)
        o_ref[...] = row

    return kernel


def retinex_loss(Q1_low, Q2_low, input_low, Q1_high, Q2_high, input_high):
    B, C, H, W = Q1_low.shape
    assert C == 4 and input_low.shape[1] == 3
    assert H >= 2 and W >= 2

    # DFT "corner" matrices (constants; module's only other buffers are the
    # 2x2 gradient kernels, folded analytically into the kernel body).
    CH = min(10, H)
    CW = min(10, W)
    CHp = _round_up(CH, 8)
    Ar, Ai = _dft_corner_mats(H, CH)
    Br, Bi = _dft_corner_mats(W, CW)
    Arp = np.zeros((CHp, H), np.float32); Arp[:CH] = Ar
    Aip = np.zeros((CHp, H), np.float32); Aip[:CH] = Ai
    ArAi = jnp.asarray(np.concatenate([Arp, Aip], axis=0))               # (2*CHp, H)
    BrBi = np.concatenate([Br.T, Bi.T], axis=1).astype(np.float32)       # (W, 2*CW)
    Bblk = jnp.asarray(np.kron(np.eye(6, dtype=np.float32), BrBi))       # (6W, 12*CW)

    HC = _round_up(H + 2, 8)       # canvas for gradient/pool (>= H+2 zero rows)
    WC = _round_up(W + 2, 128)     # lane-aligned, >= W+2 zero cols

    kernel = _make_kernel(H, W, CH, CW, CHp, HC, WC)

    img_spec4 = pl.BlockSpec((1, 4, H, W), lambda b: (b, 0, 0, 0))
    img_spec3 = pl.BlockSpec((1, 3, H, W), lambda b: (b, 0, 0, 0))
    arai_spec = pl.BlockSpec((2 * CHp, H), lambda b: (0, 0))
    bblk_spec = pl.BlockSpec((6 * W, 12 * CW), lambda b: (0, 0))
    out_spec = pl.BlockSpec((1, 1, 128), lambda b: (b, 0, 0))

    in_bytes = sum(int(np.prod(x.shape)) * x.dtype.itemsize
                   for x in (Q1_low, Q2_low, input_low, Q1_high, Q2_high, input_high))
    const_bytes = int(ArAi.size + Bblk.size) * 4
    flops = int(B * (120 * H * W + 80 * HC * WC
                     + 2 * (2 * CHp) * H * (6 * W)
                     + 2 * (2 * CHp) * (6 * W) * (12 * CW)))
    transcendentals = int(B * (4 * HC * WC + 6 * CHp * CW))
    cost = pl.CostEstimate(flops=flops, transcendentals=transcendentals,
                           bytes_accessed=int(in_bytes + const_bytes + B * 128 * 4))

    partials = pl.pallas_call(
        kernel,
        out_shape=jax.ShapeDtypeStruct((B, 1, 128), jnp.float32),
        grid_spec=pltpu.PrefetchScalarGridSpec(
            num_scalar_prefetch=0,
            grid=(B,),
            in_specs=[img_spec4, img_spec4, img_spec3,
                      img_spec4, img_spec4, img_spec3,
                      arai_spec, bblk_spec],
            out_specs=out_spec,
            scratch_shapes=[pltpu.VMEM((HC, WC), jnp.float32)]),
        compiler_params=pltpu.CompilerParams(
            dimension_semantics=("parallel",),     # v7x: 2 TCs split the batch
            vmem_limit_bytes=32 * 1024 * 1024),
        cost_estimate=cost,
    )(Q1_low, Q2_low, input_low, Q1_high, Q2_high, input_high, ArAi, Bblk)

    # Per-batch partial means -> global means (equal element counts per item).
    m = jnp.mean(partials[:, 0, :8], axis=0)
    recon_loss_low, recon_loss_high = m[0], m[1]
    recon_loss_mutal_low, recon_loss_mutal_high = m[2], m[3]
    equal_R_loss = m[4]
    Ismooth_loss_low, Ismooth_loss_high = m[5], m[6]
    freq_loss = m[7]
    loss_decom = (recon_loss_low + recon_loss_high
                  + 0.01 * recon_loss_mutal_low + 0.01 * recon_loss_mutal_high
                  + 0.05 * Ismooth_loss_low + 0.05 * Ismooth_loss_high
                  + 0.01 * equal_R_loss + freq_loss)
    return {'loss_Decom': loss_decom,
            'recon_loss_low': recon_loss_low,
            'recon_loss_high': recon_loss_high,
            'recon_loss_mutal_low': recon_loss_mutal_low,
            'recon_loss_mutal_high': recon_loss_mutal_high,
            'equal_R_loss': equal_R_loss,
            'Ismooth_loss_low': Ismooth_loss_low,
            'Ismooth_loss_high': Ismooth_loss_high,
            'freq_loss': freq_loss}


if __name__ == "__main__":
    key = jax.random.PRNGKey(0)
    ks = jax.random.split(key, 6)
    B, H, W = 2, 16, 16
    Q1_low = jax.random.uniform(ks[0], (B, 4, H, W), jnp.float32)
    Q2_low = jax.random.uniform(ks[1], (B, 4, H, W), jnp.float32)
    input_low = jax.random.uniform(ks[2], (B, 3, H, W), jnp.float32)
    Q1_high = jax.random.uniform(ks[3], (B, 4, H, W), jnp.float32)
    Q2_high = jax.random.uniform(ks[4], (B, 4, H, W), jnp.float32)
    input_high = jax.random.uniform(ks[5], (B, 3, H, W), jnp.float32)

    losses = jax.jit(retinex_loss)(Q1_low, Q2_low, input_low,
                                   Q1_high, Q2_high, input_high)
    jax.block_until_ready(losses)
    print("KERNEL_OK")
</pallas_src>

<mosaic_0001>
module attributes {stable_mosaic.version = 11 : i64} {
  func.func @kernel(%arg0: i32, %arg1: memref<1x4x16x16xf32, #tpu.memory_space<vmem>>, %arg2: memref<1x4x16x16xf32, #tpu.memory_space<vmem>>, %arg3: memref<1x3x16x16xf32, #tpu.memory_space<vmem>>, %arg4: memref<1x4x16x16xf32, #tpu.memory_space<vmem>>, %arg5: memref<1x4x16x16xf32, #tpu.memory_space<vmem>>, %arg6: memref<1x3x16x16xf32, #tpu.memory_space<vmem>>, %arg7: memref<32x16xf32, #tpu.memory_space<vmem>>, %arg8: memref<96x120xf32, #tpu.memory_space<vmem>>, %arg9: memref<1x1x128xf32, #tpu.memory_space<vmem>>, %arg10: memref<24x128xf32, #tpu.memory_space<vmem>>) attributes {dimension_semantics = [#tpu.dimension_semantics<parallel>], iteration_bounds = array<i64: 2>, scalar_prefetch = 0 : i64, scratch_operands = 1 : i64, tpu.core_type = #tpu.core_type<tc>, window_params = [{transform_indices = @transform_0, window_bounds = array<i64: 1, 4, 16, 16>}, {transform_indices = @transform_1, window_bounds = array<i64: 1, 4, 16, 16>}, {transform_indices = @transform_2, window_bounds = array<i64: 1, 3, 16, 16>}, {transform_indices = @transform_3, window_bounds = array<i64: 1, 4, 16, 16>}, {transform_indices = @transform_4, window_bounds = array<i64: 1, 4, 16, 16>}, {transform_indices = @transform_5, window_bounds = array<i64: 1, 3, 16, 16>}, {pipeline_mode = #tpu.pipeline_mode<synchronous>, transform_indices = @transform_6, window_bounds = array<i64: 32, 16>}, {pipeline_mode = #tpu.pipeline_mode<synchronous>, transform_indices = @transform_7, window_bounds = array<i64: 96, 120>}, {transform_indices = @transform_8, window_bounds = array<i64: 1, 1, 128>}]} {
    %c0 = arith.constant 0 : index
    %c0_0 = arith.constant 0 : index
    %c0_1 = arith.constant 0 : index
    %c0_2 = arith.constant 0 : index
    %0 = vector.load %arg1[%c0, %c0_0, %c0_1, %c0_2] : memref<1x4x16x16xf32, #tpu.memory_space<vmem>>, vector<1x4x16x16xf32>
    %1 = vector.shape_cast %0 : vector<1x4x16x16xf32> to vector<4x16x16xf32>
    %c0_3 = arith.constant 0 : index
    %c0_4 = arith.constant 0 : index
    %c0_5 = arith.constant 0 : index
    %c0_6 = arith.constant 0 : index
    %2 = vector.load %arg2[%c0_3, %c0_4, %c0_5, %c0_6] : memref<1x4x16x16xf32, #tpu.memory_space<vmem>>, vector<1x4x16x16xf32>
    %3 = vector.shape_cast %2 : vector<1x4x16x16xf32> to vector<4x16x16xf32>
    %c0_7 = arith.constant 0 : index
    %c0_8 = arith.constant 0 : index
    %c0_9 = arith.constant 0 : index
    %c0_10 = arith.constant 0 : index
    %4 = vector.load %arg3[%c0_7, %c0_8, %c0_9, %c0_10] : memref<1x3x16x16xf32, #tpu.memory_space<vmem>>, vector<1x3x16x16xf32>
    %5 = vector.shape_cast %4 : vector<1x3x16x16xf32> to vector<3x16x16xf32>
    %c0_11 = arith.constant 0 : index
    %c0_12 = arith.constant 0 : index
    %c0_13 = arith.constant 0 : index
    %c0_14 = arith.constant 0 : index
    %6 = vector.load %arg4[%c0_11, %c0_12, %c0_13, %c0_14] : memref<1x4x16x16xf32, #tpu.memory_space<vmem>>, vector<1x4x16x16xf32>
    %7 = vector.shape_cast %6 : vector<1x4x16x16xf32> to vector<4x16x16xf32>
    %c0_15 = arith.constant 0 : index
    %c0_16 = arith.constant 0 : index
    %c0_17 = arith.constant 0 : index
    %c0_18 = arith.constant 0 : index
    %8 = vector.load %arg5[%c0_15, %c0_16, %c0_17, %c0_18] : memref<1x4x16x16xf32, #tpu.memory_space<vmem>>, vector<1x4x16x16xf32>
    %9 = vector.shape_cast %8 : vector<1x4x16x16xf32> to vector<4x16x16xf32>
    %c0_19 = arith.constant 0 : index
    %c0_20 = arith.constant 0 : index
    %c0_21 = arith.constant 0 : index
    %c0_22 = arith.constant 0 : index
    %10 = vector.load %arg6[%c0_19, %c0_20, %c0_21, %c0_22] : memref<1x3x16x16xf32, #tpu.memory_space<vmem>>, vector<1x3x16x16xf32>
    %11 = vector.shape_cast %10 : vector<1x3x16x16xf32> to vector<3x16x16xf32>
    %c0_23 = arith.constant 0 : index
    %c0_24 = arith.constant 0 : index
    %12 = vector.load %arg7[%c0_23, %c0_24] : memref<32x16xf32, #tpu.memory_space<vmem>>, vector<32x16xf32>
    %c0_25 = arith.constant 0 : index
    %c0_26 = arith.constant 0 : index
    %13 = vector.load %arg8[%c0_25, %c0_26] : memref<96x120xf32, #tpu.memory_space<vmem>>, vector<96x120xf32>
    %14 = vector.extract_strided_slice %1 {offsets = [0, 0, 0], sizes = [1, 16, 16], strides = [1, 1, 1]} : vector<4x16x16xf32> to vector<1x16x16xf32>
    %15 = vector.shape_cast %14 : vector<1x16x16xf32> to vector<16x16xf32>
    %16 = vector.extract_strided_slice %1 {offsets = [1, 0, 0], sizes = [1, 16, 16], strides = [1, 1, 1]} : vector<4x16x16xf32> to vector<1x16x16xf32>
    %17 = vector.shape_cast %16 : vector<1x16x16xf32> to vector<16x16xf32>
    %18 = vector.extract_strided_slice %1 {offsets = [2, 0, 0], sizes = [1, 16, 16], strides = [1, 1, 1]} : vector<4x16x16xf32> to vector<1x16x16xf32>
    %19 = vector.shape_cast %18 : vector<1x16x16xf32> to vector<16x16xf32>
    %20 = vector.extract_strided_slice %1 {offsets = [3, 0, 0], sizes = [1, 16, 16], strides = [1, 1, 1]} : vector<4x16x16xf32> to vector<1x16x16xf32>
    %21 = vector.shape_cast %20 : vector<1x16x16xf32> to vector<16x16xf32>
    %22 = vector.extract_strided_slice %3 {offsets = [0, 0, 0], sizes = [1, 16, 16], strides = [1, 1, 1]} : vector<4x16x16xf32> to vector<1x16x16xf32>
    %23 = vector.shape_cast %22 : vector<1x16x16xf32> to vector<16x16xf32>
    %24 = vector.extract_strided_slice %3 {offsets = [1, 0, 0], sizes = [1, 16, 16], strides = [1, 1, 1]} : vector<4x16x16xf32> to vector<1x16x16xf32>
    %25 = vector.shape_cast %24 : vector<1x16x16xf32> to vector<16x16xf32>
    %26 = vector.extract_strided_slice %3 {offsets = [2, 0, 0], sizes = [1, 16, 16], strides = [1, 1, 1]} : vector<4x16x16xf32> to vector<1x16x16xf32>
    %27 = vector.shape_cast %26 : vector<1x16x16xf32> to vector<16x16xf32>
    %28 = vector.extract_strided_slice %3 {offsets = [3, 0, 0], sizes = [1, 16, 16], strides = [1, 1, 1]} : vector<4x16x16xf32> to vector<1x16x16xf32>
    %29 = vector.shape_cast %28 : vector<1x16x16xf32> to vector<16x16xf32>
    %30 = arith.mulf %15, %25 : vector<16x16xf32>
    %31 = arith.mulf %17, %23 : vector<16x16xf32>
    %32 = arith.addf %30, %31 : vector<16x16xf32>
    %33 = arith.mulf %19, %29 : vector<16x16xf32>
    %34 = arith.addf %32, %33 : vector<16x16xf32>
    %35 = arith.mulf %21, %27 : vector<16x16xf32>
    %36 = arith.subf %34, %35 : vector<16x16xf32>
    %37 = arith.mulf %15, %27 : vector<16x16xf32>
    %38 = arith.mulf %17, %29 : vector<16x16xf32>
    %39 = arith.subf %37, %38 : vector<16x16xf32>
    %40 = arith.mulf %19, %23 : vector<16x16xf32>
    %41 = arith.addf %39, %40 : vector<16x16xf32>
    %42 = arith.mulf %21, %25 : vector<16x16xf32>
    %43 = arith.addf %41, %42 : vector<16x16xf32>
    %44 = arith.mulf %15, %29 : vector<16x16xf32>
    %45 = arith.mulf %17, %27 : vector<16x16xf32>
    %46 = arith.addf %44, %45 : vector<16x16xf32>
    %47 = arith.mulf %19, %25 : vector<16x16xf32>
    %48 = arith.subf %46, %47 : vector<16x16xf32>
    %49 = arith.mulf %21, %23 : vector<16x16xf32>
    %50 = arith.addf %48, %49 : vector<16x16xf32>
    %51 = vector.extract_strided_slice %7 {offsets = [0, 0, 0], sizes = [1, 16, 16], strides = [1, 1, 1]} : vector<4x16x16xf32> to vector<1x16x16xf32>
    %52 = vector.shape_cast %51 : vector<1x16x16xf32> to vector<16x16xf32>
    %53 = vector.extract_strided_slice %7 {offsets = [1, 0, 0], sizes = [1, 16, 16], strides = [1, 1, 1]} : vector<4x16x16xf32> to vector<1x16x16xf32>
    %54 = vector.shape_cast %53 : vector<1x16x16xf32> to vector<16x16xf32>
    %55 = vector.extract_strided_slice %7 {offsets = [2, 0, 0], sizes = [1, 16, 16], strides = [1, 1, 1]} : vector<4x16x16xf32> to vector<1x16x16xf32>
    %56 = vector.shape_cast %55 : vector<1x16x16xf32> to vector<16x16xf32>
    %57 = vector.extract_strided_slice %7 {offsets = [3, 0, 0], sizes = [1, 16, 16], strides = [1, 1, 1]} : vector<4x16x16xf32> to vector<1x16x16xf32>
    %58 = vector.shape_cast %57 : vector<1x16x16xf32> to vector<16x16xf32>
    %59 = vector.extract_strided_slice %9 {offsets = [0, 0, 0], sizes = [1, 16, 16], strides = [1, 1, 1]} : vector<4x16x16xf32> to vector<1x16x16xf32>
    %60 = vector.shape_cast %59 : vector<1x16x16xf32> to vector<16x16xf32>
    %61 = vector.extract_strided_slice %9 {offsets = [1, 0, 0], sizes = [1, 16, 16], strides = [1, 1, 1]} : vector<4x16x16xf32> to vector<1x16x16xf32>
    %62 = vector.shape_cast %61 : vector<1x16x16xf32> to vector<16x16xf32>
    %63 = vector.extract_strided_slice %9 {offsets = [2, 0, 0], sizes = [1, 16, 16], strides = [1, 1, 1]} : vector<4x16x16xf32> to vector<1x16x16xf32>
    %64 = vector.shape_cast %63 : vector<1x16x16xf32> to vector<16x16xf32>
    %65 = vector.extract_strided_slice %9 {offsets = [3, 0, 0], sizes = [1, 16, 16], strides = [1, 1, 1]} : vector<4x16x16xf32> to vector<1x16x16xf32>
    %66 = vector.shape_cast %65 : vector<1x16x16xf32> to vector<16x16xf32>
    %67 = arith.mulf %52, %62 : vector<16x16xf32>
    %68 = arith.mulf %54, %60 : vector<16x16xf32>
    %69 = arith.addf %67, %68 : vector<16x16xf32>
    %70 = arith.mulf %56, %66 : vector<16x16xf32>
    %71 = arith.addf %69, %70 : vector<16x16xf32>
    %72 = arith.mulf %58, %64 : vector<16x16xf32>
    %73 = arith.subf %71, %72 : vector<16x16xf32>
    %74 = arith.mulf %52, %64 : vector<16x16xf32>
    %75 = arith.mulf %54, %66 : vector<16x16xf32>
    %76 = arith.subf %74, %75 : vector<16x16xf32>
    %77 = arith.mulf %56, %60 : vector<16x16xf32>
    %78 = arith.addf %76, %77 : vector<16x16xf32>
    %79 = arith.mulf %58, %62 : vector<16x16xf32>
    %80 = arith.addf %78, %79 : vector<16x16xf32>
    %81 = arith.mulf %52, %66 : vector<16x16xf32>
    %82 = arith.mulf %54, %64 : vector<16x16xf32>
    %83 = arith.addf %81, %82 : vector<16x16xf32>
    %84 = arith.mulf %56, %62 : vector<16x16xf32>
    %85 = arith.subf %83, %84 : vector<16x16xf32>
    %86 = arith.mulf %58, %60 : vector<16x16xf32>
    %87 = arith.addf %85, %86 : vector<16x16xf32>
    %88 = vector.extract_strided_slice %5 {offsets = [0, 0, 0], sizes = [1, 16, 16], strides = [1, 1, 1]} : vector<3x16x16xf32> to vector<1x16x16xf32>
    %89 = vector.shape_cast %88 : vector<1x16x16xf32> to vector<16x16xf32>
    %90 = arith.subf %36, %89 : vector<16x16xf32>
    %91 = math.absf %90 : vector<16x16xf32>
    %92 = vector.shape_cast %91 : vector<16x16xf32> to vector<1x16x16xf32>
    %cst = arith.constant dense<0.000000e+00> : vector<1xf32>
    %93 = vector.multi_reduction <add>, %92, %cst [1, 2] : vector<1x16x16xf32> to vector<1xf32>
    %94 = vector.shape_cast %93 : vector<1xf32> to vector<1x1x1xf32>
    %95 = vector.extract %94[0, 0, 0] : f32 from vector<1x1x1xf32>
    %96 = vector.extract_strided_slice %5 {offsets = [1, 0, 0], sizes = [1, 16, 16], strides = [1, 1, 1]} : vector<3x16x16xf32> to vector<1x16x16xf32>
    %97 = vector.shape_cast %96 : vector<1x16x16xf32> to vector<16x16xf32>
    %98 = arith.subf %43, %97 : vector<16x16xf32>
    %99 = math.absf %98 : vector<16x16xf32>
    %100 = vector.shape_cast %99 : vector<16x16xf32> to vector<1x16x16xf32>
    %cst_27 = arith.constant dense<0.000000e+00> : vector<1xf32>
    %101 = vector.multi_reduction <add>, %100, %cst_27 [1, 2] : vector<1x16x16xf32> to vector<1xf32>
    %102 = vector.shape_cast %101 : vector<1xf32> to vector<1x1x1xf32>
    %103 = vector.extract %102[0, 0, 0] : f32 from vector<1x1x1xf32>
    %104 = arith.addf %95, %103 : f32
    %105 = vector.extract_strided_slice %5 {offsets = [2, 0, 0], sizes = [1, 16, 16], strides = [1, 1, 1]} : vector<3x16x16xf32> to vector<1x16x16xf32>
    %106 = vector.shape_cast %105 : vector<1x16x16xf32> to vector<16x16xf32>
    %107 = arith.subf %50, %106 : vector<16x16xf32>
    %108 = math.absf %107 : vector<16x16xf32>
    %109 = vector.shape_cast %108 : vector<16x16xf32> to vector<1x16x16xf32>
    %cst_28 = arith.constant dense<0.000000e+00> : vector<1xf32>
    %110 = vector.multi_reduction <add>, %109, %cst_28 [1, 2] : vector<1x16x16xf32> to vector<1xf32>
    %111 = vector.shape_cast %110 : vector<1xf32> to vector<1x1x1xf32>
    %112 = vector.extract %111[0, 0, 0] : f32 from vector<1x1x1xf32>
    %113 = arith.addf %104, %112 : f32
    %cst_29 = arith.constant 0.00130208337 : f32
    %114 = arith.mulf %113, %cst_29 : f32
    %115 = vector.extract_strided_slice %11 {offsets = [0, 0, 0], sizes = [1, 16, 16], strides = [1, 1, 1]} : vector<3x16x16xf32> to vector<1x16x16xf32>
    %116 = vector.shape_cast %115 : vector<1x16x16xf32> to vector<16x16xf32>
    %117 = arith.subf %73, %116 : vector<16x16xf32>
    %118 = math.absf %117 : vector<16x16xf32>
    %119 = vector.shape_cast %118 : vector<16x16xf32> to vector<1x16x16xf32>
    %cst_30 = arith.constant dense<0.000000e+00> : vector<1xf32>
    %120 = vector.multi_reduction <add>, %119, %cst_30 [1, 2] : vector<1x16x16xf32> to vector<1xf32>
    %121 = vector.shape_cast %120 : vector<1xf32> to vector<1x1x1xf32>
    %122 = vector.extract %121[0, 0, 0] : f32 from vector<1x1x1xf32>
    %123 = vector.extract_strided_slice %11 {offsets = [1, 0, 0], sizes = [1, 16, 16], strides = [1, 1, 1]} : vector<3x16x16xf32> to vector<1x16x16xf32>
    %124 = vector.shape_cast %123 : vector<1x16x16xf32> to vector<16x16xf32>
    %125 = arith.subf %80, %124 : vector<16x16xf32>
    %126 = math.absf %125 : vector<16x16xf32>
    %127 = vector.shape_cast %126 : vector<16x16xf32> to vector<1x16x16xf32>
    %cst_31 = arith.constant dense<0.000000e+00> : vector<1xf32>
    %128 = vector.multi_reduction <add>, %127, %cst_31 [1, 2] : vector<1x16x16xf32> to vector<1xf32>
    %129 = vector.shape_cast %128 : vector<1xf32> to vector<1x1x1xf32>
    %130 = vector.extract %129[0, 0, 0] : f32 from vector<1x1x1xf32>
    %131 = arith.addf %122, %130 : f32
    %132 = vector.extract_strided_slice %11 {offsets = [2, 0, 0], sizes = [1, 16, 16], strides = [1, 1, 1]} : vector<3x16x16xf32> to vector<1x16x16xf32>
    %133 = vector.shape_cast %132 : vector<1x16x16xf32> to vector<16x16xf32>
    %134 = arith.subf %87, %133 : vector<16x16xf32>
    %135 = math.absf %134 : vector<16x16xf32>
    %136 = vector.shape_cast %135 : vector<16x16xf32> to vector<1x16x16xf32>
    %cst_32 = arith.constant dense<0.000000e+00> : vector<1xf32>
    %137 = vector.multi_reduction <add>, %136, %cst_32 [1, 2] : vector<1x16x16xf32> to vector<1xf32>
    %138 = vector.shape_cast %137 : vector<1xf32> to vector<1x1x1xf32>
    %139 = vector.extract %138[0, 0, 0] : f32 from vector<1x1x1xf32>
    %140 = arith.addf %131, %139 : f32
    %cst_33 = arith.constant 0.00130208337 : f32
    %141 = arith.mulf %140, %cst_33 : f32
    %142 = vector.extract_strided_slice %7 {offsets = [0, 0, 0], sizes = [1, 16, 16], strides = [1, 1, 1]} : vector<4x16x16xf32> to vector<1x16x16xf32>
    %143 = vector.shape_cast %142 : vector<1x16x16xf32> to vector<16x16xf32>
    %144 = vector.extract_strided_slice %7 {offsets = [1, 0, 0], sizes = [1, 16, 16], strides = [1, 1, 1]} : vector<4x16x16xf32> to vector<1x16x16xf32>
    %145 = vector.shape_cast %144 : vector<1x16x16xf32> to vector<16x16xf32>
    %146 = vector.extract_strided_slice %7 {offsets = [2, 0, 0], sizes = [1, 16, 16], strides = [1, 1, 1]} : vector<4x16x16xf32> to vector<1x16x16xf32>
    %147 = vector.shape_cast %146 : vector<1x16x16xf32> to vector<16x16xf32>
    %148 = vector.extract_strided_slice %7 {offsets = [3, 0, 0], sizes = [1, 16, 16], strides = [1, 1, 1]} : vector<4x16x16xf32> to vector<1x16x16xf32>
    %149 = vector.shape_cast %148 : vector<1x16x16xf32> to vector<16x16xf32>
    %150 = vector.extract_strided_slice %3 {offsets = [0, 0, 0], sizes = [1, 16, 16], strides = [1, 1, 1]} : vector<4x16x16xf32> to vector<1x16x16xf32>
    %151 = vector.shape_cast %150 : vector<1x16x16xf32> to vector<16x16xf32>
    %152 = vector.extract_strided_slice %3 {offsets = [1, 0, 0], sizes = [1, 16, 16], strides = [1, 1, 1]} : vector<4x16x16xf32> to vector<1x16x16xf32>
    %153 = vector.shape_cast %152 : vector<1x16x16xf32> to vector<16x16xf32>
    %154 = vector.extract_strided_slice %3 {offsets = [2, 0, 0], sizes = [1, 16, 16], strides = [1, 1, 1]} : vector<4x16x16xf32> to vector<1x16x16xf32>
    %155 = vector.shape_cast %154 : vector<1x16x16xf32> to vector<16x16xf32>
    %156 = vector.extract_strided_slice %3 {offsets = [3, 0, 0], sizes = [1, 16, 16], strides = [1, 1, 1]} : vector<4x16x16xf32> to vector<1x16x16xf32>
    %157 = vector.shape_cast %156 : vector<1x16x16xf32> to vector<16x16xf32>
    %158 = arith.mulf %143, %153 : vector<16x16xf32>
    %159 = arith.mulf %145, %151 : vector<16x16xf32>
    %160 = arith.addf %158, %159 : vector<16x16xf32>
    %161 = arith.mulf %147, %157 : vector<16x16xf32>
    %162 = arith.addf %160, %161 : vector<16x16xf32>
    %163 = arith.mulf %149, %155 : vector<16x16xf32>
    %164 = arith.subf %162, %163 : vector<16x16xf32>
    %165 = vector.extract_strided_slice %5 {offsets = [0, 0, 0], sizes = [1, 16, 16], strides = [1, 1, 1]} : vector<3x16x16xf32> to vector<1x16x16xf32>
    %166 = vector.shape_cast %165 : vector<1x16x16xf32> to vector<16x16xf32>
    %167 = arith.subf %164, %166 : vector<16x16xf32>
    %168 = math.absf %167 : vector<16x16xf32>
    %169 = vector.shape_cast %168 : vector<16x16xf32> to vector<1x16x16xf32>
    %cst_34 = arith.constant dense<0.000000e+00> : vector<1xf32>
    %170 = vector.multi_reduction <add>, %169, %cst_34 [1, 2] : vector<1x16x16xf32> to vector<1xf32>
    %171 = vector.shape_cast %170 : vector<1xf32> to vector<1x1x1xf32>
    %172 = vector.extract %171[0, 0, 0] : f32 from vector<1x1x1xf32>
    %173 = arith.mulf %143, %155 : vector<16x16xf32>
    %174 = arith.mulf %145, %157 : vector<16x16xf32>
    %175 = arith.subf %173, %174 : vector<16x16xf32>
    %176 = arith.mulf %147, %151 : vector<16x16xf32>
    %177 = arith.addf %175, %176 : vector<16x16xf32>
    %178 = arith.mulf %149, %153 : vector<16x16xf32>
    %179 = arith.addf %177, %178 : vector<16x16xf32>
    %180 = vector.extract_strided_slice %5 {offsets = [1, 0, 0], sizes = [1, 16, 16], strides = [1, 1, 1]} : vector<3x16x16xf32> to vector<1x16x16xf32>
    %181 = vector.shape_cast %180 : vector<1x16x16xf32> to vector<16x16xf32>
    %182 = arith.subf %179, %181 : vector<16x16xf32>
    %183 = math.absf %182 : vector<16x16xf32>
    %184 = vector.shape_cast %183 : vector<16x16xf32> to vector<1x16x16xf32>
    %cst_35 = arith.constant dense<0.000000e+00> : vector<1xf32>
    %185 = vector.multi_reduction <add>, %184, %cst_35 [1, 2] : vector<1x16x16xf32> to vector<1xf32>
    %186 = vector.shape_cast %185 : vector<1xf32> to vector<1x1x1xf32>
    %187 = vector.extract %186[0, 0, 0] : f32 from vector<1x1x1xf32>
    %188 = arith.addf %172, %187 : f32
    %189 = arith.mulf %143, %157 : vector<16x16xf32>
    %190 = arith.mulf %145, %155 : vector<16x16xf32>
    %191 = arith.addf %189, %190 : vector<16x16xf32>
    %192 = arith.mulf %147, %153 : vector<16x16xf32>
    %193 = arith.subf %191, %192 : vector<16x16xf32>
    %194 = arith.mulf %149, %151 : vector<16x16xf32>
    %195 = arith.addf %193, %194 : vector<16x16xf32>
    %196 = vector.extract_strided_slice %5 {offsets = [2, 0, 0], sizes = [1, 16, 16], strides = [1, 1, 1]} : vector<3x16x16xf32> to vector<1x16x16xf32>
    %197 = vector.shape_cast %196 : vector<1x16x16xf32> to vector<16x16xf32>
    %198 = arith.subf %195, %197 : vector<16x16xf32>
    %199 = math.absf %198 : vector<16x16xf32>
    %200 = vector.shape_cast %199 : vector<16x16xf32> to vector<1x16x16xf32>
    %cst_36 = arith.constant dense<0.000000e+00> : vector<1xf32>
    %201 = vector.multi_reduction <add>, %200, %cst_36 [1, 2] : vector<1x16x16xf32> to vector<1xf32>
    %202 = vector.shape_cast %201 : vector<1xf32> to vector<1x1x1xf32>
    %203 = vector.extract %202[0, 0, 0] : f32 from vector<1x1x1xf32>
    %204 = arith.addf %188, %203 : f32
    %cst_37 = arith.constant 0.00130208337 : f32
    %205 = arith.mulf %204, %cst_37 : f32
    %206 = vector.extract_strided_slice %1 {offsets = [0, 0, 0], sizes = [1, 16, 16], strides = [1, 1, 1]} : vector<4x16x16xf32> to vector<1x16x16xf32>
    %207 = vector.shape_cast %206 : vector<1x16x16xf32> to vector<16x16xf32>
    %208 = vector.extract_strided_slice %1 {offsets = [1, 0, 0], sizes = [1, 16, 16], strides = [1, 1, 1]} : vector<4x16x16xf32> to vector<1x16x16xf32>
    %209 = vector.shape_cast %208 : vector<1x16x16xf32> to vector<16x16xf32>
    %210 = vector.extract_strided_slice %1 {offsets = [2, 0, 0], sizes = [1, 16, 16], strides = [1, 1, 1]} : vector<4x16x16xf32> to vector<1x16x16xf32>
    %211 = vector.shape_cast %210 : vector<1x16x16xf32> to vector<16x16xf32>
    %212 = vector.extract_strided_slice %1 {offsets = [3, 0, 0], sizes = [1, 16, 16], strides = [1, 1, 1]} : vector<4x16x16xf32> to vector<1x16x16xf32>
    %213 = vector.shape_cast %212 : vector<1x16x16xf32> to vector<16x16xf32>
    %214 = vector.extract_strided_slice %9 {offsets = [0, 0, 0], sizes = [1, 16, 16], strides = [1, 1, 1]} : vector<4x16x16xf32> to vector<1x16x16xf32>
    %215 = vector.shape_cast %214 : vector<1x16x16xf32> to vector<16x16xf32>
    %216 = vector.extract_strided_slice %9 {offsets = [1, 0, 0], sizes = [1, 16, 16], strides = [1, 1, 1]} : vector<4x16x16xf32> to vector<1x16x16xf32>
    %217 = vector.shape_cast %216 : vector<1x16x16xf32> to vector<16x16xf32>
    %218 = vector.extract_strided_slice %9 {offsets = [2, 0, 0], sizes = [1, 16, 16], strides = [1, 1, 1]} : vector<4x16x16xf32> to vector<1x16x16xf32>
    %219 = vector.shape_cast %218 : vector<1x16x16xf32> to vector<16x16xf32>
    %220 = vector.extract_strided_slice %9 {offsets = [3, 0, 0], sizes = [1, 16, 16], strides = [1, 1, 1]} : vector<4x16x16xf32> to vector<1x16x16xf32>
    %221 = vector.shape_cast %220 : vector<1x16x16xf32> to vector<16x16xf32>
    %222 = arith.mulf %207, %217 : vector<16x16xf32>
    %223 = arith.mulf %209, %215 : vector<16x16xf32>
    %224 = arith.addf %222, %223 : vector<16x16xf32>
    %225 = arith.mulf %211, %221 : vector<16x16xf32>
    %226 = arith.addf %224, %225 : vector<16x16xf32>
    %227 = arith.mulf %213, %219 : vector<16x16xf32>
    %228 = arith.subf %226, %227 : vector<16x16xf32>
    %229 = vector.extract_strided_slice %11 {offsets = [0, 0, 0], sizes = [1, 16, 16], strides = [1, 1, 1]} : vector<3x16x16xf32> to vector<1x16x16xf32>
    %230 = vector.shape_cast %229 : vector<1x16x16xf32> to vector<16x16xf32>
    %231 = arith.subf %228, %230 : vector<16x16xf32>
    %232 = math.absf %231 : vector<16x16xf32>
    %233 = vector.shape_cast %232 : vector<16x16xf32> to vector<1x16x16xf32>
    %cst_38 = arith.constant dense<0.000000e+00> : vector<1xf32>
    %234 = vector.multi_reduction <add>, %233, %cst_38 [1, 2] : vector<1x16x16xf32> to vector<1xf32>
    %235 = vector.shape_cast %234 : vector<1xf32> to vector<1x1x1xf32>
    %236 = vector.extract %235[0, 0, 0] : f32 from vector<1x1x1xf32>
    %237 = arith.mulf %207, %219 : vector<16x16xf32>
    %238 = arith.mulf %209, %221 : vector<16x16xf32>
    %239 = arith.subf %237, %238 : vector<16x16xf32>
    %240 = arith.mulf %211, %215 : vector<16x16xf32>
    %241 = arith.addf %239, %240 : vector<16x16xf32>
    %242 = arith.mulf %213, %217 : vector<16x16xf32>
    %243 = arith.addf %241, %242 : vector<16x16xf32>
    %244 = vector.extract_strided_slice %11 {offsets = [1, 0, 0], sizes = [1, 16, 16], strides = [1, 1, 1]} : vector<3x16x16xf32> to vector<1x16x16xf32>
    %245 = vector.shape_cast %244 : vector<1x16x16xf32> to vector<16x16xf32>
    %246 = arith.subf %243, %245 : vector<16x16xf32>
    %247 = math.absf %246 : vector<16x16xf32>
    %248 = vector.shape_cast %247 : vector<16x16xf32> to vector<1x16x16xf32>
    %cst_39 = arith.constant dense<0.000000e+00> : vector<1xf32>
    %249 = vector.multi_reduction <add>, %248, %cst_39 [1, 2] : vector<1x16x16xf32> to vector<1xf32>
    %250 = vector.shape_cast %249 : vector<1xf32> to vector<1x1x1xf32>
    %251 = vector.extract %250[0, 0, 0] : f32 from vector<1x1x1xf32>
    %252 = arith.addf %236, %251 : f32
    %253 = arith.mulf %207, %221 : vector<16x16xf32>
    %254 = arith.mulf %209, %219 : vector<16x16xf32>
    %255 = arith.addf %253, %254 : vector<16x16xf32>
    %256 = arith.mulf %211, %217 : vector<16x16xf32>
    %257 = arith.subf %255, %256 : vector<16x16xf32>
    %258 = arith.mulf %213, %215 : vector<16x16xf32>
    %259 = arith.addf %257, %258 : vector<16x16xf32>
    %260 = vector.extract_strided_slice %11 {offsets = [2, 0, 0], sizes = [1, 16, 16], strides = [1, 1, 1]} : vector<3x16x16xf32> to vector<1x16x16xf32>
    %261 = vector.shape_cast %260 : vector<1x16x16xf32> to vector<16x16xf32>
    %262 = arith.subf %259, %261 : vector<16x16xf32>
    %263 = math.absf %262 : vector<16x16xf32>
    %264 = vector.shape_cast %263 : vector<16x16xf32> to vector<1x16x16xf32>
    %cst_40 = arith.constant dense<0.000000e+00> : vector<1xf32>
    %265 = vector.multi_reduction <add>, %264, %cst_40 [1, 2] : vector<1x16x16xf32> to vector<1xf32>
    %266 = vector.shape_cast %265 : vector<1xf32> to vector<1x1x1xf32>
    %267 = vector.extract %266[0, 0, 0] : f32 from vector<1x1x1xf32>
    %268 = arith.addf %252, %267 : f32
    %cst_41 = arith.constant 0.00130208337 : f32
    %269 = arith.mulf %268, %cst_41 : f32
    %270 = vector.extract_strided_slice %1 {offsets = [1, 0, 0], sizes = [3, 16, 16], strides = [1, 1, 1]} : vector<4x16x16xf32> to vector<3x16x16xf32>
    %271 = vector.extract_strided_slice %7 {offsets = [1, 0, 0], sizes = [3, 16, 16], strides = [1, 1, 1]} : vector<4x16x16xf32> to vector<3x16x16xf32>
    %272 = vector.extract_strided_slice %3 {offsets = [1, 0, 0], sizes = [3, 16, 16], strides = [1, 1, 1]} : vector<4x16x16xf32> to vector<3x16x16xf32>
    %273 = vector.extract_strided_slice %9 {offsets = [1, 0, 0], sizes = [3, 16, 16], strides = [1, 1, 1]} : vector<4x16x16xf32> to vector<3x16x16xf32>
    %274 = arith.subf %270, %271 : vector<3x16x16xf32>
    %275 = math.absf %274 : vector<3x16x16xf32>
    %276 = vector.shape_cast %275 : vector<3x16x16xf32> to vector<1x3x16x16xf32>
    %cst_42 = arith.constant dense<0.000000e+00> : vector<1xf32>
    %277 = vector.multi_reduction <add>, %276, %cst_42 [1, 2, 3] : vector<1x3x16x16xf32> to vector<1xf32>
    %278 = vector.shape_cast %277 : vector<1xf32> to vector<1x1x1x1xf32>
    %279 = vector.extract %278[0, 0, 0, 0] : f32 from vector<1x1x1x1xf32>
    %cst_43 = arith.constant 0.00130208337 : f32
    %280 = arith.mulf %279, %cst_43 : f32
    %281 = vector.extract_strided_slice %272 {offsets = [0, 0, 0], sizes = [1, 16, 16], strides = [1, 1, 1]} : vector<3x16x16xf32> to vector<1x16x16xf32>
    %282 = vector.shape_cast %281 : vector<1x16x16xf32> to vector<16x16xf32>
    %cst_44 = arith.constant 2.990000e-01 : f32
    %283 = vector.broadcast %cst_44 : f32 to vector<16x16xf32>
    %284 = arith.mulf %283, %282 : vector<16x16xf32>
    %285 = vector.extract_strided_slice %272 {offsets = [1, 0, 0], sizes = [1, 16, 16], strides = [1, 1, 1]} : vector<3x16x16xf32> to vector<1x16x16xf32>
    %286 = vector.shape_cast %285 : vector<1x16x16xf32> to vector<16x16xf32>
    %cst_45 = arith.constant 5.870000e-01 : f32
    %287 = vector.broadcast %cst_45 : f32 to vector<16x16xf32>
    %288 = arith.mulf %287, %286 : vector<16x16xf32>
    %289 = arith.addf %284, %288 : vector<16x16xf32>
    %290 = vector.extract_strided_slice %272 {offsets = [2, 0, 0], sizes = [1, 16, 16], strides = [1, 1, 1]} : vector<3x16x16xf32> to vector<1x16x16xf32>
    %291 = vector.shape_cast %290 : vector<1x16x16xf32> to vector<16x16xf32>
    %cst_46 = arith.constant 1.140000e-01 : f32
    %292 = vector.broadcast %cst_46 : f32 to vector<16x16xf32>
    %293 = arith.mulf %292, %291 : vector<16x16xf32>
    %294 = arith.addf %289, %293 : vector<16x16xf32>
    %cst_47 = arith.constant 0.000000e+00 : f32
    %295 = vector.broadcast %cst_47 : f32 to vector<24x128xf32>
    %c0_48 = arith.constant 0 : index
    %c0_49 = arith.constant 0 : index
    %296 = vector.load %arg10[%c0_48, %c0_49] : memref<24x128xf32, #tpu.memory_space<vmem>>, vector<24x128xf32>
    tpu.vector_store %arg10[%c0_48, %c0_49], %295 {strides = array<i32>} : memref<24x128xf32, #tpu.memory_space<vmem>>, vector<24x128xf32>,
    %c0_50 = arith.constant 0 : index
    %c0_51 = arith.constant 0 : index
    %297 = vector.load %arg10[%c0_50, %c0_51] : memref<24x128xf32, #tpu.memory_space<vmem>>, vector<16x16xf32>
    tpu.vector_store %arg10[%c0_50, %c0_51], %294 {strides = array<i32>} : memref<24x128xf32, #tpu.memory_space<vmem>>, vector<16x16xf32>,
    %c0_52 = arith.constant 0 : index
    %c0_53 = arith.constant 0 : index
    %298 = vector.load %arg10[%c0_52, %c0_53] : memref<24x128xf32, #tpu.memory_space<vmem>>, vector<24x128xf32>
    %c1_i32 = arith.constant 1 : i32
    %299 = tpu.dynamic_rotate %298 by %c1_i32 dim 1 : vector<24x128xf32>, i32 -> vector<24x128xf32>
    %300 = arith.subf %298, %299 : vector<24x128xf32>
    %301 = math.absf %300 : vector<24x128xf32>
    %c1_i32_54 = arith.constant 1 : i32
    %302 = tpu.dynamic_rotate %298 by %c1_i32_54 dim 0 : vector<24x128xf32>, i32 -> vector<24x128xf32>
    %303 = arith.subf %298, %302 : vector<24x128xf32>
    %304 = math.absf %303 : vector<24x128xf32>
    %305 = vector.extract_strided_slice %270 {offsets = [0, 0, 0], sizes = [1, 16, 16], strides = [1, 1, 1]} : vector<3x16x16xf32> to vector<1x16x16xf32>
    %306 = vector.shape_cast %305 : vector<1x16x16xf32> to vector<16x16xf32>
    %cst_55 = arith.constant 2.990000e-01 : f32
    %307 = vector.broadcast %cst_55 : f32 to vector<16x16xf32>
    %308 = arith.mulf %307, %306 : vector<16x16xf32>
    %309 = vector.extract_strided_slice %270 {offsets = [1, 0, 0], sizes = [1, 16, 16], strides = [1, 1, 1]} : vector<3x16x16xf32> to vector<1x16x16xf32>
    %310 = vector.shape_cast %309 : vector<1x16x16xf32> to vector<16x16xf32>
    %cst_56 = arith.constant 5.870000e-01 : f32
    %311 = vector.broadcast %cst_56 : f32 to vector<16x16xf32>
    %312 = arith.mulf %311, %310 : vector<16x16xf32>
    %313 = arith.addf %308, %312 : vector<16x16xf32>
    %314 = vector.extract_strided_slice %270 {offsets = [2, 0, 0], sizes = [1, 16, 16], strides = [1, 1, 1]} : vector<3x16x16xf32> to vector<1x16x16xf32>
    %315 = vector.shape_cast %314 : vector<1x16x16xf32> to vector<16x16xf32>
    %cst_57 = arith.constant 1.140000e-01 : f32
    %316 = vector.broadcast %cst_57 : f32 to vector<16x16xf32>
    %317 = arith.mulf %316, %315 : vector<16x16xf32>
    %318 = arith.addf %313, %317 : vector<16x16xf32>
    %cst_58 = arith.constant 0.000000e+00 : f32
    %319 = vector.broadcast %cst_58 : f32 to vector<24x128xf32>
    %c0_59 = arith.constant 0 : index
    %c0_60 = arith.constant 0 : index
    %320 = vector.load %arg10[%c0_59, %c0_60] : memref<24x128xf32, #tpu.memory_space<vmem>>, vector<24x128xf32>
    tpu.vector_store %arg10[%c0_59, %c0_60], %319 {strides = array<i32>} : memref<24x128xf32, #tpu.memory_space<vmem>>, vector<24x128xf32>,
    %c0_61 = arith.constant 0 : index
    %c0_62 = arith.constant 0 : index
    %321 = vector.load %arg10[%c0_61, %c0_62] : memref<24x128xf32, #tpu.memory_space<vmem>>, vector<16x16xf32>
    tpu.vector_store %arg10[%c0_61, %c0_62], %318 {strides = array<i32>} : memref<24x128xf32, #tpu.memory_space<vmem>>, vector<16x16xf32>,
    %c0_63 = arith.constant 0 : index
    %c0_64 = arith.constant 0 : index
    %322 = vector.load %arg10[%c0_63, %c0_64] : memref<24x128xf32, #tpu.memory_space<vmem>>, vector<24x128xf32>
    %c1_i32_65 = arith.constant 1 : i32
    %323 = tpu.dynamic_rotate %322 by %c1_i32_65 dim 1 : vector<24x128xf32>, i32 -> vector<24x128xf32>
    %324 = arith.subf %322, %323 : vector<24x128xf32>
    %325 = math.absf %324 : vector<24x128xf32>
    %c1_i32_66 = arith.constant 1 : i32
    %326 = tpu.dynamic_rotate %322 by %c1_i32_66 dim 0 : vector<24x128xf32>, i32 -> vector<24x128xf32>
    %327 = arith.subf %322, %326 : vector<24x128xf32>
    %328 = math.absf %327 : vector<24x128xf32>
    %c1_i32_67 = arith.constant 1 : i32
    %329 = tpu.dynamic_rotate %325 by %c1_i32_67 dim 0 : vector<24x128xf32>, i32 -> vector<24x128xf32>
    %330 = arith.addf %325, %329 : vector<24x128xf32>
    %c23_i32 = arith.constant 23 : i32
    %331 = tpu.dynamic_rotate %325 by %c23_i32 dim 0 : vector<24x128xf32>, i32 -> vector<24x128xf32>
    %332 = arith.addf %330, %331 : vector<24x128xf32>
    %c1_i32_68 = arith.constant 1 : i32
    %333 = tpu.dynamic_rotate %332 by %c1_i32_68 dim 1 : vector<24x128xf32>, i32 -> vector<24x128xf32>
    %334 = arith.addf %332, %333 : vector<24x128xf32>
    %c127_i32 = arith.constant 127 : i32
    %335 = tpu.dynamic_rotate %332 by %c127_i32 dim 1 : vector<24x128xf32>, i32 -> vector<24x128xf32>
    %336 = arith.addf %334, %335 : vector<24x128xf32>
    %cst_69 = arith.constant 0.111111112 : f32
    %337 = vector.broadcast %cst_69 : f32 to vector<24x128xf32>
    %338 = arith.mulf %336, %337 : vector<24x128xf32>
    %cst_70 = arith.constant -1.000000e+01 : f32
    %339 = vector.broadcast %cst_70 : f32 to vector<24x128xf32>
    %340 = arith.mulf %339, %338 : vector<24x128xf32>
    %341 = math.exp %340 : vector<24x128xf32>
    %342 = arith.mulf %301, %341 : vector<24x128xf32>
    %c1_i32_71 = arith.constant 1 : i32
    %343 = tpu.dynamic_rotate %328 by %c1_i32_71 dim 0 : vector<24x128xf32>, i32 -> vector<24x128xf32>
    %344 = arith.addf %328, %343 : vector<24x128xf32>
    %c23_i32_72 = arith.constant 23 : i32
    %345 = tpu.dynamic_rotate %328 by %c23_i32_72 dim 0 : vector<24x128xf32>, i32 -> vector<24x128xf32>
    %346 = arith.addf %344, %345 : vector<24x128xf32>
    %c1_i32_73 = arith.constant 1 : i32
    %347 = tpu.dynamic_rotate %346 by %c1_i32_73 dim 1 : vector<24x128xf32>, i32 -> vector<24x128xf32>
    %348 = arith.addf %346, %347 : vector<24x128xf32>
    %c127_i32_74 = arith.constant 127 : i32
    %349 = tpu.dynamic_rotate %346 by %c127_i32_74 dim 1 : vector<24x128xf32>, i32 -> vector<24x128xf32>
    %350 = arith.addf %348, %349 : vector<24x128xf32>
    %cst_75 = arith.constant 0.111111112 : f32
    %351 = vector.broadcast %cst_75 : f32 to vector<24x128xf32>
    %352 = arith.mulf %350, %351 : vector<24x128xf32>
    %cst_76 = arith.constant -1.000000e+01 : f32
    %353 = vector.broadcast %cst_76 : f32 to vector<24x128xf32>
    %354 = arith.mulf %353, %352 : vector<24x128xf32>
    %355 = math.exp %354 : vector<24x128xf32>
    %356 = arith.mulf %304, %355 : vector<24x128xf32>
    %357 = arith.addf %342, %356 : vector<24x128xf32>
    %358 = vector.shape_cast %357 : vector<24x128xf32> to vector<1x24x128xf32>
    %cst_77 = arith.constant dense<0.000000e+00> : vector<1xf32>
    %359 = vector.multi_reduction <add>, %358, %cst_77 [1, 2] : vector<1x24x128xf32> to vector<1xf32>
    %360 = vector.shape_cast %359 : vector<1xf32> to vector<1x1x1xf32>
    %361 = vector.extract %360[0, 0, 0] : f32 from vector<1x1x1xf32>
    %cst_78 = arith.constant 0.00346020772 : f32
    %362 = arith.mulf %361, %cst_78 : f32
    %363 = tpu.iota {dimensions = array<i32: 1>} : vector<3x16x16xi32>
    %364 = tpu.iota {dimensions = array<i32: 2>} : vector<3x16x16xi32>
    %c1_i32_79 = arith.constant 1 : i32
    %365 = tpu.dynamic_rotate %270 by %c1_i32_79 dim 1 : vector<3x16x16xf32>, i32 -> vector<3x16x16xf32>
    %366 = arith.subf %270, %365 : vector<3x16x16xf32>
    %367 = math.absf %366 : vector<3x16x16xf32>
    %c1_i32_80 = arith.constant 1 : i32
    %368 = tpu.dynamic_rotate %270 by %c1_i32_80 dim 2 : vector<3x16x16xf32>, i32 -> vector<3x16x16xf32>
    %369 = arith.subf %270, %368 : vector<3x16x16xf32>
    %370 = math.absf %369 : vector<3x16x16xf32>
    %c0_i32 = arith.constant 0 : i32
    %371 = vector.broadcast %c0_i32 : i32 to vector<3x16x16xi32>
    %372 = arith.cmpi sgt, %363, %371 : vector<3x16x16xi32>
    %cst_81 = arith.constant 0.000000e+00 : f32
    %373 = vector.broadcast %cst_81 : f32 to vector<3x16x16xf32>
    %374 = arith.select %372, %367, %373 : vector<3x16x16xi1>, vector<3x16x16xf32>
    %375 = vector.shape_cast %374 : vector<3x16x16xf32> to vector<1x3x16x16xf32>
    %cst_82 = arith.constant dense<0.000000e+00> : vector<1xf32>
    %376 = vector.multi_reduction <add>, %375, %cst_82 [1, 2, 3] : vector<1x3x16x16xf32> to vector<1xf32>
    %377 = vector.shape_cast %376 : vector<1xf32> to vector<1x1x1x1xf32>
    %378 = vector.extract %377[0, 0, 0, 0] : f32 from vector<1x1x1x1xf32>
    %cst_83 = arith.constant 0.00138888892 : f32
    %379 = arith.mulf %378, %cst_83 : f32
    %c0_i32_84 = arith.constant 0 : i32
    %380 = vector.broadcast %c0_i32_84 : i32 to vector<3x16x16xi32>
    %381 = arith.cmpi sgt, %364, %380 : vector<3x16x16xi32>
    %cst_85 = arith.constant 0.000000e+00 : f32
    %382 = vector.broadcast %cst_85 : f32 to vector<3x16x16xf32>
    %383 = arith.select %381, %370, %382 : vector<3x16x16xi1>, vector<3x16x16xf32>
    %384 = vector.shape_cast %383 : vector<3x16x16xf32> to vector<1x3x16x16xf32>
    %cst_86 = arith.constant dense<0.000000e+00> : vector<1xf32>
    %385 = vector.multi_reduction <add>, %384, %cst_86 [1, 2, 3] : vector<1x3x16x16xf32> to vector<1xf32>
    %386 = vector.shape_cast %385 : vector<1xf32> to vector<1x1x1x1xf32>
    %387 = vector.extract %386[0, 0, 0, 0] : f32 from vector<1x1x1x1xf32>
    %cst_87 = arith.constant 0.00138888892 : f32
    %388 = arith.mulf %387, %cst_87 : f32
    %389 = arith.addf %379, %388 : f32
    %cst_88 = arith.constant 1.000000e-01 : f32
    %390 = arith.mulf %cst_88, %389 : f32
    %391 = arith.addf %362, %390 : f32
    %392 = vector.extract_strided_slice %273 {offsets = [0, 0, 0], sizes = [1, 16, 16], strides = [1, 1, 1]} : vector<3x16x16xf32> to vector<1x16x16xf32>
    %393 = vector.shape_cast %392 : vector<1x16x16xf32> to vector<16x16xf32>
    %cst_89 = arith.constant 2.990000e-01 : f32
    %394 = vector.broadcast %cst_89 : f32 to vector<16x16xf32>
    %395 = arith.mulf %394, %393 : vector<16x16xf32>
    %396 = vector.extract_strided_slice %273 {offsets = [1, 0, 0], sizes = [1, 16, 16], strides = [1, 1, 1]} : vector<3x16x16xf32> to vector<1x16x16xf32>
    %397 = vector.shape_cast %396 : vector<1x16x16xf32> to vector<16x16xf32>
    %cst_90 = arith.constant 5.870000e-01 : f32
    %398 = vector.broadcast %cst_90 : f32 to vector<16x16xf32>
    %399 = arith.mulf %398, %397 : vector<16x16xf32>
    %400 = arith.addf %395, %399 : vector<16x16xf32>
    %401 = vector.extract_strided_slice %273 {offsets = [2, 0, 0], sizes = [1, 16, 16], strides = [1, 1, 1]} : vector<3x16x16xf32> to vector<1x16x16xf32>
    %402 = vector.shape_cast %401 : vector<1x16x16xf32> to vector<16x16xf32>
    %cst_91 = arith.constant 1.140000e-01 : f32
    %403 = vector.broadcast %cst_91 : f32 to vector<16x16xf32>
    %404 = arith.mulf %403, %402 : vector<16x16xf32>
    %405 = arith.addf %400, %404 : vector<16x16xf32>
    %cst_92 = arith.constant 0.000000e+00 : f32
    %406 = vector.broadcast %cst_92 : f32 to vector<24x128xf32>
    %c0_93 = arith.constant 0 : index
    %c0_94 = arith.constant 0 : index
    %407 = vector.load %arg10[%c0_93, %c0_94] : memref<24x128xf32, #tpu.memory_space<vmem>>, vector<24x128xf32>
    tpu.vector_store %arg10[%c0_93, %c0_94], %406 {strides = array<i32>} : memref<24x128xf32, #tpu.memory_space<vmem>>, vector<24x128xf32>,
    %c0_95 = arith.constant 0 : index
    %c0_96 = arith.constant 0 : index
    %408 = vector.load %arg10[%c0_95, %c0_96] : memref<24x128xf32, #tpu.memory_space<vmem>>, vector<16x16xf32>
    tpu.vector_store %arg10[%c0_95, %c0_96], %405 {strides = array<i32>} : memref<24x128xf32, #tpu.memory_space<vmem>>, vector<16x16xf32>,
    %c0_97 = arith.constant 0 : index
    %c0_98 = arith.constant 0 : index
    %409 = vector.load %arg10[%c0_97, %c0_98] : memref<24x128xf32, #tpu.memory_space<vmem>>, vector<24x128xf32>
    %c1_i32_99 = arith.constant 1 : i32
    %410 = tpu.dynamic_rotate %409 by %c1_i32_99 dim 1 : vector<24x128xf32>, i32 -> vector<24x128xf32>
    %411 = arith.subf %409, %410 : vector<24x128xf32>
    %412 = math.absf %411 : vector<24x128xf32>
    %c1_i32_100 = arith.constant 1 : i32
    %413 = tpu.dynamic_rotate %409 by %c1_i32_100 dim 0 : vector<24x128xf32>, i32 -> vector<24x128xf32>
    %414 = arith.subf %409, %413 : vector<24x128xf32>
    %415 = math.absf %414 : vector<24x128xf32>
    %416 = vector.extract_strided_slice %271 {offsets = [0, 0, 0], sizes = [1, 16, 16], strides = [1, 1, 1]} : vector<3x16x16xf32> to vector<1x16x16xf32>
    %417 = vector.shape_cast %416 : vector<1x16x16xf32> to vector<16x16xf32>
    %cst_101 = arith.constant 2.990000e-01 : f32
    %418 = vector.broadcast %cst_101 : f32 to vector<16x16xf32>
    %419 = arith.mulf %418, %417 : vector<16x16xf32>
    %420 = vector.extract_strided_slice %271 {offsets = [1, 0, 0], sizes = [1, 16, 16], strides = [1, 1, 1]} : vector<3x16x16xf32> to vector<1x16x16xf32>
    %421 = vector.shape_cast %420 : vector<1x16x16xf32> to vector<16x16xf32>
    %cst_102 = arith.constant 5.870000e-01 : f32
    %422 = vector.broadcast %cst_102 : f32 to vector<16x16xf32>
    %423 = arith.mulf %422, %421 : vector<16x16xf32>
    %424 = arith.addf %419, %423 : vector<16x16xf32>
    %425 = vector.extract_strided_slice %271 {offsets = [2, 0, 0], sizes = [1, 16, 16], strides = [1, 1, 1]} : vector<3x16x16xf32> to vector<1x16x16xf32>
    %426 = vector.shape_cast %425 : vector<1x16x16xf32> to vector<16x16xf32>
    %cst_103 = arith.constant 1.140000e-01 : f32
    %427 = vector.broadcast %cst_103 : f32 to vector<16x16xf32>
    %428 = arith.mulf %427, %426 : vector<16x16xf32>
    %429 = arith.addf %424, %428 : vector<16x16xf32>
    %cst_104 = arith.constant 0.000000e+00 : f32
    %430 = vector.broadcast %cst_104 : f32 to vector<24x128xf32>
    %c0_105 = arith.constant 0 : index
    %c0_106 = arith.constant 0 : index
    %431 = vector.load %arg10[%c0_105, %c0_106] : memref<24x128xf32, #tpu.memory_space<vmem>>, vector<24x128xf32>
    tpu.vector_store %arg10[%c0_105, %c0_106], %430 {strides = array<i32>} : memref<24x128xf32, #tpu.memory_space<vmem>>, vector<24x128xf32>,
    %c0_107 = arith.constant 0 : index
    %c0_108 = arith.constant 0 : index
    %432 = vector.load %arg10[%c0_107, %c0_108] : memref<24x128xf32, #tpu.memory_space<vmem>>, vector<16x16xf32>
    tpu.vector_store %arg10[%c0_107, %c0_108], %429 {strides = array<i32>} : memref<24x128xf32, #tpu.memory_space<vmem>>, vector<16x16xf32>,
    %c0_109 = arith.constant 0 : index
    %c0_110 = arith.constant 0 : index
    %433 = vector.load %arg10[%c0_109, %c0_110] : memref<24x128xf32, #tpu.memory_space<vmem>>, vector<24x128xf32>
    %c1_i32_111 = arith.constant 1 : i32
    %434 = tpu.dynamic_rotate %433 by %c1_i32_111 dim 1 : vector<24x128xf32>, i32 -> vector<24x128xf32>
    %435 = arith.subf %433, %434 : vector<24x128xf32>
    %436 = math.absf %435 : vector<24x128xf32>
    %c1_i32_112 = arith.constant 1 : i32
    %437 = tpu.dynamic_rotate %433 by %c1_i32_112 dim 0 : vector<24x128xf32>, i32 -> vector<24x128xf32>
    %438 = arith.subf %433, %437 : vector<24x128xf32>
    %439 = math.absf %438 : vector<24x128xf32>
    %c1_i32_113 = arith.constant 1 : i32
    %440 = tpu.dynamic_rotate %436 by %c1_i32_113 dim 0 : vector<24x128xf32>, i32 -> vector<24x128xf32>
    %441 = arith.addf %436, %440 : vector<24x128xf32>
    %c23_i32_114 = arith.constant 23 : i32
    %442 = tpu.dynamic_rotate %436 by %c23_i32_114 dim 0 : vector<24x128xf32>, i32 -> vector<24x128xf32>
    %443 = arith.addf %441, %442 : vector<24x128xf32>
    %c1_i32_115 = arith.constant 1 : i32
    %444 = tpu.dynamic_rotate %443 by %c1_i32_115 dim 1 : vector<24x128xf32>, i32 -> vector<24x128xf32>
    %445 = arith.addf %443, %444 : vector<24x128xf32>
    %c127_i32_116 = arith.constant 127 : i32
    %446 = tpu.dynamic_rotate %443 by %c127_i32_116 dim 1 : vector<24x128xf32>, i32 -> vector<24x128xf32>
    %447 = arith.addf %445, %446 : vector<24x128xf32>
    %cst_117 = arith.constant 0.111111112 : f32
    %448 = vector.broadcast %cst_117 : f32 to vector<24x128xf32>
    %449 = arith.mulf %447, %448 : vector<24x128xf32>
    %cst_118 = arith.constant -1.000000e+01 : f32
    %450 = vector.broadcast %cst_118 : f32 to vector<24x128xf32>
    %451 = arith.mulf %450, %449 : vector<24x128xf32>
    %452 = math.exp %451 : vector<24x128xf32>
    %453 = arith.mulf %412, %452 : vector<24x128xf32>
    %c1_i32_119 = arith.constant 1 : i32
    %454 = tpu.dynamic_rotate %439 by %c1_i32_119 dim 0 : vector<24x128xf32>, i32 -> vector<24x128xf32>
    %455 = arith.addf %439, %454 : vector<24x128xf32>
    %c23_i32_120 = arith.constant 23 : i32
    %456 = tpu.dynamic_rotate %439 by %c23_i32_120 dim 0 : vector<24x128xf32>, i32 -> vector<24x128xf32>
    %457 = arith.addf %455, %456 : vector<24x128xf32>
    %c1_i32_121 = arith.constant 1 : i32
    %458 = tpu.dynamic_rotate %457 by %c1_i32_121 dim 1 : vector<24x128xf32>, i32 -> vector<24x128xf32>
    %459 = arith.addf %457, %458 : vector<24x128xf32>
    %c127_i32_122 = arith.constant 127 : i32
    %460 = tpu.dynamic_rotate %457 by %c127_i32_122 dim 1 : vector<24x128xf32>, i32 -> vector<24x128xf32>
    %461 = arith.addf %459, %460 : vector<24x128xf32>
    %cst_123 = arith.constant 0.111111112 : f32
    %462 = vector.broadcast %cst_123 : f32 to vector<24x128xf32>
    %463 = arith.mulf %461, %462 : vector<24x128xf32>
    %cst_124 = arith.constant -1.000000e+01 : f32
    %464 = vector.broadcast %cst_124 : f32 to vector<24x128xf32>
    %465 = arith.mulf %464, %463 : vector<24x128xf32>
    %466 = math.exp %465 : vector<24x128xf32>
    %467 = arith.mulf %415, %466 : vector<24x128xf32>
    %468 = arith.addf %453, %467 : vector<24x128xf32>
    %469 = vector.shape_cast %468 : vector<24x128xf32> to vector<1x24x128xf32>
    %cst_125 = arith.constant dense<0.000000e+00> : vector<1xf32>
    %470 = vector.multi_reduction <add>, %469, %cst_125 [1, 2] : vector<1x24x128xf32> to vector<1xf32>
    %471 = vector.shape_cast %470 : vector<1xf32> to vector<1x1x1xf32>
    %472 = vector.extract %471[0, 0, 0] : f32 from vector<1x1x1xf32>
    %cst_126 = arith.constant 0.00346020772 : f32
    %473 = arith.mulf %472, %cst_126 : f32
    %474 = tpu.iota {dimensions = array<i32: 1>} : vector<3x16x16xi32>
    %475 = tpu.iota {dimensions = array<i32: 2>} : vector<3x16x16xi32>
    %c1_i32_127 = arith.constant 1 : i32
    %476 = tpu.dynamic_rotate %271 by %c1_i32_127 dim 1 : vector<3x16x16xf32>, i32 -> vector<3x16x16xf32>
    %477 = arith.subf %271, %476 : vector<3x16x16xf32>
    %478 = math.absf %477 : vector<3x16x16xf32>
    %c1_i32_128 = arith.constant 1 : i32
    %479 = tpu.dynamic_rotate %271 by %c1_i32_128 dim 2 : vector<3x16x16xf32>, i32 -> vector<3x16x16xf32>
    %480 = arith.subf %271, %479 : vector<3x16x16xf32>
    %481 = math.absf %480 : vector<3x16x16xf32>
    %c0_i32_129 = arith.constant 0 : i32
    %482 = vector.broadcast %c0_i32_129 : i32 to vector<3x16x16xi32>
    %483 = arith.cmpi sgt, %474, %482 : vector<3x16x16xi32>
    %cst_130 = arith.constant 0.000000e+00 : f32
    %484 = vector.broadcast %cst_130 : f32 to vector<3x16x16xf32>
    %485 = arith.select %483, %478, %484 : vector<3x16x16xi1>, vector<3x16x16xf32>
    %486 = vector.shape_cast %485 : vector<3x16x16xf32> to vector<1x3x16x16xf32>
    %cst_131 = arith.constant dense<0.000000e+00> : vector<1xf32>
    %487 = vector.multi_reduction <add>, %486, %cst_131 [1, 2, 3] : vector<1x3x16x16xf32> to vector<1xf32>
    %488 = vector.shape_cast %487 : vector<1xf32> to vector<1x1x1x1xf32>
    %489 = vector.extract %488[0, 0, 0, 0] : f32 from vector<1x1x1x1xf32>
    %cst_132 = arith.constant 0.00138888892 : f32
    %490 = arith.mulf %489, %cst_132 : f32
    %c0_i32_133 = arith.constant 0 : i32
    %491 = vector.broadcast %c0_i32_133 : i32 to vector<3x16x16xi32>
    %492 = arith.cmpi sgt, %475, %491 : vector<3x16x16xi32>
    %cst_134 = arith.constant 0.000000e+00 : f32
    %493 = vector.broadcast %cst_134 : f32 to vector<3x16x16xf32>
    %494 = arith.select %492, %481, %493 : vector<3x16x16xi1>, vector<3x16x16xf32>
    %495 = vector.shape_cast %494 : vector<3x16x16xf32> to vector<1x3x16x16xf32>
    %cst_135 = arith.constant dense<0.000000e+00> : vector<1xf32>
    %496 = vector.multi_reduction <add>, %495, %cst_135 [1, 2, 3] : vector<1x3x16x16xf32> to vector<1xf32>
    %497 = vector.shape_cast %496 : vector<1xf32> to vector<1x1x1x1xf32>
    %498 = vector.extract %497[0, 0, 0, 0] : f32 from vector<1x1x1x1xf32>
    %cst_136 = arith.constant 0.00138888892 : f32
    %499 = arith.mulf %498, %cst_136 : f32
    %500 = arith.addf %490, %499 : f32
    %cst_137 = arith.constant 1.000000e-01 : f32
    %501 = arith.mulf %cst_137, %500 : f32
    %502 = arith.addf %473, %501 : f32
    %503 = tpu.concatenate %36, %43, %50, %73, %80, %87 in 1 : vector<16x16xf32>, vector<16x16xf32>, vector<16x16xf32>, vector<16x16xf32>, vector<16x16xf32>, vector<16x16xf32> -> vector<16x96xf32>
    %cst_138 = arith.constant dense<0.000000e+00> : vector<32x96xf32>
    %504 = tpu.matmul %12, %503, %cst_138 {dimension_numbers = #tpu.dot_dimension_numbers<[1], [0], [0], [1], [0, 0, 1, 1], [], []>} : vector<32x16xf32>, vector<16x96xf32>, vector<32x96xf32> -> vector<32x96xf32>
    %cst_139 = arith.constant dense<0.000000e+00> : vector<32x120xf32>
    %505 = tpu.matmul %504, %13, %cst_139 {dimension_numbers = #tpu.dot_dimension_numbers<[1], [0], [0], [1], [0, 0, 1, 1], [], []>} : vector<32x96xf32>, vector<96x120xf32>, vector<32x120xf32> -> vector<32x120xf32>
    %506 = vector.extract_strided_slice %505 {offsets = [0, 0], sizes = [16, 120], strides = [1, 1]} : vector<32x120xf32> to vector<16x120xf32>
    %507 = vector.extract_strided_slice %505 {offsets = [16, 0], sizes = [16, 120], strides = [1, 1]} : vector<32x120xf32> to vector<16x120xf32>
    %508 = vector.extract_strided_slice %506 {offsets = [0, 0], sizes = [16, 10], strides = [1, 1]} : vector<16x120xf32> to vector<16x10xf32>
    %509 = vector.extract_strided_slice %507 {offsets = [0, 10], sizes = [16, 10], strides = [1, 1]} : vector<16x120xf32> to vector<16x10xf32>
    %510 = arith.subf %508, %509 : vector<16x10xf32>
    %511 = vector.extract_strided_slice %506 {offsets = [0, 10], sizes = [16, 10], strides = [1, 1]} : vector<16x120xf32> to vector<16x10xf32>
    %512 = vector.extract_strided_slice %507 {offsets = [0, 0], sizes = [16, 10], strides = [1, 1]} : vector<16x120xf32> to vector<16x10xf32>
    %513 = arith.addf %511, %512 : vector<16x10xf32>
    %514 = arith.mulf %510, %510 : vector<16x10xf32>
    %515 = arith.mulf %513, %513 : vector<16x10xf32>
    %516 = arith.addf %514, %515 : vector<16x10xf32>
    %517 = math.sqrt %516 : vector<16x10xf32>
    %518 = vector.shape_cast %517 : vector<16x10xf32> to vector<1x16x10xf32>
    %cst_140 = arith.constant dense<0.000000e+00> : vector<1xf32>
    %519 = vector.multi_reduction <add>, %518, %cst_140 [1, 2] : vector<1x16x10xf32> to vector<1xf32>
    %520 = vector.shape_cast %519 : vector<1xf32> to vector<1x1x1xf32>
    %521 = vector.extract %520[0, 0, 0] : f32 from vector<1x1x1xf32>
    %cst_141 = arith.constant 0.000000e+00 : f32
    %522 = arith.addf %cst_141, %521 : f32
    %523 = vector.extract_strided_slice %506 {offsets = [0, 20], sizes = [16, 10], strides = [1, 1]} : vector<16x120xf32> to vector<16x10xf32>
    %524 = vector.extract_strided_slice %507 {offsets = [0, 30], sizes = [16, 10], strides = [1, 1]} : vector<16x120xf32> to vector<16x10xf32>
    %525 = arith.subf %523, %524 : vector<16x10xf32>
    %526 = vector.extract_strided_slice %506 {offsets = [0, 30], sizes = [16, 10], strides = [1, 1]} : vector<16x120xf32> to vector<16x10xf32>
    %527 = vector.extract_strided_slice %507 {offsets = [0, 20], sizes = [16, 10], strides = [1, 1]} : vector<16x120xf32> to vector<16x10xf32>
    %528 = arith.addf %526, %527 : vector<16x10xf32>
    %529 = arith.mulf %525, %525 : vector<16x10xf32>
    %530 = arith.mulf %528, %528 : vector<16x10xf32>
    %531 = arith.addf %529, %530 : vector<16x10xf32>
    %532 = math.sqrt %531 : vector<16x10xf32>
    %533 = vector.shape_cast %532 : vector<16x10xf32> to vector<1x16x10xf32>
    %cst_142 = arith.constant dense<0.000000e+00> : vector<1xf32>
    %534 = vector.multi_reduction <add>, %533, %cst_142 [1, 2] : vector<1x16x10xf32> to vector<1xf32>
    %535 = vector.shape_cast %534 : vector<1xf32> to vector<1x1x1xf32>
    %536 = vector.extract %535[0, 0, 0] : f32 from vector<1x1x1xf32>
    %537 = arith.addf %522, %536 : f32
    %538 = vector.extract_strided_slice %506 {offsets = [0, 40], sizes = [16, 10], strides = [1, 1]} : vector<16x120xf32> to vector<16x10xf32>
    %539 = vector.extract_strided_slice %507 {offsets = [0, 50], sizes = [16, 10], strides = [1, 1]} : vector<16x120xf32> to vector<16x10xf32>
    %540 = arith.subf %538, %539 : vector<16x10xf32>
    %541 = vector.extract_strided_slice %506 {offsets = [0, 50], sizes = [16, 10], strides = [1, 1]} : vector<16x120xf32> to vector<16x10xf32>
    %542 = vector.extract_strided_slice %507 {offsets = [0, 40], sizes = [16, 10], strides = [1, 1]} : vector<16x120xf32> to vector<16x10xf32>
    %543 = arith.addf %541, %542 : vector<16x10xf32>
    %544 = arith.mulf %540, %540 : vector<16x10xf32>
    %545 = arith.mulf %543, %543 : vector<16x10xf32>
    %546 = arith.addf %544, %545 : vector<16x10xf32>
    %547 = math.sqrt %546 : vector<16x10xf32>
    %548 = vector.shape_cast %547 : vector<16x10xf32> to vector<1x16x10xf32>
    %cst_143 = arith.constant dense<0.000000e+00> : vector<1xf32>
    %549 = vector.multi_reduction <add>, %548, %cst_143 [1, 2] : vector<1x16x10xf32> to vector<1xf32>
    %550 = vector.shape_cast %549 : vector<1xf32> to vector<1x1x1xf32>
    %551 = vector.extract %550[0, 0, 0] : f32 from vector<1x1x1xf32>
    %552 = arith.addf %537, %551 : f32
    %553 = vector.extract_strided_slice %506 {offsets = [0, 60], sizes = [16, 10], strides = [1, 1]} : vector<16x120xf32> to vector<16x10xf32>
    %554 = vector.extract_strided_slice %507 {offsets = [0, 70], sizes = [16, 10], strides = [1, 1]} : vector<16x120xf32> to vector<16x10xf32>
    %555 = arith.subf %553, %554 : vector<16x10xf32>
    %556 = vector.extract_strided_slice %506 {offsets = [0, 70], sizes = [16, 10], strides = [1, 1]} : vector<16x120xf32> to vector<16x10xf32>
    %557 = vector.extract_strided_slice %507 {offsets = [0, 60], sizes = [16, 10], strides = [1, 1]} : vector<16x120xf32> to vector<16x10xf32>
    %558 = arith.addf %556, %557 : vector<16x10xf32>
    %559 = arith.mulf %555, %555 : vector<16x10xf32>
    %560 = arith.mulf %558, %558 : vector<16x10xf32>
    %561 = arith.addf %559, %560 : vector<16x10xf32>
    %562 = math.sqrt %561 : vector<16x10xf32>
    %563 = vector.shape_cast %562 : vector<16x10xf32> to vector<1x16x10xf32>
    %cst_144 = arith.constant dense<0.000000e+00> : vector<1xf32>
    %564 = vector.multi_reduction <add>, %563, %cst_144 [1, 2] : vector<1x16x10xf32> to vector<1xf32>
    %565 = vector.shape_cast %564 : vector<1xf32> to vector<1x1x1xf32>
    %566 = vector.extract %565[0, 0, 0] : f32 from vector<1x1x1xf32>
    %567 = arith.addf %552, %566 : f32
    %568 = vector.extract_strided_slice %506 {offsets = [0, 80], sizes = [16, 10], strides = [1, 1]} : vector<16x120xf32> to vector<16x10xf32>
    %569 = vector.extract_strided_slice %507 {offsets = [0, 90], sizes = [16, 10], strides = [1, 1]} : vector<16x120xf32> to vector<16x10xf32>
    %570 = arith.subf %568, %569 : vector<16x10xf32>
    %571 = vector.extract_strided_slice %506 {offsets = [0, 90], sizes = [16, 10], strides = [1, 1]} : vector<16x120xf32> to vector<16x10xf32>
    %572 = vector.extract_strided_slice %507 {offsets = [0, 80], sizes = [16, 10], strides = [1, 1]} : vector<16x120xf32> to vector<16x10xf32>
    %573 = arith.addf %571, %572 : vector<16x10xf32>
    %574 = arith.mulf %570, %570 : vector<16x10xf32>
    %575 = arith.mulf %573, %573 : vector<16x10xf32>
    %576 = arith.addf %574, %575 : vector<16x10xf32>
    %577 = math.sqrt %576 : vector<16x10xf32>
    %578 = vector.shape_cast %577 : vector<16x10xf32> to vector<1x16x10xf32>
    %cst_145 = arith.constant dense<0.000000e+00> : vector<1xf32>
    %579 = vector.multi_reduction <add>, %578, %cst_145 [1, 2] : vector<1x16x10xf32> to vector<1xf32>
    %580 = vector.shape_cast %579 : vector<1xf32> to vector<1x1x1xf32>
    %581 = vector.extract %580[0, 0, 0] : f32 from vector<1x1x1xf32>
    %582 = arith.addf %567, %581 : f32
    %583 = vector.extract_strided_slice %506 {offsets = [0, 100], sizes = [16, 10], strides = [1, 1]} : vector<16x120xf32> to vector<16x10xf32>
    %584 = vector.extract_strided_slice %507 {offsets = [0, 110], sizes = [16, 10], strides = [1, 1]} : vector<16x120xf32> to vector<16x10xf32>
    %585 = arith.subf %583, %584 : vector<16x10xf32>
    %586 = vector.extract_strided_slice %506 {offsets = [0, 110], sizes = [16, 10], strides = [1, 1]} : vector<16x120xf32> to vector<16x10xf32>
    %587 = vector.extract_strided_slice %507 {offsets = [0, 100], sizes = [16, 10], strides = [1, 1]} : vector<16x120xf32> to vector<16x10xf32>
    %588 = arith.addf %586, %587 : vector<16x10xf32>
    %589 = arith.mulf %585, %585 : vector<16x10xf32>
    %590 = arith.mulf %588, %588 : vector<16x10xf32>
    %591 = arith.addf %589, %590 : vector<16x10xf32>
    %592 = math.sqrt %591 : vector<16x10xf32>
    %593 = vector.shape_cast %592 : vector<16x10xf32> to vector<1x16x10xf32>
    %cst_146 = arith.constant dense<0.000000e+00> : vector<1xf32>
    %594 = vector.multi_reduction <add>, %593, %cst_146 [1, 2] : vector<1x16x10xf32> to vector<1xf32>
    %595 = vector.shape_cast %594 : vector<1xf32> to vector<1x1x1xf32>
    %596 = vector.extract %595[0, 0, 0] : f32 from vector<1x1x1xf32>
    %597 = arith.addf %582, %596 : f32
    %cst_147 = arith.constant 0.00999999977 : f32
    %598 = arith.mulf %cst_147, %597 : f32
    %cst_148 = arith.constant 0.00333333341 : f32
    %599 = arith.mulf %598, %cst_148 : f32
    %600 = tpu.iota {dimensions = array<i32: 2>} : vector<1x1x128xi32>
    %cst_149 = arith.constant 0.000000e+00 : f32
    %601 = vector.broadcast %cst_149 : f32 to vector<1x1x128xf32>
    %c0_i32_150 = arith.constant 0 : i32
    %602 = vector.broadcast %c0_i32_150 : i32 to vector<1x1x128xi32>
    %603 = arith.cmpi eq, %600, %602 : vector<1x1x128xi32>
    %604 = vector.broadcast %114 : f32 to vector<1x1x128xf32>
    %605 = arith.select %603, %604, %601 : vector<1x1x128xi1>, vector<1x1x128xf32>
    %c1_i32_151 = arith.constant 1 : i32
    %606 = vector.broadcast %c1_i32_151 : i32 to vector<1x1x128xi32>
    %607 = arith.cmpi eq, %600, %606 : vector<1x1x128xi32>
    %608 = vector.broadcast %141 : f32 to vector<1x1x128xf32>
    %609 = arith.select %607, %608, %605 : vector<1x1x128xi1>, vector<1x1x128xf32>
    %c2_i32 = arith.constant 2 : i32
    %610 = vector.broadcast %c2_i32 : i32 to vector<1x1x128xi32>
    %611 = arith.cmpi eq, %600, %610 : vector<1x1x128xi32>
    %612 = vector.broadcast %205 : f32 to vector<1x1x128xf32>
    %613 = arith.select %611, %612, %609 : vector<1x1x128xi1>, vector<1x1x128xf32>
    %c3_i32 = arith.constant 3 : i32
    %614 = vector.broadcast %c3_i32 : i32 to vector<1x1x128xi32>
    %615 = arith.cmpi eq, %600, %614 : vector<1x1x128xi32>
    %616 = vector.broadcast %269 : f32 to vector<1x1x128xf32>
    %617 = arith.select %615, %616, %613 : vector<1x1x128xi1>, vector<1x1x128xf32>
    %c4_i32 = arith.constant 4 : i32
    %618 = vector.broadcast %c4_i32 : i32 to vector<1x1x128xi32>
    %619 = arith.cmpi eq, %600, %618 : vector<1x1x128xi32>
    %620 = vector.broadcast %280 : f32 to vector<1x1x128xf32>
    %621 = arith.select %619, %620, %617 : vector<1x1x128xi1>, vector<1x1x128xf32>
    %c5_i32 = arith.constant 5 : i32
    %622 = vector.broadcast %c5_i32 : i32 to vector<1x1x128xi32>
    %623 = arith.cmpi eq, %600, %622 : vector<1x1x128xi32>
    %624 = vector.broadcast %391 : f32 to vector<1x1x128xf32>
    %625 = arith.select %623, %624, %621 : vector<1x1x128xi1>, vector<1x1x128xf32>
    %c6_i32 = arith.constant 6 : i32
    %626 = vector.broadcast %c6_i32 : i32 to vector<1x1x128xi32>
    %627 = arith.cmpi eq, %600, %626 : vector<1x1x128xi32>
    %628 = vector.broadcast %502 : f32 to vector<1x1x128xf32>
    %629 = arith.select %627, %628, %625 : vector<1x1x128xi1>, vector<1x1x128xf32>
    %c7_i32 = arith.constant 7 : i32
    %630 = vector.broadcast %c7_i32 : i32 to vector<1x1x128xi32>
    %631 = arith.cmpi eq, %600, %630 : vector<1x1x128xi32>
    %632 = vector.broadcast %599 : f32 to vector<1x1x128xf32>
    %633 = arith.select %631, %632, %629 : vector<1x1x128xi1>, vector<1x1x128xf32>
    %c0_152 = arith.constant 0 : index
    %c0_153 = arith.constant 0 : index
    %c0_154 = arith.constant 0 : index
    %634 = vector.load %arg9[%c0_152, %c0_153, %c0_154] : memref<1x1x128xf32, #tpu.memory_space<vmem>>, vector<1x1x128xf32>
    tpu.vector_store %arg9[%c0_152, %c0_153, %c0_154], %633 {strides = array<i32>} : memref<1x1x128xf32, #tpu.memory_space<vmem>>, vector<1x1x128xf32>,
    return
  }
  func.func @transform_0(%arg0: i32) -> (i32, i32, i32, i32) {
    %c0_i32 = arith.constant 0 : i32
    %c0_i32_0 = arith.constant 0 : i32
    %c0_i32_1 = arith.constant 0 : i32
    %c0_i32_2 = arith.constant 0 : i32
    return %arg0, %c0_i32, %c0_i32_0, %c0_i32_1 : i32, i32, i32, i32
  }
  func.func @transform_1(%arg0: i32) -> (i32, i32, i32, i32) {
    %c0_i32 = arith.constant 0 : i32
    %c0_i32_0 = arith.constant 0 : i32
    %c0_i32_1 = arith.constant 0 : i32
    %c0_i32_2 = arith.constant 0 : i32
    return %arg0, %c0_i32, %c0_i32_0, %c0_i32_1 : i32, i32, i32, i32
  }
  func.func @transform_2(%arg0: i32) -> (i32, i32, i32, i32) {
    %c0_i32 = arith.constant 0 : i32
    %c0_i32_0 = arith.constant 0 : i32
    %c0_i32_1 = arith.constant 0 : i32
    %c0_i32_2 = arith.constant 0 : i32
    return %arg0, %c0_i32, %c0_i32_0, %c0_i32_1 : i32, i32, i32, i32
  }
  func.func @transform_3(%arg0: i32) -> (i32, i32, i32, i32) {
    %c0_i32 = arith.constant 0 : i32
    %c0_i32_0 = arith.constant 0 : i32
    %c0_i32_1 = arith.constant 0 : i32
    %c0_i32_2 = arith.constant 0 : i32
    return %arg0, %c0_i32, %c0_i32_0, %c0_i32_1 : i32, i32, i32, i32
  }
  func.func @transform_4(%arg0: i32) -> (i32, i32, i32, i32) {
    %c0_i32 = arith.constant 0 : i32
    %c0_i32_0 = arith.constant 0 : i32
    %c0_i32_1 = arith.constant 0 : i32
    %c0_i32_2 = arith.constant 0 : i32
    return %arg0, %c0_i32, %c0_i32_0, %c0_i32_1 : i32, i32, i32, i32
  }
  func.func @transform_5(%arg0: i32) -> (i32, i32, i32, i32) {
    %c0_i32 = arith.constant 0 : i32
    %c0_i32_0 = arith.constant 0 : i32
    %c0_i32_1 = arith.constant 0 : i32
    %c0_i32_2 = arith.constant 0 : i32
    return %arg0, %c0_i32, %c0_i32_0, %c0_i32_1 : i32, i32, i32, i32
  }
  func.func @transform_6(%arg0: i32) -> (i32, i32) {
    %c0_i32 = arith.constant 0 : i32
    %c0_i32_0 = arith.constant 0 : i32
    %c0_i32_1 = arith.constant 0 : i32
    return %c0_i32, %c0_i32_0 : i32, i32
  }
  func.func @transform_7(%arg0: i32) -> (i32, i32) {
    %c0_i32 = arith.constant 0 : i32
    %c0_i32_0 = arith.constant 0 : i32
    %c0_i32_1 = arith.constant 0 : i32
    return %c0_i32, %c0_i32_0 : i32, i32
  }
  func.func @transform_8(%arg0: i32) -> (i32, i32, i32) {
    %c0_i32 = arith.constant 0 : i32
    %c0_i32_0 = arith.constant 0 : i32
    %c0_i32_1 = arith.constant 0 : i32
    return %arg0, %c0_i32, %c0_i32_0 : i32, i32, i32
  }
}

</mosaic_0001>

<llo_original>
// kernel: retinex_loss.1
$region0: #{retinex_loss.1}
  #allocation0 [shape = 'u32[]', space=smem, size = 0x4, offset = 0x4, fixed_abs, tag = 'smem constant byte address 0x4 - core index']
  #allocation1 [shape = 'u32[72,128]{1,0:T(1,128)}', space=vmem, size = 0x9000, scoped, tag = 'internal scratch']
  #allocation2 [shape = 'f32[24,128]{1,0:T(8,128)}', space=vmem, size = 0x3000, scoped, tag = 'scratch operand']
  %s0 = inlined_call_operand.hbm [shape: f32[2,4,16,16], index: 0, kind: input, shape index: {}]
  %s1 = inlined_call_operand.hbm [shape: f32[2,4,16,16], index: 1, kind: input, shape index: {}]
  %s2 = inlined_call_operand.hbm [shape: f32[2,3,16,16], index: 2, kind: input, shape index: {}]
  %s3 = inlined_call_operand.hbm [shape: f32[2,4,16,16], index: 3, kind: input, shape index: {}]
  %s4 = inlined_call_operand.hbm [shape: f32[2,4,16,16], index: 4, kind: input, shape index: {}]
  %s5 = inlined_call_operand.hbm [shape: f32[2,3,16,16], index: 5, kind: input, shape index: {}]
  %s6 = inlined_call_operand.hbm [shape: f32[32,16], index: 6, kind: input, shape index: {}]
  %s7 = inlined_call_operand.hbm [shape: f32[96,120], index: 7, kind: input, shape index: {}]
  %s8 = inlined_call_operand.vmem [shape: f32[2,1,128], index: 8, kind: output, shape index: {}]
  %s9 = sld [smem:[#allocation0]]
  $region97: #{retinex_loss.1} parent=0
    _
  %s11 = ssub.s32 1, %s9
  %s12 = scalar_select 0, %s11, %s9
  $region1: #{retinex_loss.1} parent=0
    #allocation3 [shape = 'u8[65536]{0}', space=vmem, size = 0x10000, scoped, tag = 'input window, operand 0']
    #allocation4 [shape = 's32[2]{0}', space=sflag, size = 0x8, scoped, tag = 'scoped memory for retinex_loss.1']
    #allocation5 [shape = 'u8[65536]{0}', space=vmem, size = 0x10000, scoped, tag = 'input window, operand 1']
    #allocation6 [shape = 's32[2]{0}', space=sflag, size = 0x8, scoped, tag = 'scoped memory for retinex_loss.1']
    #allocation7 [shape = 'u8[49152]{0}', space=vmem, size = 0xc000, scoped, tag = 'input window, operand 2']
    #allocation8 [shape = 'u8[65536]{0}', space=vmem, size = 0x10000, scoped, tag = 'input window, operand 3']
    #allocation9 [shape = 's32[2]{0}', space=sflag, size = 0x8, scoped, tag = 'scoped memory for retinex_loss.1']
    #allocation10 [shape = 'u8[65536]{0}', space=vmem, size = 0x10000, scoped, tag = 'input window, operand 4']
    #allocation11 [shape = 'u8[49152]{0}', space=vmem, size = 0xc000, scoped, tag = 'input window, operand 5']
    #allocation12 [shape = 's32[2]{0}', space=sflag, size = 0x8, scoped, tag = 'scoped memory for retinex_loss.1']
    #allocation13 [shape = 'u8[16384]{0}', space=vmem, size = 0x4000, scoped, tag = 'input window, operand 6, single buffered']
    #allocation14 [shape = 'u8[49152]{0}', space=vmem, size = 0xc000, scoped, tag = 'input window, operand 7, single buffered']
    #allocation15 [shape = 's32[1]{0}', space=sflag, size = 0x4, scoped, tag = 'scoped memory for retinex_loss.1']
    %13 = vsyncpa [#allocation4], 0
    %s14 = scalar_lea.sflag [#allocation4], 1
    %15 = vsyncpa %s14, 0
    %16 = vsyncpa [#allocation6], 0
    %s17 = scalar_lea.sflag [#allocation6], 1
    %18 = vsyncpa %s17, 0
    %19 = vsyncpa [#allocation9], 0
    %s20 = scalar_lea.sflag [#allocation9], 1
    %21 = vsyncpa %s20, 0
    %22 = vsyncpa [#allocation12], 0
    %s23 = scalar_lea.sflag [#allocation12], 1
    %24 = vsyncpa %s23, 0
    %25 = vsyncpa [#allocation15], 0
    loop: start=0, step=1, limit=4
    $region2: #{retinex_loss.1} parent=1 // loop_pre_header
      _
    $region3: #{retinex_loss.1} parent=1 // loop_header
      %s27 = sphi 0, %s31
      %p28 = scmp.ge.s32.totalorder %s27, 4
      %s37 = sphi 0, %s39
      %s40 = sphi 0, %s37
      %s41 = sphi 0, %s40
      %s57 = sphi 0, %s41
      %s63 = sphi 0, %s65
      %s66 = sphi 0, %s63
      %s67 = sphi 0, %s66
      %s83 = sphi 0, %s67
      %s89 = sphi 0, %s91
      %s92 = sphi 0, %s89
      %s93 = sphi 0, %s92
      %s109 = sphi 0, %s93
      %s115 = sphi 0, %s117
      %s118 = sphi 0, %s115
      %s119 = sphi 0, %s118
      %s135 = sphi 0, %s119
      %s141 = sphi 0, %s143
      %s144 = sphi 0, %s141
      %s145 = sphi 0, %s144
      %s161 = sphi 0, %s145
      %s167 = sphi 0, %s169
      %s170 = sphi 0, %s167
      %s171 = sphi 0, %s170
      %s187 = sphi 0, %s171
      %s191 = sphi 0, %s191
      %s193 = sphi 0, %s191
      %s194 = sphi 0, %s193
      %s208 = sphi 0, %s194
      %s212 = sphi 0, %s212
      %s214 = sphi 0, %s212
      %s215 = sphi 0, %s214
      %s229 = sphi 0, %s215
      %s235 = sphi 0, %s237
      %s238 = sphi 0, %s235
      %s239 = sphi 0, %s238
      %s255 = sphi 0, %s239
    $region4: #{retinex_loss.1} parent=1 // loop_header_branch
      %30 = sbr.rel (%p28) target = $region8
    $region5: #{retinex_loss.1} parent=1 // loop_body
      %s32 = ssub.s32 %s27, 1
      %s33 = ssub.s32 %s27, 2
      %s34 = sadd.s32 %s27, 1
      %s35 = ssub.s32 %s27, %s34
      %p36 = scmp.eq.s32.totalorder %s35, 0
      %s38 = sadd.s32 %s37, 1
      %s39 = scalar_select %p36, %s37, %s38
      %p42 = pneg %p36
      %p43 = scmp.eq.s32.totalorder %s27, 1
      %p44 = por %p42, %p43
      %p45 = scmp.ne.s32.totalorder %s37, %s40
      %p46 = scmp.eq.s32.totalorder %s27, 0
      %p47 = por %p45, %p46
      %p48 = scmp.ne.s32.totalorder %s37, %s40
      %p49 = scmp.eq.s32.totalorder %s32, 1
      %p50 = por %p48, %p49
      %p51 = scmp.ne.s32.totalorder %s40, %s41
      %p52 = scmp.eq.s32.totalorder %s32, 0
      %p53 = por %p51, %p52
      %p54 = scmp.ne.s32.totalorder %s40, %s41
      %p55 = scmp.eq.s32.totalorder %s33, 1
      %p56 = por %p54, %p55
      %p58 = scmp.ne.s32.totalorder %s41, %s57
      %p59 = scmp.eq.s32.totalorder %s33, 0
      %p60 = por %p58, %p59
      %s61 = ssub.s32 %s27, %s34
      %p62 = scmp.eq.s32.totalorder %s61, 0
      %s64 = sadd.s32 %s63, 1
      %s65 = scalar_select %p62, %s63, %s64
      %p68 = pneg %p62
      %p69 = scmp.eq.s32.totalorder %s27, 1
      %p70 = por %p68, %p69
      %p71 = scmp.ne.s32.totalorder %s63, %s66
      %p72 = scmp.eq.s32.totalorder %s27, 0
      %p73 = por %p71, %p72
      %p74 = scmp.ne.s32.totalorder %s63, %s66
      %p75 = scmp.eq.s32.totalorder %s32, 1
      %p76 = por %p74, %p75
      %p77 = scmp.ne.s32.totalorder %s66, %s67
      %p78 = scmp.eq.s32.totalorder %s32, 0
      %p79 = por %p77, %p78
      %p80 = scmp.ne.s32.totalorder %s66, %s67
      %p81 = scmp.eq.s32.totalorder %s33, 1
      %p82 = por %p80, %p81
      %p84 = scmp.ne.s32.totalorder %s67, %s83
      %p85 = scmp.eq.s32.totalorder %s33, 0
      %p86 = por %p84, %p85
      %s87 = ssub.s32 %s27, %s34
      %p88 = scmp.eq.s32.totalorder %s87, 0
      %s90 = sadd.s32 %s89, 1
      %s91 = scalar_select %p88, %s89, %s90
      %p94 = pneg %p88
      %p95 = scmp.eq.s32.totalorder %s27, 1
      %p96 = por %p94, %p95
      %p97 = scmp.ne.s32.totalorder %s89, %s92
      %p98 = scmp.eq.s32.totalorder %s27, 0
      %p99 = por %p97, %p98
      %p100 = scmp.ne.s32.totalorder %s89, %s92
      %p101 = scmp.eq.s32.totalorder %s32, 1
      %p102 = por %p100, %p101
      %p103 = scmp.ne.s32.totalorder %s92, %s93
      %p104 = scmp.eq.s32.totalorder %s32, 0
      %p105 = por %p103, %p104
      %p106 = scmp.ne.s32.totalorder %s92, %s93
      %p107 = scmp.eq.s32.totalorder %s33, 1
      %p108 = por %p106, %p107
      %p110 = scmp.ne.s32.totalorder %s93, %s109
      %p111 = scmp.eq.s32.totalorder %s33, 0
      %p112 = por %p110, %p111
      %s113 = ssub.s32 %s27, %s34
      %p114 = scmp.eq.s32.totalorder %s113, 0
      %s116 = sadd.s32 %s115, 1
      %s117 = scalar_select %p114, %s115, %s116
      %p120 = pneg %p114
      %p121 = scmp.eq.s32.totalorder %s27, 1
      %p122 = por %p120, %p121
      %p123 = scmp.ne.s32.totalorder %s115, %s118
      %p124 = scmp.eq.s32.totalorder %s27, 0
      %p125 = por %p123, %p124
      %p126 = scmp.ne.s32.totalorder %s115, %s118
      %p127 = scmp.eq.s32.totalorder %s32, 1
      %p128 = por %p126, %p127
      %p129 = scmp.ne.s32.totalorder %s118, %s119
      %p130 = scmp.eq.s32.totalorder %s32, 0
      %p131 = por %p129, %p130
      %p132 = scmp.ne.s32.totalorder %s118, %s119
      %p133 = scmp.eq.s32.totalorder %s33, 1
      %p134 = por %p132, %p133
      %p136 = scmp.ne.s32.totalorder %s119, %s135
      %p137 = scmp.eq.s32.totalorder %s33, 0
      %p138 = por %p136, %p137
      %s139 = ssub.s32 %s27, %s34
      %p140 = scmp.eq.s32.totalorder %s139, 0
      %s142 = sadd.s32 %s141, 1
      %s143 = scalar_select %p140, %s141, %s142
      %p146 = pneg %p140
      %p147 = scmp.eq.s32.totalorder %s27, 1
      %p148 = por %p146, %p147
      %p149 = scmp.ne.s32.totalorder %s141, %s144
      %p150 = scmp.eq.s32.totalorder %s27, 0
      %p151 = por %p149, %p150
      %p152 = scmp.ne.s32.totalorder %s141, %s144
      %p153 = scmp.eq.s32.totalorder %s32, 1
      %p154 = por %p152, %p153
      %p155 = scmp.ne.s32.totalorder %s144, %s145
      %p156 = scmp.eq.s32.totalorder %s32, 0
      %p157 = por %p155, %p156
      %p158 = scmp.ne.s32.totalorder %s144, %s145
      %p159 = scmp.eq.s32.totalorder %s33, 1
      %p160 = por %p158, %p159
      %p162 = scmp.ne.s32.totalorder %s145, %s161
      %p163 = scmp.eq.s32.totalorder %s33, 0
      %p164 = por %p162, %p163
      %s165 = ssub.s32 %s27, %s34
      %p166 = scmp.eq.s32.totalorder %s165, 0
      %s168 = sadd.s32 %s167, 1
      %s169 = scalar_select %p166, %s167, %s168
      %p172 = pneg %p166
      %p173 = scmp.eq.s32.totalorder %s27, 1
      %p174 = por %p172, %p173
      %p175 = scmp.ne.s32.totalorder %s167, %s170
      %p176 = scmp.eq.s32.totalorder %s27, 0
      %p177 = por %p175, %p176
      %p178 = scmp.ne.s32.totalorder %s167, %s170
      %p179 = scmp.eq.s32.totalorder %s32, 1
      %p180 = por %p178, %p179
      %p181 = scmp.ne.s32.totalorder %s170, %s171
      %p182 = scmp.eq.s32.totalorder %s32, 0
      %p183 = por %p181, %p182
      %p184 = scmp.ne.s32.totalorder %s170, %s171
      %p185 = scmp.eq.s32.totalorder %s33, 1
      %p186 = por %p184, %p185
      %p188 = scmp.ne.s32.totalorder %s171, %s187
      %p189 = scmp.eq.s32.totalorder %s33, 0
      %p190 = por %p188, %p189
      %s192 = sadd.s32 %s191, 1
      %p195 = scmp.eq.s32.totalorder %s27, 1
      %p196 = scmp.ne.s32.totalorder %s191, %s193
      %p197 = scmp.eq.s32.totalorder %s27, 0
      %p198 = por %p196, %p197
      %p199 = scmp.ne.s32.totalorder %s191, %s193
      %p200 = scmp.eq.s32.totalorder %s32, 1
      %p201 = por %p199, %p200
      %p202 = scmp.ne.s32.totalorder %s193, %s194
      %p203 = scmp.eq.s32.totalorder %s32, 0
      %p204 = por %p202, %p203
      %p205 = scmp.ne.s32.totalorder %s193, %s194
      %p206 = scmp.eq.s32.totalorder %s33, 1
      %p207 = por %p205, %p206
      %p209 = scmp.ne.s32.totalorder %s194, %s208
      %p210 = scmp.eq.s32.totalorder %s33, 0
      %p211 = por %p209, %p210
      %s213 = sadd.s32 %s212, 1
      %p216 = scmp.eq.s32.totalorder %s27, 1
      %p217 = scmp.ne.s32.totalorder %s212, %s214
      %p218 = scmp.eq.s32.totalorder %s27, 0
      %p219 = por %p217, %p218
      %p220 = scmp.ne.s32.totalorder %s212, %s214
      %p221 = scmp.eq.s32.totalorder %s32, 1
      %p222 = por %p220, %p221
      %p223 = scmp.ne.s32.totalorder %s214, %s215
      %p224 = scmp.eq.s32.totalorder %s32, 0
      %p225 = por %p223, %p224
      %p226 = scmp.ne.s32.totalorder %s214, %s215
      %p227 = scmp.eq.s32.totalorder %s33, 1
      %p228 = por %p226, %p227
      %p230 = scmp.ne.s32.totalorder %s215, %s229
      %p231 = scmp.eq.s32.totalorder %s33, 0
      %p232 = por %p230, %p231
      %s233 = ssub.s32 %s27, %s34
      %p234 = scmp.eq.s32.totalorder %s233, 0
      %s236 = sadd.s32 %s235, 1
      %s237 = scalar_select %p234, %s235, %s236
      %p240 = pneg %p234
      %p241 = scmp.eq.s32.totalorder %s27, 1
      %p242 = por %p240, %p241
      %p243 = scmp.ne.s32.totalorder %s235, %s238
      %p244 = scmp.eq.s32.totalorder %s27, 0
      %p245 = por %p243, %p244
      %p246 = scmp.ne.s32.totalorder %s235, %s238
      %p247 = scmp.eq.s32.totalorder %s32, 1
      %p248 = por %p246, %p247
      %p249 = scmp.ne.s32.totalorder %s238, %s239
      %p250 = scmp.eq.s32.totalorder %s32, 0
      %p251 = por %p249, %p250
      %p252 = scmp.ne.s32.totalorder %s238, %s239
      %p253 = scmp.eq.s32.totalorder %s33, 1
      %p254 = por %p252, %p253
      %p256 = scmp.ne.s32.totalorder %s239, %s255
      %p257 = scmp.eq.s32.totalorder %s33, 0
      %p258 = por %p256, %p257
      %p259 = scmp.le.s32.totalorder 1, %s27
      %p260 = scmp.lt.s32.totalorder %s27, 3
      %p261 = pnand %p259, %p260
      %p262 = pneg %p261
      // Predicated region
      $region9: #{retinex_loss.1} parent=5 // pred_check
        _
      $region10: #{retinex_loss.1} parent=5 // pred_check_branch
        %264 = sbr.rel (%p261) target = $region12
      $region11: #{retinex_loss.1} parent=5 // pred_region
        %s265 = ssub.s32 %s27, 1
        // Predicated region
        $region13: #{retinex_loss.1} parent=11 // pred_check
          %p266 = pneg %p204
        $region14: #{retinex_loss.1} parent=11 // pred_check_branch
          %268 = sbr.rel (%p266) target = $region16
        $region15: #{retinex_loss.1} parent=11 // pred_region
          %270 = vsyncadd [#allocation12], 0
          %s271 = sshll.u32 %s6, 4
          %s272 = int_to_ptr.hbm [resolvable:$true] %s271
          %s273 = sshll.u32 [#allocation13], 4
          %s274 = int_to_ptr.vmem [resolvable:$true] %s273
          %279 = dma.hbm_to_vmem [thread:$0]  %s272, 512, %s274, [#allocation12], 128, 128, 8
        $region16: #{retinex_loss.1} parent=11 // pred_fallthru
          _
        // Predicated region
        $region17: #{retinex_loss.1} parent=11 // pred_check
          %p280 = pneg %p225
        $region18: #{retinex_loss.1} parent=11 // pred_check_branch
          %282 = sbr.rel (%p280) target = $region20
        $region19: #{retinex_loss.1} parent=11 // pred_region
          %284 = vsyncadd [#allocation15], 0
          %s285 = sshll.u32 %s7, 4
          %s286 = int_to_ptr.hbm [resolvable:$true] %s285
          %s287 = sshll.u32 [#allocation14], 4
          %s288 = int_to_ptr.vmem [resolvable:$true] %s287
          %293 = dma.hbm_to_vmem [thread:$0]  %s286, 1536, %s288, [#allocation15], 128, 128, 8
        $region20: #{retinex_loss.1} parent=11 // pred_fallthru
          _
      $region12: #{retinex_loss.1} parent=5 // pred_fallthru
        _
      %p294 = scmp.lt.s32.totalorder %s27, 2
      // Predicated region
      $region21: #{retinex_loss.1} parent=5 // pred_check
        %p295 = pneg %p294
      $region22: #{retinex_loss.1} parent=5 // pred_check_branch
        %297 = sbr.rel (%p295) target = $region24
      $region23: #{retinex_loss.1} parent=5 // pred_region
        // Predicated region
        $region25: #{retinex_loss.1} parent=23 // pred_check
          %p298 = pneg %p47
        $region26: #{retinex_loss.1} parent=23 // pred_check_branch
          %300 = sbr.rel (%p298) target = $region28
        $region27: #{retinex_loss.1} parent=23 // pred_region
          %s301 = sand.u32 %s37, 1
          %s302 = scalar_lea.sflag [#allocation4], %s301
          %s303 = sand.u32 %s37, 1
          %s304 = smul.addr %s303, 64
          %s305 = scalar_lea.vmem [#allocation3], %s304
          %307 = vsyncadd %s302, 0
          %s308 = smul.addr %s27, 8
          %s309 = smul.addr %s308, 8
          %s310 = scalar_lea.hbm %s0, %s309
          %s311 = sshll.u32 %s310, 4
          %s312 = int_to_ptr.hbm [resolvable:$true] %s311
          %s313 = sshll.u32 %s305, 4
          %s314 = int_to_ptr.vmem [resolvable:$true] %s313
          %319 = dma.hbm_to_vmem [thread:$0]  %s312, 1024, %s314, %s302, 128, 128, 8
        $region28: #{retinex_loss.1} parent=23 // pred_fallthru
          _
        // Predicated region
        $region29: #{retinex_loss.1} parent=23 // pred_check
          %p320 = pneg %p73
        $region30: #{retinex_loss.1} parent=23 // pred_check_branch
          %322 = sbr.rel (%p320) target = $region32
        $region31: #{retinex_loss.1} parent=23 // pred_region
          %s323 = sand.u32 %s27, 1
          %s324 = scalar_lea.sflag [#allocation6], %s323
          %s325 = sand.u32 %s63, 1
          %s326 = smul.addr %s325, 64
          %s327 = scalar_lea.vmem [#allocation5], %s326
          %329 = vsyncadd %s324, 0
          %s330 = smul.addr %s27, 8
          %s331 = smul.addr %s330, 8
          %s332 = scalar_lea.hbm %s1, %s331
          %s333 = sshll.u32 %s332, 4
          %s334 = int_to_ptr.hbm [resolvable:$true] %s333
          %s335 = sshll.u32 %s327, 4
          %s336 = int_to_ptr.vmem [resolvable:$true] %s335
          %341 = dma.hbm_to_vmem [thread:$0]  %s334, 1024, %s336, %s324, 128, 128, 8
        $region32: #{retinex_loss.1} parent=23 // pred_fallthru
          _
        // Predicated region
        $region33: #{retinex_loss.1} parent=23 // pred_check
          %p342 = pneg %p99
        $region34: #{retinex_loss.1} parent=23 // pred_check_branch
          %344 = sbr.rel (%p342) target = $region36
        $region35: #{retinex_loss.1} parent=23 // pred_region
          %s345 = sand.u32 %s27, 1
          %s346 = scalar_lea.sflag [#allocation6], %s345
          %s347 = sand.u32 %s89, 1
          %s348 = smul.addr %s347, 48
          %s349 = scalar_lea.vmem [#allocation7], %s348
          %351 = vsyncadd %s346, 0
          %s352 = smul.addr %s27, 6
          %s353 = smul.addr %s352, 8
          %s354 = scalar_lea.hbm %s2, %s353
          %s355 = sshll.u32 %s354, 4
          %s356 = int_to_ptr.hbm [resolvable:$true] %s355
          %s357 = sshll.u32 %s349, 4
          %s358 = int_to_ptr.vmem [resolvable:$true] %s357
          %363 = dma.hbm_to_vmem [thread:$0]  %s356, 768, %s358, %s346, 128, 128, 8
        $region36: #{retinex_loss.1} parent=23 // pred_fallthru
          _
        // Predicated region
        $region37: #{retinex_loss.1} parent=23 // pred_check
          %p364 = pneg %p125
        $region38: #{retinex_loss.1} parent=23 // pred_check_branch
          %366 = sbr.rel (%p364) target = $region40
        $region39: #{retinex_loss.1} parent=23 // pred_region
          %s367 = sand.u32 %s27, 1
          %s368 = scalar_lea.sflag [#allocation9], %s367
          %s369 = sand.u32 %s115, 1
          %s370 = smul.addr %s369, 64
          %s371 = scalar_lea.vmem [#allocation8], %s370
          %373 = vsyncadd %s368, 0
          %s374 = smul.addr %s27, 8
          %s375 = smul.addr %s374, 8
          %s376 = scalar_lea.hbm %s3, %s375
          %s377 = sshll.u32 %s376, 4
          %s378 = int_to_ptr.hbm [resolvable:$true] %s377
          %s379 = sshll.u32 %s371, 4
          %s380 = int_to_ptr.vmem [resolvable:$true] %s379
          %385 = dma.hbm_to_vmem [thread:$0]  %s378, 1024, %s380, %s368, 128, 128, 8
        $region40: #{retinex_loss.1} parent=23 // pred_fallthru
          _
        // Predicated region
        $region41: #{retinex_loss.1} parent=23 // pred_check
          %p386 = pneg %p151
        $region42: #{retinex_loss.1} parent=23 // pred_check_branch
          %388 = sbr.rel (%p386) target = $region44
        $region43: #{retinex_loss.1} parent=23 // pred_region
          %s389 = sand.u32 %s27, 1
          %s390 = scalar_lea.sflag [#allocation9], %s389
          %s391 = sand.u32 %s141, 1
          %s392 = smul.addr %s391, 64
          %s393 = scalar_lea.vmem [#allocation10], %s392
          %395 = vsyncadd %s390, 0
          %s396 = smul.addr %s27, 8
          %s397 = smul.addr %s396, 8
          %s398 = scalar_lea.hbm %s4, %s397
          %s399 = sshll.u32 %s398, 4
          %s400 = int_to_ptr.hbm [resolvable:$true] %s399
          %s401 = sshll.u32 %s393, 4
          %s402 = int_to_ptr.vmem [resolvable:$true] %s401
          %407 = dma.hbm_to_vmem [thread:$0]  %s400, 1024, %s402, %s390, 128, 128, 8
        $region44: #{retinex_loss.1} parent=23 // pred_fallthru
          _
        // Predicated region
        $region45: #{retinex_loss.1} parent=23 // pred_check
          %p408 = pneg %p177
        $region46: #{retinex_loss.1} parent=23 // pred_check_branch
          %410 = sbr.rel (%p408) target = $region48
        $region47: #{retinex_loss.1} parent=23 // pred_region
          %s411 = sand.u32 %s27, 1
          %s412 = scalar_lea.sflag [#allocation12], %s411
          %s413 = sand.u32 %s167, 1
          %s414 = smul.addr %s413, 48
          %s415 = scalar_lea.vmem [#allocation11], %s414
          %417 = vsyncadd %s412, 0
          %s418 = smul.addr %s27, 6
          %s419 = smul.addr %s418, 8
          %s420 = scalar_lea.hbm %s5, %s419
          %s421 = sshll.u32 %s420, 4
          %s422 = int_to_ptr.hbm [resolvable:$true] %s421
          %s423 = sshll.u32 %s415, 4
          %s424 = int_to_ptr.vmem [resolvable:$true] %s423
          %429 = dma.hbm_to_vmem [thread:$0]  %s422, 768, %s424, %s412, 128, 128, 8
        $region48: #{retinex_loss.1} parent=23 // pred_fallthru
          _
      $region24: #{retinex_loss.1} parent=5 // pred_fallthru
        _
      %p430 = scmp.le.s32.totalorder 1, %s27
      %p431 = scmp.lt.s32.totalorder %s27, 3
      %p432 = pnand %p430, %p431
      %p433 = pneg %p432
      // Predicated region
      $region49: #{retinex_loss.1} parent=5 // pred_check
        _
      $region50: #{retinex_loss.1} parent=5 // pred_check_branch
        %435 = sbr.rel (%p432) target = $region52
      $region51: #{retinex_loss.1} parent=5 // pred_region
        %s436 = ssub.s32 %s27, 1
        %s437 = sand.u32 %s40, 1
        %s438 = scalar_lea.sflag [#allocation4], %s437
        %s439 = sand.u32 %s40, 1
        %s440 = smul.addr %s439, 64
        %s441 = scalar_lea.vmem [#allocation3], %s440
        // Predicated region
        $region53: #{retinex_loss.1} parent=51 // pred_check
          %p442 = pneg %p53
        $region54: #{retinex_loss.1} parent=51 // pred_check_branch
          %444 = sbr.rel (%p442) target = $region56
        $region55: #{retinex_loss.1} parent=51 // pred_region
          %446 = dma.done %s438, 1024
        $region56: #{retinex_loss.1} parent=51 // pred_fallthru
          _
        %s447 = sand.u32 %s32, 1
        %s448 = scalar_lea.sflag [#allocation6], %s447
        %s449 = sand.u32 %s66, 1
        %s450 = smul.addr %s449, 64
        %s451 = scalar_lea.vmem [#allocation5], %s450
        // Predicated region
        $region57: #{retinex_loss.1} parent=51 // pred_check
          %p452 = pneg %p79
        $region58: #{retinex_loss.1} parent=51 // pred_check_branch
          %454 = sbr.rel (%p452) target = $region60
        $region59: #{retinex_loss.1} parent=51 // pred_region
          %456 = dma.done %s448, 1024
        $region60: #{retinex_loss.1} parent=51 // pred_fallthru
          _
        %s457 = sand.u32 %s32, 1
        %s458 = scalar_lea.sflag [#allocation6], %s457
        %s459 = sand.u32 %s92, 1
        %s460 = smul.addr %s459, 48
        %s461 = scalar_lea.vmem [#allocation7], %s460
        // Predicated region
        $region61: #{retinex_loss.1} parent=51 // pred_check
          %p462 = pneg %p105
        $region62: #{retinex_loss.1} parent=51 // pred_check_branch
          %464 = sbr.rel (%p462) target = $region64
        $region63: #{retinex_loss.1} parent=51 // pred_region
          %466 = dma.done %s458, 768
        $region64: #{retinex_loss.1} parent=51 // pred_fallthru
          _
        %s467 = sand.u32 %s32, 1
        %s468 = scalar_lea.sflag [#allocation9], %s467
        %s469 = sand.u32 %s118, 1
        %s470 = smul.addr %s469, 64
        %s471 = scalar_lea.vmem [#allocation8], %s470
        // Predicated region
        $region65: #{retinex_loss.1} parent=51 // pred_check
          %p472 = pneg %p131
        $region66: #{retinex_loss.1} parent=51 // pred_check_branch
          %474 = sbr.rel (%p472) target = $region68
        $region67: #{retinex_loss.1} parent=51 // pred_region
          %476 = dma.done %s468, 1024
        $region68: #{retinex_loss.1} parent=51 // pred_fallthru
          _
        %s477 = sand.u32 %s32, 1
        %s478 = scalar_lea.sflag [#allocation9], %s477
        %s479 = sand.u32 %s144, 1
        %s480 = smul.addr %s479, 64
        %s481 = scalar_lea.vmem [#allocation10], %s480
        // Predicated region
        $region69: #{retinex_loss.1} parent=51 // pred_check
          %p482 = pneg %p157
        $region70: #{retinex_loss.1} parent=51 // pred_check_branch
          %484 = sbr.rel (%p482) target = $region72
        $region71: #{retinex_loss.1} parent=51 // pred_region
          %486 = dma.done %s478, 1024
        $region72: #{retinex_loss.1} parent=51 // pred_fallthru
          _
        %s487 = sand.u32 %s32, 1
        %s488 = scalar_lea.sflag [#allocation12], %s487
        %s489 = sand.u32 %s170, 1
        %s490 = smul.addr %s489, 48
        %s491 = scalar_lea.vmem [#allocation11], %s490
        // Predicated region
        $region73: #{retinex_loss.1} parent=51 // pred_check
          %p492 = pneg %p183
        $region74: #{retinex_loss.1} parent=51 // pred_check_branch
          %494 = sbr.rel (%p492) target = $region76
        $region75: #{retinex_loss.1} parent=51 // pred_region
          %496 = dma.done %s488, 768
        $region76: #{retinex_loss.1} parent=51 // pred_fallthru
          _
        // Predicated region
        $region77: #{retinex_loss.1} parent=51 // pred_check
          %p497 = pneg %p204
        $region78: #{retinex_loss.1} parent=51 // pred_check_branch
          %499 = sbr.rel (%p497) target = $region80
        $region79: #{retinex_loss.1} parent=51 // pred_region
          %501 = dma.done [#allocation12], 512
        $region80: #{retinex_loss.1} parent=51 // pred_fallthru
          _
        // Predicated region
        $region81: #{retinex_loss.1} parent=51 // pred_check
          %p502 = pneg %p225
        $region82: #{retinex_loss.1} parent=51 // pred_check_branch
          %504 = sbr.rel (%p502) target = $region84
        $region83: #{retinex_loss.1} parent=51 // pred_region
          %506 = dma.done [#allocation15], 1536
        $region84: #{retinex_loss.1} parent=51 // pred_fallthru
          _
        %s507 = sand.u32 %s40, 1
        %s508 = scalar_lea.sflag [#allocation4], %s507
        %s509 = sand.u32 %s40, 1
        %s510 = smul.addr %s509, 64
        %s511 = scalar_lea.vmem [#allocation3], %s510
        %p512 = pneg %p53
        %p513 = pneg %p50
        %s514 = sand.u32 %s32, 1
        %s515 = scalar_lea.sflag [#allocation6], %s514
        %s516 = sand.u32 %s66, 1
        %s517 = smul.addr %s516, 64
        %s518 = scalar_lea.vmem [#allocation5], %s517
        %p519 = pneg %p79
        %p520 = pneg %p76
        %s521 = sand.u32 %s32, 1
        %s522 = scalar_lea.sflag [#allocation6], %s521
        %s523 = sand.u32 %s92, 1
        %s524 = smul.addr %s523, 48
        %s525 = scalar_lea.vmem [#allocation7], %s524
        %p526 = pneg %p105
        %p527 = pneg %p102
        %s528 = sand.u32 %s32, 1
        %s529 = scalar_lea.sflag [#allocation9], %s528
        %s530 = sand.u32 %s118, 1
        %s531 = smul.addr %s530, 64
        %s532 = scalar_lea.vmem [#allocation8], %s531
        %p533 = pneg %p131
        %p534 = pneg %p128
        %s535 = sand.u32 %s32, 1
        %s536 = scalar_lea.sflag [#allocation9], %s535
        %s537 = sand.u32 %s144, 1
        %s538 = smul.addr %s537, 64
        %s539 = scalar_lea.vmem [#allocation10], %s538
        %p540 = pneg %p157
        %p541 = pneg %p154
        %s542 = sand.u32 %s32, 1
        %s543 = scalar_lea.sflag [#allocation12], %s542
        %s544 = sand.u32 %s170, 1
        %s545 = smul.addr %s544, 48
        %s546 = scalar_lea.vmem [#allocation11], %s545
        %p547 = pneg %p183
        %p548 = pneg %p180
        %p549 = pneg %p204
        %p550 = pneg %p201
        %p551 = pneg %p225
        %p552 = pneg %p222
        %p553 = pneg %p251
        %p554 = pneg %p248
        %p555 = scmp.lt.s32.totalorder %s32, 1
        %s556 = scalar_select %p555, %s32, 1
        %s557 = scalar_lea.vmem %s8, %s556
        %p558 = scmp.lt.s32.totalorder %s32, 1
        %s559 = scalar_select %p558, %s32, 1
        %s560 = scalar_lea.vmem %s8, %s559
        %v561 = vld [vmem:[%s441] sm:$0xff]
        %v562 = vld [vmem:[%s441 + $0x8] sm:$0xff]
        %v563 = vld [vmem:[%s441 + $0x10] sm:$0xff]
        %v564 = vld [vmem:[%s441 + $0x18] sm:$0xff]
        %v565 = vld [vmem:[%s441 + $0x20] sm:$0xff]
        %v566 = vld [vmem:[%s441 + $0x28] sm:$0xff]
        %v567 = vld [vmem:[%s441 + $0x30] sm:$0xff]
        %v568 = vld [vmem:[%s441 + $0x38] sm:$0xff]
        %v569 = vld [vmem:[%s451] sm:$0xff]
        %v570 = vld [vmem:[%s451 + $0x8] sm:$0xff]
        %v571 = vld [vmem:[%s451 + $0x10] sm:$0xff]
        %v572 = vld [vmem:[%s451 + $0x18] sm:$0xff]
        %v573 = vld [vmem:[%s451 + $0x20] sm:$0xff]
        %v574 = vld [vmem:[%s451 + $0x28] sm:$0xff]
        %v575 = vld [vmem:[%s451 + $0x30] sm:$0xff]
        %v576 = vld [vmem:[%s451 + $0x38] sm:$0xff]
        %v577 = vld [vmem:[%s461] sm:$0xff]
        %v578 = vld [vmem:[%s461 + $0x8] sm:$0xff]
        %v579 = vld [vmem:[%s461 + $0x10] sm:$0xff]
        %v580 = vld [vmem:[%s461 + $0x18] sm:$0xff]
        %v581 = vld [vmem:[%s461 + $0x20] sm:$0xff]
        %v582 = vld [vmem:[%s461 + $0x28] sm:$0xff]
        %v583 = vld [vmem:[%s471] sm:$0xff]
        %v584 = vld [vmem:[%s471 + $0x8] sm:$0xff]
        %v585 = vld [vmem:[%s471 + $0x10] sm:$0xff]
        %v586 = vld [vmem:[%s471 + $0x18] sm:$0xff]
        %v587 = vld [vmem:[%s471 + $0x20] sm:$0xff]
        %v588 = vld [vmem:[%s471 + $0x28] sm:$0xff]
        %v589 = vld [vmem:[%s471 + $0x30] sm:$0xff]
        %v590 = vld [vmem:[%s471 + $0x38] sm:$0xff]
        %v591 = vld [vmem:[%s481] sm:$0xff]
        %v592 = vld [vmem:[%s481 + $0x8] sm:$0xff]
        %v593 = vld [vmem:[%s481 + $0x10] sm:$0xff]
        %v594 = vld [vmem:[%s481 + $0x18] sm:$0xff]
        %v595 = vld [vmem:[%s481 + $0x20] sm:$0xff]
        %v596 = vld [vmem:[%s481 + $0x28] sm:$0xff]
        %v597 = vld [vmem:[%s481 + $0x30] sm:$0xff]
        %v598 = vld [vmem:[%s481 + $0x38] sm:$0xff]
        %v599 = vld [vmem:[%s491] sm:$0xff]
        %v600 = vld [vmem:[%s491 + $0x8] sm:$0xff]
        %v601 = vld [vmem:[%s491 + $0x10] sm:$0xff]
        %v602 = vld [vmem:[%s491 + $0x18] sm:$0xff]
        %v603 = vld [vmem:[%s491 + $0x20] sm:$0xff]
        %v604 = vld [vmem:[%s491 + $0x28] sm:$0xff]
        %v605 = vld [vmem:[#allocation13] sm:$0xff]
        %v606 = vld [vmem:[#allocation13 + $0x8] sm:$0xff]
        %v607 = vld [vmem:[#allocation13 + $0x10] sm:$0xff]
        %v608 = vld [vmem:[#allocation13 + $0x18] sm:$0xff]
        %v609 = vld [vmem:[#allocation14] sm:$0xff]
        %v610 = vld [vmem:[#allocation14 + $0x8] sm:$0xff]
        %v611 = vld [vmem:[#allocation14 + $0x10] sm:$0xff]
        %v612 = vld [vmem:[#allocation14 + $0x18] sm:$0xff]
        %v613 = vld [vmem:[#allocation14 + $0x20] sm:$0xff]
        %v614 = vld [vmem:[#allocation14 + $0x28] sm:$0xff]
        %v615 = vld [vmem:[#allocation14 + $0x30] sm:$0xff]
        %v616 = vld [vmem:[#allocation14 + $0x38] sm:$0xff]
        %v617 = vld [vmem:[#allocation14 + $0x40] sm:$0xff]
        %v618 = vld [vmem:[#allocation14 + $0x48] sm:$0xff]
        %v619 = vld [vmem:[#allocation14 + $0x50] sm:$0xff]
        %v620 = vld [vmem:[#allocation14 + $0x58] sm:$0xff]
        %v621 = vmul.f32 %v561, %v571
        %v622 = vmul.f32 %v562, %v572
        %v623 = vmul.f32 %v563, %v569
        %v624 = vmul.f32 %v564, %v570
        %v625 = vadd.f32 %v621, %v623
        %v626 = vadd.f32 %v622, %v624
        %v627 = vmul.f32 %v565, %v575
        %v628 = vmul.f32 %v566, %v576
        %v629 = vadd.f32 %v625, %v627
        %v630 = vadd.f32 %v626, %v628
        %v631 = vmul.f32 %v567, %v573
        %v632 = vmul.f32 %v568, %v574
        %v633 = vsub.f32 %v629, %v631
        %v634 = vsub.f32 %v630, %v632
        %v635 = vmul.f32 %v561, %v573
        %v636 = vmul.f32 %v562, %v574
        %v637 = vmul.f32 %v563, %v575
        %v638 = vmul.f32 %v564, %v576
        %v639 = vsub.f32 %v635, %v637
        %v640 = vsub.f32 %v636, %v638
        %v641 = vmul.f32 %v565, %v569
        %v642 = vmul.f32 %v566, %v570
        %v643 = vadd.f32 %v639, %v641
        %v644 = vadd.f32 %v640, %v642
        %v645 = vmul.f32 %v567, %v571
        %v646 = vmul.f32 %v568, %v572
        %v647 = vadd.f32 %v643, %v645
        %v648 = vadd.f32 %v644, %v646
        %v649 = vmul.f32 %v561, %v575
        %v650 = vmul.f32 %v562, %v576
        %v651 = vmul.f32 %v563, %v573
        %v652 = vmul.f32 %v564, %v574
        %v653 = vadd.f32 %v649, %v651
        %v654 = vadd.f32 %v650, %v652
        %v655 = vmul.f32 %v565, %v571
        %v656 = vmul.f32 %v566, %v572
        %v657 = vsub.f32 %v653, %v655
        %v658 = vsub.f32 %v654, %v656
        %v659 = vmul.f32 %v567, %v569
        %v660 = vmul.f32 %v568, %v570
        %v661 = vadd.f32 %v657, %v659
        %v662 = vadd.f32 %v658, %v660
        %v663 = vmul.f32 %v583, %v593
        %v664 = vmul.f32 %v584, %v594
        %v665 = vmul.f32 %v585, %v591
        %v666 = vmul.f32 %v586, %v592
        %v667 = vadd.f32 %v663, %v665
        %v668 = vadd.f32 %v664, %v666
        %v669 = vmul.f32 %v587, %v597
        %v670 = vmul.f32 %v588, %v598
        %v671 = vadd.f32 %v667, %v669
        %v672 = vadd.f32 %v668, %v670
        %v673 = vmul.f32 %v589, %v595
        %v674 = vmul.f32 %v590, %v596
        %v675 = vsub.f32 %v671, %v673
        %v676 = vsub.f32 %v672, %v674
        %v677 = vmul.f32 %v583, %v595
        %v678 = vmul.f32 %v584, %v596
        %v679 = vmul.f32 %v585, %v597
        %v680 = vmul.f32 %v586, %v598
        %v681 = vsub.f32 %v677, %v679
        %v682 = vsub.f32 %v678, %v680
        %v683 = vmul.f32 %v587, %v591
        %v684 = vmul.f32 %v588, %v592
        %v685 = vadd.f32 %v681, %v683
        %v686 = vadd.f32 %v682, %v684
        %v687 = vmul.f32 %v589, %v593
        %v688 = vmul.f32 %v590, %v594
        %v689 = vadd.f32 %v685, %v687
        %v690 = vadd.f32 %v686, %v688
        %v691 = vmul.f32 %v583, %v597
        %v692 = vmul.f32 %v584, %v598
        %v693 = vmul.f32 %v585, %v595
        %v694 = vmul.f32 %v586, %v596
        %v695 = vadd.f32 %v691, %v693
        %v696 = vadd.f32 %v692, %v694
        %v697 = vmul.f32 %v587, %v593
        %v698 = vmul.f32 %v588, %v594
        %v699 = vsub.f32 %v695, %v697
        %v700 = vsub.f32 %v696, %v698
        %v701 = vmul.f32 %v589, %v591
        %v702 = vmul.f32 %v590, %v592
        %v703 = vadd.f32 %v699, %v701
        %v704 = vadd.f32 %v700, %v702
        %v705 = vsub.f32 %v633, %v577
        %v706 = vsub.f32 %v634, %v578
        %v707 = vand.u32 2147483647, %v705
        %v708 = vand.u32 2147483647, %v706
        %vm709 = vcmask 130048
        %v710 = vsel %vm709, %v707, 0.0
        %v711 = vsel %vm709, %v708, 0.0
        %v712 = vadd.f32 %v710, %v711
        %713 = vadd.xlane.f32.xlu0 %v712
        %v714 = vpop.xlane.xlu0 %713
        %v715 = vrot.slane %v714, 4
        %v716 = vadd.f32 %v714, %v715
        %v717 = vrot.slane %v716, 2
        %v718 = vadd.f32 %v716, %v717
        %v719 = vrot.slane %v718, 1
        %v720 = vadd.f32 %v718, %v719
        %s721 = vtos %v720
        %v722 = vsub.f32 %v647, %v579
        %v723 = vsub.f32 %v648, %v580
        %v724 = vand.u32 2147483647, %v722
        %v725 = vand.u32 2147483647, %v723
        %v726 = vsel %vm709, %v724, 0.0
        %v727 = vsel %vm709, %v725, 0.0
        %v728 = vadd.f32 %v726, %v727
        %729 = vadd.xlane.f32.xlu0 %v728
        %v730 = vpop.xlane.xlu0 %729
        %v731 = vrot.slane %v730, 4
        %v732 = vadd.f32 %v730, %v731
        %v733 = vrot.slane %v732, 2
        %v734 = vadd.f32 %v732, %v733
        %v735 = vrot.slane %v734, 1
        %v736 = vadd.f32 %v734, %v735
        %s737 = vtos %v736
        %s738 = sadd.f32 %s721, %s737
        %v739 = vsub.f32 %v661, %v581
        %v740 = vsub.f32 %v662, %v582
        %v741 = vand.u32 2147483647, %v739
        %v742 = vand.u32 2147483647, %v740
        %v743 = vsel %vm709, %v741, 0.0
        %v744 = vsel %vm709, %v742, 0.0
        %v745 = vadd.f32 %v743, %v744
        %746 = vadd.xlane.f32.xlu0 %v745
        %v747 = vpop.xlane.xlu0 %746
        %v748 = vrot.slane %v747, 4
        %v749 = vadd.f32 %v747, %v748
        %v750 = vrot.slane %v749, 2
        %v751 = vadd.f32 %v749, %v750
        %v752 = vrot.slane %v751, 1
        %v753 = vadd.f32 %v751, %v752
        %s754 = vtos %v753
        %s755 = sadd.f32 %s738, %s754
        %s756 = smul.f32 %s755, 0.0013020834
        %v757 = vsub.f32 %v675, %v599
        %v758 = vsub.f32 %v676, %v600
        %v759 = vand.u32 2147483647, %v757
        %v760 = vand.u32 2147483647, %v758
        %v761 = vsel %vm709, %v759, 0.0
        %v762 = vsel %vm709, %v760, 0.0
        %v763 = vadd.f32 %v761, %v762
        %764 = vadd.xlane.f32.xlu0 %v763
        %v765 = vpop.xlane.xlu0 %764
        %v766 = vrot.slane %v765, 4
        %v767 = vadd.f32 %v765, %v766
        %v768 = vrot.slane %v767, 2
        %v769 = vadd.f32 %v767, %v768
        %v770 = vrot.slane %v769, 1
        %v771 = vadd.f32 %v769, %v770
        %s772 = vtos %v771
        %v773 = vsub.f32 %v689, %v601
        %v774 = vsub.f32 %v690, %v602
        %v775 = vand.u32 2147483647, %v773
        %v776 = vand.u32 2147483647, %v774
        %v777 = vsel %vm709, %v775, 0.0
        %v778 = vsel %vm709, %v776, 0.0
        %v779 = vadd.f32 %v777, %v778
        %780 = vadd.xlane.f32.xlu0 %v779
        %v781 = vpop.xlane.xlu0 %780
        %v782 = vrot.slane %v781, 4
        %v783 = vadd.f32 %v781, %v782
        %v784 = vrot.slane %v783, 2
        %v785 = vadd.f32 %v783, %v784
        %v786 = vrot.slane %v785, 1
        %v787 = vadd.f32 %v785, %v786
        %s788 = vtos %v787
        %s789 = sadd.f32 %s772, %s788
        %v790 = vsub.f32 %v703, %v603
        %v791 = vsub.f32 %v704, %v604
        %v792 = vand.u32 2147483647, %v790
        %v793 = vand.u32 2147483647, %v791
        %v794 = vsel %vm709, %v792, 0.0
        %v795 = vsel %vm709, %v793, 0.0
        %v796 = vadd.f32 %v794, %v795
        %797 = vadd.xlane.f32.xlu0 %v796
        %v798 = vpop.xlane.xlu0 %797
        %v799 = vrot.slane %v798, 4
        %v800 = vadd.f32 %v798, %v799
        %v801 = vrot.slane %v800, 2
        %v802 = vadd.f32 %v800, %v801
        %v803 = vrot.slane %v802, 1
        %v804 = vadd.f32 %v802, %v803
        %s805 = vtos %v804
        %s806 = sadd.f32 %s789, %s805
        %s807 = smul.f32 %s806, 0.0013020834
        %v808 = vmul.f32 %v583, %v571
        %v809 = vmul.f32 %v584, %v572
        %v810 = vmul.f32 %v585, %v569
        %v811 = vmul.f32 %v586, %v570
        %v812 = vadd.f32 %v808, %v810
        %v813 = vadd.f32 %v809, %v811
        %v814 = vmul.f32 %v587, %v575
        %v815 = vmul.f32 %v588, %v576
        %v816 = vadd.f32 %v812, %v814
        %v817 = vadd.f32 %v813, %v815
        %v818 = vmul.f32 %v589, %v573
        %v819 = vmul.f32 %v590, %v574
        %v820 = vsub.f32 %v816, %v818
        %v821 = vsub.f32 %v817, %v819
        %v822 = vsub.f32 %v820, %v577
        %v823 = vsub.f32 %v821, %v578
        %v824 = vand.u32 2147483647, %v822
        %v825 = vand.u32 2147483647, %v823
        %v826 = vsel %vm709, %v824, 0.0
        %v827 = vsel %vm709, %v825, 0.0
        %v828 = vadd.f32 %v826, %v827
        %829 = vadd.xlane.f32.xlu0 %v828
        %v830 = vpop.xlane.xlu0 %829
        %v831 = vrot.slane %v830, 4
        %v832 = vadd.f32 %v830, %v831
        %v833 = vrot.slane %v832, 2
        %v834 = vadd.f32 %v832, %v833
        %v835 = vrot.slane %v834, 1
        %v836 = vadd.f32 %v834, %v835
        %s837 = vtos %v836
        %v838 = vmul.f32 %v583, %v573
        %v839 = vmul.f32 %v584, %v574
        %v840 = vmul.f32 %v585, %v575
        %v841 = vmul.f32 %v586, %v576
        %v842 = vsub.f32 %v838, %v840
        %v843 = vsub.f32 %v839, %v841
        %v844 = vmul.f32 %v587, %v569
        %v845 = vmul.f32 %v588, %v570
        %v846 = vadd.f32 %v842, %v844
        %v847 = vadd.f32 %v843, %v845
        %v848 = vmul.f32 %v589, %v571
        %v849 = vmul.f32 %v590, %v572
        %v850 = vadd.f32 %v846, %v848
        %v851 = vadd.f32 %v847, %v849
        %v852 = vsub.f32 %v850, %v579
        %v853 = vsub.f32 %v851, %v580
        %v854 = vand.u32 2147483647, %v852
        %v855 = vand.u32 2147483647, %v853
        %v856 = vsel %vm709, %v854, 0.0
        %v857 = vsel %vm709, %v855, 0.0
        %v858 = vadd.f32 %v856, %v857
        %859 = vadd.xlane.f32.xlu0 %v858
        %v860 = vpop.xlane.xlu0 %859
        %v861 = vrot.slane %v860, 4
        %v862 = vadd.f32 %v860, %v861
        %v863 = vrot.slane %v862, 2
        %v864 = vadd.f32 %v862, %v863
        %v865 = vrot.slane %v864, 1
        %v866 = vadd.f32 %v864, %v865
        %s867 = vtos %v866
        %s868 = sadd.f32 %s837, %s867
        %v869 = vmul.f32 %v583, %v575
        %v870 = vmul.f32 %v584, %v576
        %v871 = vmul.f32 %v585, %v573
        %v872 = vmul.f32 %v586, %v574
        %v873 = vadd.f32 %v869, %v871
        %v874 = vadd.f32 %v870, %v872
        %v875 = vmul.f32 %v587, %v571
        %v876 = vmul.f32 %v588, %v572
        %v877 = vsub.f32 %v873, %v875
        %v878 = vsub.f32 %v874, %v876
        %v879 = vmul.f32 %v589, %v569
        %v880 = vmul.f32 %v590, %v570
        %v881 = vadd.f32 %v877, %v879
        %v882 = vadd.f32 %v878, %v880
        %v883 = vsub.f32 %v881, %v581
        %v884 = vsub.f32 %v882, %v582
        %v885 = vand.u32 2147483647, %v883
        %v886 = vand.u32 2147483647, %v884
        %v887 = vsel %vm709, %v885, 0.0
        %v888 = vsel %vm709, %v886, 0.0
        %v889 = vadd.f32 %v887, %v888
        %890 = vadd.xlane.f32.xlu0 %v889
        %v891 = vpop.xlane.xlu0 %890
        %v892 = vrot.slane %v891, 4
        %v893 = vadd.f32 %v891, %v892
        %v894 = vrot.slane %v893, 2
        %v895 = vadd.f32 %v893, %v894
        %v896 = vrot.slane %v895, 1
        %v897 = vadd.f32 %v895, %v896
        %s898 = vtos %v897
        %s899 = sadd.f32 %s868, %s898
        %s900 = smul.f32 %s899, 0.0013020834
        %v901 = vmul.f32 %v561, %v593
        %v902 = vmul.f32 %v562, %v594
        %v903 = vmul.f32 %v563, %v591
        %v904 = vmul.f32 %v564, %v592
        %v905 = vadd.f32 %v901, %v903
        %v906 = vadd.f32 %v902, %v904
        %v907 = vmul.f32 %v565, %v597
        %v908 = vmul.f32 %v566, %v598
        %v909 = vadd.f32 %v905, %v907
        %v910 = vadd.f32 %v906, %v908
        %v911 = vmul.f32 %v567, %v595
        %v912 = vmul.f32 %v568, %v596
        %v913 = vsub.f32 %v909, %v911
        %v914 = vsub.f32 %v910, %v912
        %v915 = vsub.f32 %v913, %v599
        %v916 = vsub.f32 %v914, %v600
        %v917 = vand.u32 2147483647, %v915
        %v918 = vand.u32 2147483647, %v916
        %v919 = vsel %vm709, %v917, 0.0
        %v920 = vsel %vm709, %v918, 0.0
        %v921 = vadd.f32 %v919, %v920
        %922 = vadd.xlane.f32.xlu0 %v921
        %v923 = vpop.xlane.xlu0 %922
        %v924 = vrot.slane %v923, 4
        %v925 = vadd.f32 %v923, %v924
        %v926 = vrot.slane %v925, 2
        %v927 = vadd.f32 %v925, %v926
        %v928 = vrot.slane %v927, 1
        %v929 = vadd.f32 %v927, %v928
        %s930 = vtos %v929
        %v931 = vmul.f32 %v561, %v595
        %v932 = vmul.f32 %v562, %v596
        %v933 = vmul.f32 %v563, %v597
        %v934 = vmul.f32 %v564, %v598
        %v935 = vsub.f32 %v931, %v933
        %v936 = vsub.f32 %v932, %v934
        %v937 = vmul.f32 %v565, %v591
        %v938 = vmul.f32 %v566, %v592
        %v939 = vadd.f32 %v935, %v937
        %v940 = vadd.f32 %v936, %v938
        %v941 = vmul.f32 %v567, %v593
        %v942 = vmul.f32 %v568, %v594
        %v943 = vadd.f32 %v939, %v941
        %v944 = vadd.f32 %v940, %v942
        %v945 = vsub.f32 %v943, %v601
        %v946 = vsub.f32 %v944, %v602
        %v947 = vand.u32 2147483647, %v945
        %v948 = vand.u32 2147483647, %v946
        %v949 = vsel %vm709, %v947, 0.0
        %v950 = vsel %vm709, %v948, 0.0
        %v951 = vadd.f32 %v949, %v950
        %952 = vadd.xlane.f32.xlu0 %v951
        %v953 = vpop.xlane.xlu0 %952
        %v954 = vrot.slane %v953, 4
        %v955 = vadd.f32 %v953, %v954
        %v956 = vrot.slane %v955, 2
        %v957 = vadd.f32 %v955, %v956
        %v958 = vrot.slane %v957, 1
        %v959 = vadd.f32 %v957, %v958
        %s960 = vtos %v959
        %s961 = sadd.f32 %s930, %s960
        %v962 = vmul.f32 %v561, %v597
        %v963 = vmul.f32 %v562, %v598
        %v964 = vmul.f32 %v563, %v595
        %v965 = vmul.f32 %v564, %v596
        %v966 = vadd.f32 %v962, %v964
        %v967 = vadd.f32 %v963, %v965
        %v968 = vmul.f32 %v565, %v593
        %v969 = vmul.f32 %v566, %v594
        %v970 = vsub.f32 %v966, %v968
        %v971 = vsub.f32 %v967, %v969
        %v972 = vmul.f32 %v567, %v591
        %v973 = vmul.f32 %v568, %v592
        %v974 = vadd.f32 %v970, %v972
        %v975 = vadd.f32 %v971, %v973
        %v976 = vsub.f32 %v974, %v603
        %v977 = vsub.f32 %v975, %v604
        %v978 = vand.u32 2147483647, %v976
        %v979 = vand.u32 2147483647, %v977
        %v980 = vsel %vm709, %v978, 0.0
        %v981 = vsel %vm709, %v979, 0.0
        %v982 = vadd.f32 %v980, %v981
        %983 = vadd.xlane.f32.xlu0 %v982
        %v984 = vpop.xlane.xlu0 %983
        %v985 = vrot.slane %v984, 4
        %v986 = vadd.f32 %v984, %v985
        %v987 = vrot.slane %v986, 2
        %v988 = vadd.f32 %v986, %v987
        %v989 = vrot.slane %v988, 1
        %v990 = vadd.f32 %v988, %v989
        %s991 = vtos %v990
        %s992 = sadd.f32 %s961, %s991
        %s993 = smul.f32 %s992, 0.0013020834
        %v994 = vsub.f32 %v563, %v585
        %v995 = vsub.f32 %v564, %v586
        %v996 = vsub.f32 %v565, %v587
        %v997 = vsub.f32 %v566, %v588
        %v998 = vsub.f32 %v567, %v589
        %v999 = vsub.f32 %v568, %v590
        %v1000 = vand.u32 2147483647, %v994
        %v1001 = vand.u32 2147483647, %v995
        %v1002 = vand.u32 2147483647, %v996
        %v1003 = vand.u32 2147483647, %v997
        %v1004 = vand.u32 2147483647, %v998
        %v1005 = vand.u32 2147483647, %v999
        %v1006 = vsel %vm709, %v1000, 0.0
        %v1007 = vsel %vm709, %v1001, 0.0
        %v1008 = vadd.f32 %v1006, %v1007
        %v1009 = vsel %vm709, %v1002, 0.0
        %v1010 = vadd.f32 %v1008, %v1009
        %v1011 = vsel %vm709, %v1003, 0.0
        %v1012 = vadd.f32 %v1010, %v1011
        %v1013 = vsel %vm709, %v1004, 0.0
        %v1014 = vadd.f32 %v1012, %v1013
        %v1015 = vsel %vm709, %v1005, 0.0
        %v1016 = vadd.f32 %v1014, %v1015
        %1017 = vadd.xlane.f32.xlu0 %v1016
        %v1018 = vpop.xlane.xlu0 %1017
        %v1019 = vrot.slane %v1018, 4
        %v1020 = vadd.f32 %v1018, %v1019
        %v1021 = vrot.slane %v1020, 2
        %v1022 = vadd.f32 %v1020, %v1021
        %v1023 = vrot.slane %v1022, 1
        %v1024 = vadd.f32 %v1022, %v1023
        %s1025 = vtos %v1024
        %s1026 = smul.f32 %s1025, 0.0013020834
        %v1027 = vmul.f32 %v571, 0.299
        %v1028 = vmul.f32 %v572, 0.299
        %v1029 = vmul.f32 %v573, 0.587
        %v1030 = vmul.f32 %v574, 0.587
        %v1031 = vadd.f32 %v1027, %v1029
        %v1032 = vadd.f32 %v1028, %v1030
        %v1033 = vmul.f32 %v575, 0.114
        %v1034 = vmul.f32 %v576, 0.114
        %v1035 = vadd.f32 %v1031, %v1033
        %v1036 = vadd.f32 %v1032, %v1034
        %1037 = vst [vmem:[#allocation2] sm:$0xff] 0.0
        %1038 = vst [vmem:[#allocation2 + $0x8] sm:$0xff] 0.0
        %1039 = vst [vmem:[#allocation2 + $0x10] sm:$0xff] 0.0
        %1040 = vst.msk [vmem:[#allocation2] sm:$0xff] %vm709, %v1035
        %1041 = vst.msk [vmem:[#allocation2 + $0x8] sm:$0xff] %vm709, %v1036
        %v1042 = vld [vmem:[#allocation2] sm:$0xff]
        %v1043 = vld [vmem:[#allocation2 + $0x8] sm:$0xff]
        %v1044 = vld [vmem:[#allocation2 + $0x10] sm:$0xff]
        %1045 = vrot.lane.b32.xlu0 %v1042, 1
        %v1046 = vpop.permute.xlu0 %1045
        %1047 = vrot.lane.b32.xlu0 %v1043, 1
        %v1048 = vpop.permute.xlu0 %1047
        %1049 = vrot.lane.b32.xlu0 %v1044, 1
        %v1050 = vpop.permute.xlu0 %1049
        %v1051 = vsub.f32 %v1042, %v1046
        %v1052 = vsub.f32 %v1043, %v1048
        %v1053 = vsub.f32 %v1044, %v1050
        %v1054 = vand.u32 2147483647, %v1051
        %v1055 = vand.u32 2147483647, %v1052
        %v1056 = vand.u32 2147483647, %v1053
        %v1057 = vrot.slane %v1042, 7
        %v1058 = vrot.slane %v1043, 7
        %v1059 = vrot.slane %v1044, 7
        %v1060 = vlaneseq
        %v1061 = vshrl.u32 %v1060, 7
        %vm1062 = vcmp.lt.s32.totalorder %v1061, 1
        %v1063 = vsel %vm1062, %v1058, %v1059
        %v1064 = vsel %vm1062, %v1057, %v1058
        %v1065 = vsel %vm1062, %v1059, %v1057
        %v1066 = vsub.f32 %v1042, %v1065
        %v1067 = vsub.f32 %v1043, %v1064
        %v1068 = vsub.f32 %v1044, %v1063
        %v1069 = vand.u32 2147483647, %v1066
        %v1070 = vand.u32 2147483647, %v1067
        %v1071 = vand.u32 2147483647, %v1068
        %v1072 = vmul.f32 %v563, 0.299
        %v1073 = vmul.f32 %v564, 0.299
        %v1074 = vmul.f32 %v565, 0.587
        %v1075 = vmul.f32 %v566, 0.587
        %v1076 = vadd.f32 %v1072, %v1074
        %v1077 = vadd.f32 %v1073, %v1075
        %v1078 = vmul.f32 %v567, 0.114
        %v1079 = vmul.f32 %v568, 0.114
        %v1080 = vadd.f32 %v1076, %v1078
        %v1081 = vadd.f32 %v1077, %v1079
        %1082 = vst [vmem:[#allocation2] sm:$0xff] 0.0
        %1083 = vst [vmem:[#allocation2 + $0x8] sm:$0xff] 0.0
        %1084 = vst [vmem:[#allocation2 + $0x10] sm:$0xff] 0.0
        %1085 = vst.msk [vmem:[#allocation2] sm:$0xff] %vm709, %v1080
        %1086 = vst.msk [vmem:[#allocation2 + $0x8] sm:$0xff] %vm709, %v1081
        %v1087 = vld [vmem:[#allocation2] sm:$0xff]
        %v1088 = vld [vmem:[#allocation2 + $0x8] sm:$0xff]
        %v1089 = vld [vmem:[#allocation2 + $0x10] sm:$0xff]
        %1090 = vrot.lane.b32.xlu0 %v1087, 1
        %v1091 = vpop.permute.xlu0 %1090
        %1092 = vrot.lane.b32.xlu0 %v1088, 1
        %v1093 = vpop.permute.xlu0 %1092
        %1094 = vrot.lane.b32.xlu0 %v1089, 1
        %v1095 = vpop.permute.xlu0 %1094
        %v1096 = vsub.f32 %v1087, %v1091
        %v1097 = vsub.f32 %v1088, %v1093
        %v1098 = vsub.f32 %v1089, %v1095
        %v1099 = vand.u32 2147483647, %v1096
        %v1100 = vand.u32 2147483647, %v1097
        %v1101 = vand.u32 2147483647, %v1098
        %v1102 = vrot.slane %v1087, 7
        %v1103 = vrot.slane %v1088, 7
        %v1104 = vrot.slane %v1089, 7
        %v1105 = vsel %vm1062, %v1103, %v1104
        %v1106 = vsel %vm1062, %v1102, %v1103
        %v1107 = vsel %vm1062, %v1104, %v1102
        %v1108 = vsub.f32 %v1087, %v1107
        %v1109 = vsub.f32 %v1088, %v1106
        %v1110 = vsub.f32 %v1089, %v1105
        %v1111 = vand.u32 2147483647, %v1108
        %v1112 = vand.u32 2147483647, %v1109
        %v1113 = vand.u32 2147483647, %v1110
        %v1114 = vrot.slane %v1099, 7
        %v1115 = vrot.slane %v1100, 7
        %v1116 = vrot.slane %v1101, 7
        %v1117 = vsel %vm1062, %v1115, %v1116
        %v1118 = vsel %vm1062, %v1114, %v1115
        %v1119 = vsel %vm1062, %v1116, %v1114
        %v1120 = vadd.f32 %v1099, %v1119
        %v1121 = vadd.f32 %v1100, %v1118
        %v1122 = vadd.f32 %v1101, %v1117
        %v1123 = vrot.slane %v1099, 1
        %v1124 = vrot.slane %v1100, 1
        %v1125 = vrot.slane %v1101, 1
        %vm1126 = vcmp.lt.s32.totalorder %v1061, 7
        %v1127 = vsel %vm1126, %v1124, %v1125
        %v1128 = vsel %vm1126, %v1123, %v1124
        %v1129 = vsel %vm1126, %v1125, %v1123
        %v1130 = vadd.f32 %v1120, %v1128
        %v1131 = vadd.f32 %v1121, %v1127
        %v1132 = vadd.f32 %v1122, %v1129
        %1133 = vrot.lane.b32.xlu0 %v1130, 1
        %v1134 = vpop.permute.xlu0 %1133
        %1135 = vrot.lane.b32.xlu0 %v1131, 1
        %v1136 = vpop.permute.xlu0 %1135
        %1137 = vrot.lane.b32.xlu0 %v1132, 1
        %v1138 = vpop.permute.xlu0 %1137
        %v1139 = vadd.f32 %v1130, %v1134
        %v1140 = vadd.f32 %v1131, %v1136
        %v1141 = vadd.f32 %v1132, %v1138
        %1142 = vrot.lane.b32.xlu0 %v1130, 127
        %v1143 = vpop.permute.xlu0 %1142
        %1144 = vrot.lane.b32.xlu0 %v1131, 127
        %v1145 = vpop.permute.xlu0 %1144
        %1146 = vrot.lane.b32.xlu0 %v1132, 127
        %v1147 = vpop.permute.xlu0 %1146
        %v1148 = vadd.f32 %v1139, %v1143
        %v1149 = vadd.f32 %v1140, %v1145
        %v1150 = vadd.f32 %v1141, %v1147
        %v1151 = vmul.f32 %v1148, 0.11111111
        %v1152 = vmul.f32 %v1149, 0.11111111
        %v1153 = vmul.f32 %v1150, 0.11111111
        %v1154 = vmul.f32 %v1151, -10.0
        %v1155 = vmul.f32 %v1152, -10.0
        %v1156 = vmul.f32 %v1153, -10.0
        %v1157 = vmul.f32 %v1154, 1.442695
        %v1158 = vpow.pop %v1157
        %v1159 = vmul.f32 %v1155, 1.442695
        %v1160 = vpow.pop %v1159
        %v1161 = vmul.f32 %v1156, 1.442695
        %v1162 = vpow.pop %v1161
        %v1163 = vmul.f32 %v1054, %v1158
        %v1164 = vmul.f32 %v1055, %v1160
        %v1165 = vmul.f32 %v1056, %v1162
        %v1166 = vrot.slane %v1111, 7
        %v1167 = vrot.slane %v1112, 7
        %v1168 = vrot.slane %v1113, 7
        %v1169 = vsel %vm1062, %v1167, %v1168
        %v1170 = vsel %vm1062, %v1166, %v1167
        %v1171 = vsel %vm1062, %v1168, %v1166
        %v1172 = vadd.f32 %v1111, %v1171
        %v1173 = vadd.f32 %v1112, %v1170
        %v1174 = vadd.f32 %v1113, %v1169
        %v1175 = vrot.slane %v1111, 1
        %v1176 = vrot.slane %v1112, 1
        %v1177 = vrot.slane %v1113, 1
        %v1178 = vsel %vm1126, %v1176, %v1177
        %v1179 = vsel %vm1126, %v1175, %v1176
        %v1180 = vsel %vm1126, %v1177, %v1175
        %v1181 = vadd.f32 %v1172, %v1179
        %v1182 = vadd.f32 %v1173, %v1178
        %v1183 = vadd.f32 %v1174, %v1180
        %1184 = vrot.lane.b32.xlu0 %v1181, 1
        %v1185 = vpop.permute.xlu0 %1184
        %1186 = vrot.lane.b32.xlu0 %v1182, 1
        %v1187 = vpop.permute.xlu0 %1186
        %1188 = vrot.lane.b32.xlu0 %v1183, 1
        %v1189 = vpop.permute.xlu0 %1188
        %v1190 = vadd.f32 %v1181, %v1185
        %v1191 = vadd.f32 %v1182, %v1187
        %v1192 = vadd.f32 %v1183, %v1189
        %1193 = vrot.lane.b32.xlu0 %v1181, 127
        %v1194 = vpop.permute.xlu0 %1193
        %1195 = vrot.lane.b32.xlu0 %v1182, 127
        %v1196 = vpop.permute.xlu0 %1195
        %1197 = vrot.lane.b32.xlu0 %v1183, 127
        %v1198 = vpop.permute.xlu0 %1197
        %v1199 = vadd.f32 %v1190, %v1194
        %v1200 = vadd.f32 %v1191, %v1196
        %v1201 = vadd.f32 %v1192, %v1198
        %v1202 = vmul.f32 %v1199, 0.11111111
        %v1203 = vmul.f32 %v1200, 0.11111111
        %v1204 = vmul.f32 %v1201, 0.11111111
        %v1205 = vmul.f32 %v1202, -10.0
        %v1206 = vmul.f32 %v1203, -10.0
        %v1207 = vmul.f32 %v1204, -10.0
        %v1208 = vmul.f32 %v1205, 1.442695
        %v1209 = vpow.pop %v1208
        %v1210 = vmul.f32 %v1206, 1.442695
        %v1211 = vpow.pop %v1210
        %v1212 = vmul.f32 %v1207, 1.442695
        %v1213 = vpow.pop %v1212
        %v1214 = vmul.f32 %v1069, %v1209
        %v1215 = vmul.f32 %v1070, %v1211
        %v1216 = vmul.f32 %v1071, %v1213
        %v1217 = vadd.f32 %v1163, %v1214
        %v1218 = vadd.f32 %v1164, %v1215
        %v1219 = vadd.f32 %v1165, %v1216
        %v1220 = vadd.f32 %v1217, %v1218
        %v1221 = vadd.f32 %v1220, %v1219
        %1222 = vadd.xlane.f32.xlu0 %v1221
        %v1223 = vpop.xlane.xlu0 %1222
        %v1224 = vrot.slane %v1223, 4
        %v1225 = vadd.f32 %v1223, %v1224
        %v1226 = vrot.slane %v1225, 2
        %v1227 = vadd.f32 %v1225, %v1226
        %v1228 = vrot.slane %v1227, 1
        %v1229 = vadd.f32 %v1227, %v1228
        %s1230 = vtos %v1229
        %s1231 = smul.f32 %s1230, 0.0034602077
        %v1232 = vadd.s32 %v1061, 8
        %v1233 = vlaneseq
        %v1234 = vand.u32 %v1233, 127
        %v1235 = vrot.slane %v563, 7
        %v1236 = vrot.slane %v565, 7
        %v1237 = vrot.slane %v567, 7
        %v1238 = vrot.slane %v564, 7
        %v1239 = vrot.slane %v566, 7
        %v1240 = vrot.slane %v568, 7
        %v1241 = vsel %vm1062, %v1235, %v1238
        %v1242 = vsel %vm1062, %v1236, %v1239
        %v1243 = vsel %vm1062, %v1237, %v1240
        %v1244 = vsel %vm1062, %v1238, %v1235
        %v1245 = vsel %vm1062, %v1239, %v1236
        %v1246 = vsel %vm1062, %v1240, %v1237
        %v1247 = vsub.f32 %v563, %v1244
        %v1248 = vsub.f32 %v564, %v1241
        %v1249 = vsub.f32 %v565, %v1245
        %v1250 = vsub.f32 %v566, %v1242
        %v1251 = vsub.f32 %v567, %v1246
        %v1252 = vsub.f32 %v568, %v1243
        %v1253 = vand.u32 2147483647, %v1247
        %v1254 = vand.u32 2147483647, %v1248
        %v1255 = vand.u32 2147483647, %v1249
        %v1256 = vand.u32 2147483647, %v1250
        %v1257 = vand.u32 2147483647, %v1251
        %v1258 = vand.u32 2147483647, %v1252
        %vm1259 = vcmask 1047680
        %1260 = vrot.lane.b32.xlu0 %v563, 16
        %v1261 = vpop.permute.xlu0 %1260
        %v1262 = vsel %vm1259, %v1261, %v563
        %1263 = vrot.lane.b32.xlu0 %v564, 16
        %v1264 = vpop.permute.xlu0 %1263
        %v1265 = vsel %vm1259, %v1264, %v564
        %1266 = vrot.lane.b32.xlu0 %v565, 16
        %v1267 = vpop.permute.xlu0 %1266
        %v1268 = vsel %vm1259, %v1267, %v565
        %1269 = vrot.lane.b32.xlu0 %v566, 16
        %v1270 = vpop.permute.xlu0 %1269
        %v1271 = vsel %vm1259, %v1270, %v566
        %1272 = vrot.lane.b32.xlu0 %v567, 16
        %v1273 = vpop.permute.xlu0 %1272
        %v1274 = vsel %vm1259, %v1273, %v567
        %1275 = vrot.lane.b32.xlu0 %v568, 16
        %v1276 = vpop.permute.xlu0 %1275
        %v1277 = vsel %vm1259, %v1276, %v568
        %1278 = vrot.lane.b32.xlu0 %v1262, 16
        %v1279 = vpop.permute.xlu0 %1278
        %1280 = vrot.lane.b32.xlu0 %v1265, 16
        %v1281 = vpop.permute.xlu0 %1280
        %1282 = vrot.lane.b32.xlu0 %v1268, 16
        %v1283 = vpop.permute.xlu0 %1282
        %1284 = vrot.lane.b32.xlu0 %v1271, 16
        %v1285 = vpop.permute.xlu0 %1284
        %1286 = vrot.lane.b32.xlu0 %v1274, 16
        %v1287 = vpop.permute.xlu0 %1286
        %1288 = vrot.lane.b32.xlu0 %v1277, 16
        %v1289 = vpop.permute.xlu0 %1288
        %v1290 = vsel %vm1259, %v1279, %v563
        %v1291 = vsel %vm1259, %v1281, %v564
        %v1292 = vsel %vm1259, %v1283, %v565
        %v1293 = vsel %vm1259, %v1285, %v566
        %v1294 = vsel %vm1259, %v1287, %v567
        %v1295 = vsel %vm1259, %v1289, %v568
        %1302 = vrot.lane.b32.xlu0 %v1290, 113
        %v1303 = vpop.permute.xlu0 %1302
        %1304 = vrot.lane.b32.xlu0 %v1291, 113
        %v1305 = vpop.permute.xlu0 %1304
        %1306 = vrot.lane.b32.xlu0 %v1292, 113
        %v1307 = vpop.permute.xlu0 %1306
        %1308 = vrot.lane.b32.xlu0 %v1293, 113
        %v1309 = vpop.permute.xlu0 %1308
        %1310 = vrot.lane.b32.xlu0 %v1294, 113
        %v1311 = vpop.permute.xlu0 %1310
        %1312 = vrot.lane.b32.xlu0 %v1295, 113
        %v1313 = vpop.permute.xlu0 %1312
        %v1320 = vsub.f32 %v563, %v1303
        %v1321 = vsub.f32 %v564, %v1305
        %v1322 = vsub.f32 %v565, %v1307
        %v1323 = vsub.f32 %v566, %v1309
        %v1324 = vsub.f32 %v567, %v1311
        %v1325 = vsub.f32 %v568, %v1313
        %v1326 = vand.u32 2147483647, %v1320
        %v1327 = vand.u32 2147483647, %v1321
        %v1328 = vand.u32 2147483647, %v1322
        %v1329 = vand.u32 2147483647, %v1323
        %v1330 = vand.u32 2147483647, %v1324
        %v1331 = vand.u32 2147483647, %v1325
        %vm1332 = vcmp.gt.s32.totalorder %v1061, 0
        %vm1333 = vcmp.gt.s32.totalorder %v1232, 0
        %v1334 = vsel %vm1332, %v1253, 0.0
        %v1335 = vsel %vm1333, %v1254, 0.0
        %v1336 = vsel %vm1332, %v1255, 0.0
        %v1337 = vsel %vm1333, %v1256, 0.0
        %v1338 = vsel %vm1332, %v1257, 0.0
        %v1339 = vsel %vm1333, %v1258, 0.0
        %v1340 = vsel %vm709, %v1334, 0.0
        %v1341 = vsel %vm709, %v1335, 0.0
        %v1342 = vadd.f32 %v1340, %v1341
        %v1343 = vsel %vm709, %v1336, 0.0
        %v1344 = vadd.f32 %v1342, %v1343
        %v1345 = vsel %vm709, %v1337, 0.0
        %v1346 = vadd.f32 %v1344, %v1345
        %v1347 = vsel %vm709, %v1338, 0.0
        %v1348 = vadd.f32 %v1346, %v1347
        %v1349 = vsel %vm709, %v1339, 0.0
        %v1350 = vadd.f32 %v1348, %v1349
        %1351 = vadd.xlane.f32.xlu0 %v1350
        %v1352 = vpop.xlane.xlu0 %1351
        %v1353 = vrot.slane %v1352, 4
        %v1354 = vadd.f32 %v1352, %v1353
        %v1355 = vrot.slane %v1354, 2
        %v1356 = vadd.f32 %v1354, %v1355
        %v1357 = vrot.slane %v1356, 1
        %v1358 = vadd.f32 %v1356, %v1357
        %s1359 = vtos %v1358
        %s1360 = smul.f32 %s1359, 0.0013888889
        %vm1361 = vcmp.gt.s32.totalorder %v1234, 0
        %v1362 = vsel %vm1361, %v1326, 0.0
        %v1363 = vsel %vm1361, %v1327, 0.0
        %v1364 = vsel %vm1361, %v1328, 0.0
        %v1365 = vsel %vm1361, %v1329, 0.0
        %v1366 = vsel %vm1361, %v1330, 0.0
        %v1367 = vsel %vm1361, %v1331, 0.0
        %v1368 = vsel %vm709, %v1362, 0.0
        %v1369 = vsel %vm709, %v1363, 0.0
        %v1370 = vadd.f32 %v1368, %v1369
        %v1371 = vsel %vm709, %v1364, 0.0
        %v1372 = vadd.f32 %v1370, %v1371
        %v1373 = vsel %vm709, %v1365, 0.0
        %v1374 = vadd.f32 %v1372, %v1373
        %v1375 = vsel %vm709, %v1366, 0.0
        %v1376 = vadd.f32 %v1374, %v1375
        %v1377 = vsel %vm709, %v1367, 0.0
        %v1378 = vadd.f32 %v1376, %v1377
        %1379 = vadd.xlane.f32.xlu0 %v1378
        %v1380 = vpop.xlane.xlu0 %1379
        %v1381 = vrot.slane %v1380, 4
        %v1382 = vadd.f32 %v1380, %v1381
        %v1383 = vrot.slane %v1382, 2
        %v1384 = vadd.f32 %v1382, %v1383
        %v1385 = vrot.slane %v1384, 1
        %v1386 = vadd.f32 %v1384, %v1385
        %s1387 = vtos %v1386
        %s1388 = smul.f32 %s1387, 0.0013888889
        %s1389 = sadd.f32 %s1360, %s1388
        %s1390 = smul.f32 %s1389, 0.1
        %s1391 = sadd.f32 %s1231, %s1390
        %v1392 = vmul.f32 %v593, 0.299
        %v1393 = vmul.f32 %v594, 0.299
        %v1394 = vmul.f32 %v595, 0.587
        %v1395 = vmul.f32 %v596, 0.587
        %v1396 = vadd.f32 %v1392, %v1394
        %v1397 = vadd.f32 %v1393, %v1395
        %v1398 = vmul.f32 %v597, 0.114
        %v1399 = vmul.f32 %v598, 0.114
        %v1400 = vadd.f32 %v1396, %v1398
        %v1401 = vadd.f32 %v1397, %v1399
        %1402 = vst [vmem:[#allocation2] sm:$0xff] 0.0
        %1403 = vst [vmem:[#allocation2 + $0x8] sm:$0xff] 0.0
        %1404 = vst [vmem:[#allocation2 + $0x10] sm:$0xff] 0.0
        %1405 = vst.msk [vmem:[#allocation2] sm:$0xff] %vm709, %v1400
        %1406 = vst.msk [vmem:[#allocation2 + $0x8] sm:$0xff] %vm709, %v1401
        %v1407 = vld [vmem:[#allocation2] sm:$0xff]
        %v1408 = vld [vmem:[#allocation2 + $0x8] sm:$0xff]
        %v1409 = vld [vmem:[#allocation2 + $0x10] sm:$0xff]
        %1410 = vrot.lane.b32.xlu0 %v1407, 1
        %v1411 = vpop.permute.xlu0 %1410
        %1412 = vrot.lane.b32.xlu0 %v1408, 1
        %v1413 = vpop.permute.xlu0 %1412
        %1414 = vrot.lane.b32.xlu0 %v1409, 1
        %v1415 = vpop.permute.xlu0 %1414
        %v1416 = vsub.f32 %v1407, %v1411
        %v1417 = vsub.f32 %v1408, %v1413
        %v1418 = vsub.f32 %v1409, %v1415
        %v1419 = vand.u32 2147483647, %v1416
        %v1420 = vand.u32 2147483647, %v1417
        %v1421 = vand.u32 2147483647, %v1418
        %v1422 = vrot.slane %v1407, 7
        %v1423 = vrot.slane %v1408, 7
        %v1424 = vrot.slane %v1409, 7
        %v1425 = vsel %vm1062, %v1423, %v1424
        %v1426 = vsel %vm1062, %v1422, %v1423
        %v1427 = vsel %vm1062, %v1424, %v1422
        %v1428 = vsub.f32 %v1407, %v1427
        %v1429 = vsub.f32 %v1408, %v1426
        %v1430 = vsub.f32 %v1409, %v1425
        %v1431 = vand.u32 2147483647, %v1428
        %v1432 = vand.u32 2147483647, %v1429
        %v1433 = vand.u32 2147483647, %v1430
        %v1434 = vmul.f32 %v585, 0.299
        %v1435 = vmul.f32 %v586, 0.299
        %v1436 = vmul.f32 %v587, 0.587
        %v1437 = vmul.f32 %v588, 0.587
        %v1438 = vadd.f32 %v1434, %v1436
        %v1439 = vadd.f32 %v1435, %v1437
        %v1440 = vmul.f32 %v589, 0.114
        %v1441 = vmul.f32 %v590, 0.114
        %v1442 = vadd.f32 %v1438, %v1440
        %v1443 = vadd.f32 %v1439, %v1441
        %1444 = vst [vmem:[#allocation2] sm:$0xff] 0.0
        %1445 = vst [vmem:[#allocation2 + $0x8] sm:$0xff] 0.0
        %1446 = vst [vmem:[#allocation2 + $0x10] sm:$0xff] 0.0
        %1447 = vst.msk [vmem:[#allocation2] sm:$0xff] %vm709, %v1442
        %1448 = vst.msk [vmem:[#allocation2 + $0x8] sm:$0xff] %vm709, %v1443
        %v1449 = vld [vmem:[#allocation2] sm:$0xff]
        %v1450 = vld [vmem:[#allocation2 + $0x8] sm:$0xff]
        %v1451 = vld [vmem:[#allocation2 + $0x10] sm:$0xff]
        %1452 = vrot.lane.b32.xlu0 %v1449, 1
        %v1453 = vpop.permute.xlu0 %1452
        %1454 = vrot.lane.b32.xlu0 %v1450, 1
        %v1455 = vpop.permute.xlu0 %1454
        %1456 = vrot.lane.b32.xlu0 %v1451, 1
        %v1457 = vpop.permute.xlu0 %1456
        %v1458 = vsub.f32 %v1449, %v1453
        %v1459 = vsub.f32 %v1450, %v1455
        %v1460 = vsub.f32 %v1451, %v1457
        %v1461 = vand.u32 2147483647, %v1458
        %v1462 = vand.u32 2147483647, %v1459
        %v1463 = vand.u32 2147483647, %v1460
        %v1464 = vrot.slane %v1449, 7
        %v1465 = vrot.slane %v1450, 7
        %v1466 = vrot.slane %v1451, 7
        %v1467 = vsel %vm1062, %v1465, %v1466
        %v1468 = vsel %vm1062, %v1464, %v1465
        %v1469 = vsel %vm1062, %v1466, %v1464
        %v1470 = vsub.f32 %v1449, %v1469
        %v1471 = vsub.f32 %v1450, %v1468
        %v1472 = vsub.f32 %v1451, %v1467
        %v1473 = vand.u32 2147483647, %v1470
        %v1474 = vand.u32 2147483647, %v1471
        %v1475 = vand.u32 2147483647, %v1472
        %v1476 = vrot.slane %v1461, 7
        %v1477 = vrot.slane %v1462, 7
        %v1478 = vrot.slane %v1463, 7
        %v1479 = vsel %vm1062, %v1477, %v1478
        %v1480 = vsel %vm1062, %v1476, %v1477
        %v1481 = vsel %vm1062, %v1478, %v1476
        %v1482 = vadd.f32 %v1461, %v1481
        %v1483 = vadd.f32 %v1462, %v1480
        %v1484 = vadd.f32 %v1463, %v1479
        %v1485 = vrot.slane %v1461, 1
        %v1486 = vrot.slane %v1462, 1
        %v1487 = vrot.slane %v1463, 1
        %v1488 = vsel %vm1126, %v1486, %v1487
        %v1489 = vsel %vm1126, %v1485, %v1486
        %v1490 = vsel %vm1126, %v1487, %v1485
        %v1491 = vadd.f32 %v1482, %v1489
        %v1492 = vadd.f32 %v1483, %v1488
        %v1493 = vadd.f32 %v1484, %v1490
        %1494 = vrot.lane.b32.xlu0 %v1491, 1
        %v1495 = vpop.permute.xlu0 %1494
        %1496 = vrot.lane.b32.xlu0 %v1492, 1
        %v1497 = vpop.permute.xlu0 %1496
        %1498 = vrot.lane.b32.xlu0 %v1493, 1
        %v1499 = vpop.permute.xlu0 %1498
        %v1500 = vadd.f32 %v1491, %v1495
        %v1501 = vadd.f32 %v1492, %v1497
        %v1502 = vadd.f32 %v1493, %v1499
        %1503 = vrot.lane.b32.xlu0 %v1491, 127
        %v1504 = vpop.permute.xlu0 %1503
        %1505 = vrot.lane.b32.xlu0 %v1492, 127
        %v1506 = vpop.permute.xlu0 %1505
        %1507 = vrot.lane.b32.xlu0 %v1493, 127
        %v1508 = vpop.permute.xlu0 %1507
        %v1509 = vadd.f32 %v1500, %v1504
        %v1510 = vadd.f32 %v1501, %v1506
        %v1511 = vadd.f32 %v1502, %v1508
        %v1512 = vmul.f32 %v1509, 0.11111111
        %v1513 = vmul.f32 %v1510, 0.11111111
        %v1514 = vmul.f32 %v1511, 0.11111111
        %v1515 = vmul.f32 %v1512, -10.0
        %v1516 = vmul.f32 %v1513, -10.0
        %v1517 = vmul.f32 %v1514, -10.0
        %v1518 = vmul.f32 %v1515, 1.442695
        %v1519 = vpow.pop %v1518
        %v1520 = vmul.f32 %v1516, 1.442695
        %v1521 = vpow.pop %v1520
        %v1522 = vmul.f32 %v1517, 1.442695
        %v1523 = vpow.pop %v1522
        %v1524 = vmul.f32 %v1419, %v1519
        %v1525 = vmul.f32 %v1420, %v1521
        %v1526 = vmul.f32 %v1421, %v1523
        %v1527 = vrot.slane %v1473, 7
        %v1528 = vrot.slane %v1474, 7
        %v1529 = vrot.slane %v1475, 7
        %v1530 = vsel %vm1062, %v1528, %v1529
        %v1531 = vsel %vm1062, %v1527, %v1528
        %v1532 = vsel %vm1062, %v1529, %v1527
        %v1533 = vadd.f32 %v1473, %v1532
        %v1534 = vadd.f32 %v1474, %v1531
        %v1535 = vadd.f32 %v1475, %v1530
        %v1536 = vrot.slane %v1473, 1
        %v1537 = vrot.slane %v1474, 1
        %v1538 = vrot.slane %v1475, 1
        %v1539 = vsel %vm1126, %v1537, %v1538
        %v1540 = vsel %vm1126, %v1536, %v1537
        %v1541 = vsel %vm1126, %v1538, %v1536
        %v1542 = vadd.f32 %v1533, %v1540
        %v1543 = vadd.f32 %v1534, %v1539
        %v1544 = vadd.f32 %v1535, %v1541
        %1545 = vrot.lane.b32.xlu0 %v1542, 1
        %v1546 = vpop.permute.xlu0 %1545
        %1547 = vrot.lane.b32.xlu0 %v1543, 1
        %v1548 = vpop.permute.xlu0 %1547
        %1549 = vrot.lane.b32.xlu0 %v1544, 1
        %v1550 = vpop.permute.xlu0 %1549
        %v1551 = vadd.f32 %v1542, %v1546
        %v1552 = vadd.f32 %v1543, %v1548
        %v1553 = vadd.f32 %v1544, %v1550
        %1554 = vrot.lane.b32.xlu0 %v1542, 127
        %v1555 = vpop.permute.xlu0 %1554
        %1556 = vrot.lane.b32.xlu0 %v1543, 127
        %v1557 = vpop.permute.xlu0 %1556
        %1558 = vrot.lane.b32.xlu0 %v1544, 127
        %v1559 = vpop.permute.xlu0 %1558
        %v1560 = vadd.f32 %v1551, %v1555
        %v1561 = vadd.f32 %v1552, %v1557
        %v1562 = vadd.f32 %v1553, %v1559
        %v1563 = vmul.f32 %v1560, 0.11111111
        %v1564 = vmul.f32 %v1561, 0.11111111
        %v1565 = vmul.f32 %v1562, 0.11111111
        %v1566 = vmul.f32 %v1563, -10.0
        %v1567 = vmul.f32 %v1564, -10.0
        %v1568 = vmul.f32 %v1565, -10.0
        %v1569 = vmul.f32 %v1566, 1.442695
        %v1570 = vpow.pop %v1569
        %v1571 = vmul.f32 %v1567, 1.442695
        %v1572 = vpow.pop %v1571
        %v1573 = vmul.f32 %v1568, 1.442695
        %v1574 = vpow.pop %v1573
        %v1575 = vmul.f32 %v1431, %v1570
        %v1576 = vmul.f32 %v1432, %v1572
        %v1577 = vmul.f32 %v1433, %v1574
        %v1578 = vadd.f32 %v1524, %v1575
        %v1579 = vadd.f32 %v1525, %v1576
        %v1580 = vadd.f32 %v1526, %v1577
        %v1581 = vadd.f32 %v1578, %v1579
        %v1582 = vadd.f32 %v1581, %v1580
        %1583 = vadd.xlane.f32.xlu0 %v1582
        %v1584 = vpop.xlane.xlu0 %1583
        %v1585 = vrot.slane %v1584, 4
        %v1586 = vadd.f32 %v1584, %v1585
        %v1587 = vrot.slane %v1586, 2
        %v1588 = vadd.f32 %v1586, %v1587
        %v1589 = vrot.slane %v1588, 1
        %v1590 = vadd.f32 %v1588, %v1589
        %s1591 = vtos %v1590
        %s1592 = smul.f32 %s1591, 0.0034602077
        %v1593 = vrot.slane %v585, 7
        %v1594 = vrot.slane %v587, 7
        %v1595 = vrot.slane %v589, 7
        %v1596 = vrot.slane %v586, 7
        %v1597 = vrot.slane %v588, 7
        %v1598 = vrot.slane %v590, 7
        %v1599 = vsel %vm1062, %v1593, %v1596
        %v1600 = vsel %vm1062, %v1594, %v1597
        %v1601 = vsel %vm1062, %v1595, %v1598
        %v1602 = vsel %vm1062, %v1596, %v1593
        %v1603 = vsel %vm1062, %v1597, %v1594
        %v1604 = vsel %vm1062, %v1598, %v1595
        %v1605 = vsub.f32 %v585, %v1602
        %v1606 = vsub.f32 %v586, %v1599
        %v1607 = vsub.f32 %v587, %v1603
        %v1608 = vsub.f32 %v588, %v1600
        %v1609 = vsub.f32 %v589, %v1604
        %v1610 = vsub.f32 %v590, %v1601
        %v1611 = vand.u32 2147483647, %v1605
        %v1612 = vand.u32 2147483647, %v1606
        %v1613 = vand.u32 2147483647, %v1607
        %v1614 = vand.u32 2147483647, %v1608
        %v1615 = vand.u32 2147483647, %v1609
        %v1616 = vand.u32 2147483647, %v1610
        %1617 = vrot.lane.b32.xlu0 %v585, 16
        %v1618 = vpop.permute.xlu0 %1617
        %v1619 = vsel %vm1259, %v1618, %v585
        %1620 = vrot.lane.b32.xlu0 %v586, 16
        %v1621 = vpop.permute.xlu0 %1620
        %v1622 = vsel %vm1259, %v1621, %v586
        %1623 = vrot.lane.b32.xlu0 %v587, 16
        %v1624 = vpop.permute.xlu0 %1623
        %v1625 = vsel %vm1259, %v1624, %v587
        %1626 = vrot.lane.b32.xlu0 %v588, 16
        %v1627 = vpop.permute.xlu0 %1626
        %v1628 = vsel %vm1259, %v1627, %v588
        %1629 = vrot.lane.b32.xlu0 %v589, 16
        %v1630 = vpop.permute.xlu0 %1629
        %v1631 = vsel %vm1259, %v1630, %v589
        %1632 = vrot.lane.b32.xlu0 %v590, 16
        %v1633 = vpop.permute.xlu0 %1632
        %v1634 = vsel %vm1259, %v1633, %v590
        %1635 = vrot.lane.b32.xlu0 %v1619, 16
        %v1636 = vpop.permute.xlu0 %1635
        %1637 = vrot.lane.b32.xlu0 %v1622, 16
        %v1638 = vpop.permute.xlu0 %1637
        %1639 = vrot.lane.b32.xlu0 %v1625, 16
        %v1640 = vpop.permute.xlu0 %1639
        %1641 = vrot.lane.b32.xlu0 %v1628, 16
        %v1642 = vpop.permute.xlu0 %1641
        %1643 = vrot.lane.b32.xlu0 %v1631, 16
        %v1644 = vpop.permute.xlu0 %1643
        %1645 = vrot.lane.b32.xlu0 %v1634, 16
        %v1646 = vpop.permute.xlu0 %1645
        %v1647 = vsel %vm1259, %v1636, %v585
        %v1648 = vsel %vm1259, %v1638, %v586
        %v1649 = vsel %vm1259, %v1640, %v587
        %v1650 = vsel %vm1259, %v1642, %v588
        %v1651 = vsel %vm1259, %v1644, %v589
        %v1652 = vsel %vm1259, %v1646, %v590
        %1659 = vrot.lane.b32.xlu0 %v1647, 113
        %v1660 = vpop.permute.xlu0 %1659
        %1661 = vrot.lane.b32.xlu0 %v1648, 113
        %v1662 = vpop.permute.xlu0 %1661
        %1663 = vrot.lane.b32.xlu0 %v1649, 113
        %v1664 = vpop.permute.xlu0 %1663
        %1665 = vrot.lane.b32.xlu0 %v1650, 113
        %v1666 = vpop.permute.xlu0 %1665
        %1667 = vrot.lane.b32.xlu0 %v1651, 113
        %v1668 = vpop.permute.xlu0 %1667
        %1669 = vrot.lane.b32.xlu0 %v1652, 113
        %v1670 = vpop.permute.xlu0 %1669
        %v1677 = vsub.f32 %v585, %v1660
        %v1678 = vsub.f32 %v586, %v1662
        %v1679 = vsub.f32 %v587, %v1664
        %v1680 = vsub.f32 %v588, %v1666
        %v1681 = vsub.f32 %v589, %v1668
        %v1682 = vsub.f32 %v590, %v1670
        %v1683 = vand.u32 2147483647, %v1677
        %v1684 = vand.u32 2147483647, %v1678
        %v1685 = vand.u32 2147483647, %v1679
        %v1686 = vand.u32 2147483647, %v1680
        %v1687 = vand.u32 2147483647, %v1681
        %v1688 = vand.u32 2147483647, %v1682
        %v1689 = vsel %vm1332, %v1611, 0.0
        %v1690 = vsel %vm1333, %v1612, 0.0
        %v1691 = vsel %vm1332, %v1613, 0.0
        %v1692 = vsel %vm1333, %v1614, 0.0
        %v1693 = vsel %vm1332, %v1615, 0.0
        %v1694 = vsel %vm1333, %v1616, 0.0
        %v1695 = vsel %vm709, %v1689, 0.0
        %v1696 = vsel %vm709, %v1690, 0.0
        %v1697 = vadd.f32 %v1695, %v1696
        %v1698 = vsel %vm709, %v1691, 0.0
        %v1699 = vadd.f32 %v1697, %v1698
        %v1700 = vsel %vm709, %v1692, 0.0
        %v1701 = vadd.f32 %v1699, %v1700
        %v1702 = vsel %vm709, %v1693, 0.0
        %v1703 = vadd.f32 %v1701, %v1702
        %v1704 = vsel %vm709, %v1694, 0.0
        %v1705 = vadd.f32 %v1703, %v1704
        %1706 = vadd.xlane.f32.xlu0 %v1705
        %v1707 = vpop.xlane.xlu0 %1706
        %v1708 = vrot.slane %v1707, 4
        %v1709 = vadd.f32 %v1707, %v1708
        %v1710 = vrot.slane %v1709, 2
        %v1711 = vadd.f32 %v1709, %v1710
        %v1712 = vrot.slane %v1711, 1
        %v1713 = vadd.f32 %v1711, %v1712
        %s1714 = vtos %v1713
        %s1715 = smul.f32 %s1714, 0.0013888889
        %v1716 = vsel %vm1361, %v1683, 0.0
        %v1717 = vsel %vm1361, %v1684, 0.0
        %v1718 = vsel %vm1361, %v1685, 0.0
        %v1719 = vsel %vm1361, %v1686, 0.0
        %v1720 = vsel %vm1361, %v1687, 0.0
        %v1721 = vsel %vm1361, %v1688, 0.0
        %v1722 = vsel %vm709, %v1716, 0.0
        %v1723 = vsel %vm709, %v1717, 0.0
        %v1724 = vadd.f32 %v1722, %v1723
        %v1725 = vsel %vm709, %v1718, 0.0
        %v1726 = vadd.f32 %v1724, %v1725
        %v1727 = vsel %vm709, %v1719, 0.0
        %v1728 = vadd.f32 %v1726, %v1727
        %v1729 = vsel %vm709, %v1720, 0.0
        %v1730 = vadd.f32 %v1728, %v1729
        %v1731 = vsel %vm709, %v1721, 0.0
        %v1732 = vadd.f32 %v1730, %v1731
        %1733 = vadd.xlane.f32.xlu0 %v1732
        %v1734 = vpop.xlane.xlu0 %1733
        %v1735 = vrot.slane %v1734, 4
        %v1736 = vadd.f32 %v1734, %v1735
        %v1737 = vrot.slane %v1736, 2
        %v1738 = vadd.f32 %v1736, %v1737
        %v1739 = vrot.slane %v1738, 1
        %v1740 = vadd.f32 %v1738, %v1739
        %s1741 = vtos %v1740
        %s1742 = smul.f32 %s1741, 0.0013888889
        %s1743 = sadd.f32 %s1715, %s1742
        %s1744 = smul.f32 %s1743, 0.1
        %s1745 = sadd.f32 %s1592, %s1744
        %1748 = vrot.lane.b32.xlu0 %v647, 16
        %v1749 = vpop.permute.xlu0 %1748
        %1750 = vrot.lane.b32.xlu0 %v648, 16
        %v1751 = vpop.permute.xlu0 %1750
        %1756 = vrot.lane.b32.xlu0 %v661, 32
        %v1757 = vpop.permute.xlu0 %1756
        %1758 = vrot.lane.b32.xlu0 %v662, 32
        %v1759 = vpop.permute.xlu0 %1758
        %1764 = vrot.lane.b32.xlu0 %v675, 48
        %v1765 = vpop.permute.xlu0 %1764
        %1766 = vrot.lane.b32.xlu0 %v676, 48
        %v1767 = vpop.permute.xlu0 %1766
        %1772 = vrot.lane.b32.xlu0 %v689, 64
        %v1773 = vpop.permute.xlu0 %1772
        %1774 = vrot.lane.b32.xlu0 %v690, 64
        %v1775 = vpop.permute.xlu0 %1774
        %1780 = vrot.lane.b32.xlu0 %v703, 80
        %v1781 = vpop.permute.xlu0 %1780
        %1782 = vrot.lane.b32.xlu0 %v704, 80
        %v1783 = vpop.permute.xlu0 %1782
        %v1786 = vsel %vm709, %v633, %v1749
        %v1787 = vsel %vm709, %v634, %v1751
        %vm1788 = vcmask 261120
        %v1789 = vsel %vm1788, %v1786, %v1757
        %v1790 = vsel %vm1788, %v1787, %v1759
        %vm1791 = vcmask 392192
        %v1792 = vsel %vm1791, %v1789, %v1765
        %v1793 = vsel %vm1791, %v1790, %v1767
        %vm1794 = vcmask 523264
        %v1795 = vsel %vm1794, %v1792, %v1773
        %v1796 = vsel %vm1794, %v1793, %v1775
        %vm1797 = vcmask 654336
        %v1798 = vsel %vm1797, %v1795, %v1781
        %v1799 = vsel %vm1797, %v1796, %v1783
        %v1801 = vsel %vm709, %v605, 0
        %v1804 = vsel %vm709, %v606, 0
        %v1807 = vsel %vm709, %v607, 0
        %v1810 = vsel %vm709, %v608, 0
        %1812 = vmatpush.msra.mxu0 0.0
        %1813 = vmatpush.msra.mxu0 0.0
        %1814 = vmatpush.msra.mxu0 0.0
        %1815 = vmatpush.msra.mxu0 0.0
        %1816 = vmatpush.msra.mxu0 0.0
        %1817 = vmatpush.msra.mxu0 0.0
        %1818 = vmatpush.msra.mxu0 0.0
        %1819 = vmatpush.msra.mxu0 0.0
        %1820 = vmatpush.msra.mxu0 0.0
        %1821 = vmatpush.msra.mxu0 0.0
        %1822 = vmatpush.msra.mxu0 0.0
        %1823 = vmatpush.msra.mxu0 0.0
        %1824 = vmatpush.msra.mxu0 0.0
        %1825 = vmatpush.msra.mxu0 0.0
        %1826 = vmatpush.msra.mxu0 %v1799
        %1827 = vmatpush.msra.mxu0 %v1798
        %1828 = vmatmul.f32.gmra.mxu0 %v1801
        %v1829 = vpop.f32.mrf.mxu0
        %v1830 = vadd.f32 0.0, %v1829
        %1831 = vmatmul.f32.gmra.mxu0 %v1804
        %v1832 = vpop.f32.mrf.mxu0
        %v1833 = vadd.f32 0.0, %v1832
        %1834 = vmatmul.f32.gmra.mxu0 %v1807
        %v1835 = vpop.f32.mrf.mxu0
        %v1836 = vadd.f32 0.0, %v1835
        %1837 = vmatmul.f32.gmra.mxu0 %v1810
        %v1838 = vpop.f32.mrf.mxu0
        %v1839 = vadd.f32 0.0, %v1838
        %1840 = vdwg.mxu0
        %vm1841 = vcmask 785408
        %v1843 = vsel %vm1841, %v1830, 0
        %v1846 = vsel %vm1841, %v1833, 0
        %v1849 = vsel %vm1841, %v1836, 0
        %v1852 = vsel %vm1841, %v1839, 0
        %1854 = vmatpush.msra.mxu0 0.0
        %1855 = vmatpush.msra.mxu0 0.0
        %1856 = vmatpush.msra.mxu0 0.0
        %1857 = vmatpush.msra.mxu0 0.0
        %1858 = vmatpush.msra.mxu0 %v620
        %1859 = vmatpush.msra.mxu0 %v619
        %1860 = vmatpush.msra.mxu0 %v618
        %1861 = vmatpush.msra.mxu0 %v617
        %1862 = vmatpush.msra.mxu0 %v616
        %1863 = vmatpush.msra.mxu0 %v615
        %1864 = vmatpush.msra.mxu0 %v614
        %1865 = vmatpush.msra.mxu0 %v613
        %1866 = vmatpush.msra.mxu0 %v612
        %1867 = vmatpush.msra.mxu0 %v611
        %1868 = vmatpush.msra.mxu0 %v610
        %1869 = vmatpush.msra.mxu0 %v609
        %1870 = vmatmul.f32.gmra.mxu0 %v1843
        %v1871 = vpop.f32.mrf.mxu0
        %v1872 = vadd.f32 0.0, %v1871
        %1873 = vmatmul.f32.gmra.mxu0 %v1846
        %v1874 = vpop.f32.mrf.mxu0
        %v1875 = vadd.f32 0.0, %v1874
        %1876 = vmatmul.f32.gmra.mxu0 %v1849
        %v1877 = vpop.f32.mrf.mxu0
        %v1878 = vadd.f32 0.0, %v1877
        %1879 = vmatmul.f32.gmra.mxu0 %v1852
        %v1880 = vpop.f32.mrf.mxu0
        %v1881 = vadd.f32 0.0, %v1880
        %1882 = vdwg.mxu0
        %1885 = vrot.lane.b32.xlu0 %v1878, 118
        %v1886 = vpop.permute.xlu0 %1885
        %1887 = vrot.lane.b32.xlu0 %v1881, 118
        %v1888 = vpop.permute.xlu0 %1887
        %v1891 = vsub.f32 %v1872, %v1886
        %v1892 = vsub.f32 %v1875, %v1888
        %1893 = vrot.lane.b32.xlu0 %v1878, 10
        %v1894 = vpop.permute.xlu0 %1893
        %1895 = vrot.lane.b32.xlu0 %v1881, 10
        %v1896 = vpop.permute.xlu0 %1895
        %v1899 = vadd.f32 %v1872, %v1894
        %v1900 = vadd.f32 %v1875, %v1896
        %v1901 = vmul.f32 %v1891, %v1891
        %v1902 = vmul.f32 %v1892, %v1892
        %v1903 = vmul.f32 %v1899, %v1899
        %v1904 = vmul.f32 %v1900, %v1900
        %1907 = vrot.lane.b32.xlu0 %v1903, 118
        %v1908 = vpop.permute.xlu0 %1907
        %1909 = vrot.lane.b32.xlu0 %v1904, 118
        %v1910 = vpop.permute.xlu0 %1909
        %v1913 = vadd.f32 %v1901, %v1908
        %v1914 = vadd.f32 %v1902, %v1910
        %v1915 = vrsqrt.pop %v1913
        %v1916 = vmul.f32 %v1915, %v1913
        %v1917 = vmul.f32 %v1916, %v1915
        %v1918 = vmul.f32 0.5, %v1917
        %v1919 = vsub.f32 1.5, %v1918
        %v1920 = vmul.f32 %v1915, %v1919
        %v1921 = vmul.f32 %v1913, %v1920
        %vm1922 = vcmp.eq.f32.partialorder %v1913, inf
        %v1923 = vsel %vm1922, %v1913, %v1921
        %vm1924 = vcmp.eq.f32.partialorder %v1913, 0.0
        %v1925 = vand.u32 %v1913, 2147483648
        %v1926 = vsel %vm1924, %v1925, %v1923
        %v1927 = vrsqrt.pop %v1914
        %v1928 = vmul.f32 %v1927, %v1914
        %v1929 = vmul.f32 %v1928, %v1927
        %v1930 = vmul.f32 0.5, %v1929
        %v1931 = vsub.f32 1.5, %v1930
        %v1932 = vmul.f32 %v1927, %v1931
        %v1933 = vmul.f32 %v1914, %v1932
        %vm1934 = vcmp.eq.f32.partialorder %v1914, inf
        %v1935 = vsel %vm1934, %v1914, %v1933
        %vm1936 = vcmp.eq.f32.partialorder %v1914, 0.0
        %v1937 = vand.u32 %v1914, 2147483648
        %v1938 = vsel %vm1936, %v1937, %v1935
        %vm1939 = vcmask 80896
        %v1940 = vsel %vm1939, %v1926, 0.0
        %v1941 = vsel %vm1939, %v1938, 0.0
        %v1942 = vadd.f32 %v1940, %v1941
        %1943 = vadd.xlane.f32.xlu0 %v1942
        %v1944 = vpop.xlane.xlu0 %1943
        %v1945 = vrot.slane %v1944, 4
        %v1946 = vadd.f32 %v1944, %v1945
        %v1947 = vrot.slane %v1946, 2
        %v1948 = vadd.f32 %v1946, %v1947
        %v1949 = vrot.slane %v1948, 1
        %v1950 = vadd.f32 %v1948, %v1949
        %s1951 = vtos %v1950
        %s1952 = sadd.f32 %s1951, 0.0
        %1955 = vrot.lane.b32.xlu0 %v1926, 108
        %v1956 = vpop.permute.xlu0 %1955
        %1957 = vrot.lane.b32.xlu0 %v1938, 108
        %v1958 = vpop.permute.xlu0 %1957
        %v1961 = vsel %vm1939, %v1956, 0.0
        %v1962 = vsel %vm1939, %v1958, 0.0
        %v1963 = vadd.f32 %v1961, %v1962
        %1964 = vadd.xlane.f32.xlu0 %v1963
        %v1965 = vpop.xlane.xlu0 %1964
        %v1966 = vrot.slane %v1965, 4
        %v1967 = vadd.f32 %v1965, %v1966
        %v1968 = vrot.slane %v1967, 2
        %v1969 = vadd.f32 %v1967, %v1968
        %v1970 = vrot.slane %v1969, 1
        %v1971 = vadd.f32 %v1969, %v1970
        %s1972 = vtos %v1971
        %s1973 = sadd.f32 %s1952, %s1972
        %1974 = vrot.lane.b32.xlu0 %v1926, 88
        %v1975 = vpop.permute.xlu0 %1974
        %1976 = vrot.lane.b32.xlu0 %v1938, 88
        %v1977 = vpop.permute.xlu0 %1976
        %v1980 = vsel %vm1939, %v1975, 0.0
        %v1981 = vsel %vm1939, %v1977, 0.0
        %v1982 = vadd.f32 %v1980, %v1981
        %1983 = vadd.xlane.f32.xlu0 %v1982
        %v1984 = vpop.xlane.xlu0 %1983
        %v1985 = vrot.slane %v1984, 4
        %v1986 = vadd.f32 %v1984, %v1985
        %v1987 = vrot.slane %v1986, 2
        %v1988 = vadd.f32 %v1986, %v1987
        %v1989 = vrot.slane %v1988, 1
        %v1990 = vadd.f32 %v1988, %v1989
        %s1991 = vtos %v1990
        %s1992 = sadd.f32 %s1973, %s1991
        %1993 = vrot.lane.b32.xlu0 %v1926, 68
        %v1994 = vpop.permute.xlu0 %1993
        %1995 = vrot.lane.b32.xlu0 %v1938, 68
        %v1996 = vpop.permute.xlu0 %1995
        %v1999 = vsel %vm1939, %v1994, 0.0
        %v2000 = vsel %vm1939, %v1996, 0.0
        %v2001 = vadd.f32 %v1999, %v2000
        %2002 = vadd.xlane.f32.xlu0 %v2001
        %v2003 = vpop.xlane.xlu0 %2002
        %v2004 = vrot.slane %v2003, 4
        %v2005 = vadd.f32 %v2003, %v2004
        %v2006 = vrot.slane %v2005, 2
        %v2007 = vadd.f32 %v2005, %v2006
        %v2008 = vrot.slane %v2007, 1
        %v2009 = vadd.f32 %v2007, %v2008
        %s2010 = vtos %v2009
        %s2011 = sadd.f32 %s1992, %s2010
        %2012 = vrot.lane.b32.xlu0 %v1926, 48
        %v2013 = vpop.permute.xlu0 %2012
        %2014 = vrot.lane.b32.xlu0 %v1938, 48
        %v2015 = vpop.permute.xlu0 %2014
        %v2018 = vsel %vm1939, %v2013, 0.0
        %v2019 = vsel %vm1939, %v2015, 0.0
        %v2020 = vadd.f32 %v2018, %v2019
        %2021 = vadd.xlane.f32.xlu0 %v2020
        %v2022 = vpop.xlane.xlu0 %2021
        %v2023 = vrot.slane %v2022, 4
        %v2024 = vadd.f32 %v2022, %v2023
        %v2025 = vrot.slane %v2024, 2
        %v2026 = vadd.f32 %v2024, %v2025
        %v2027 = vrot.slane %v2026, 1
        %v2028 = vadd.f32 %v2026, %v2027
        %s2029 = vtos %v2028
        %s2030 = sadd.f32 %s2011, %s2029
        %2031 = vrot.lane.b32.xlu0 %v1926, 28
        %v2032 = vpop.permute.xlu0 %2031
        %2033 = vrot.lane.b32.xlu0 %v1938, 28
        %v2034 = vpop.permute.xlu0 %2033
        %v2037 = vsel %vm1939, %v2032, 0.0
        %v2038 = vsel %vm1939, %v2034, 0.0
        %v2039 = vadd.f32 %v2037, %v2038
        %2040 = vadd.xlane.f32.xlu0 %v2039
        %v2041 = vpop.xlane.xlu0 %2040
        %v2042 = vrot.slane %v2041, 4
        %v2043 = vadd.f32 %v2041, %v2042
        %v2044 = vrot.slane %v2043, 2
        %v2045 = vadd.f32 %v2043, %v2044
        %v2046 = vrot.slane %v2045, 1
        %v2047 = vadd.f32 %v2045, %v2046
        %s2048 = vtos %v2047
        %s2049 = sadd.f32 %s2030, %s2048
        %s2050 = smul.f32 %s2049, 0.01
        %s2051 = smul.f32 %s2050, 0.0033333334
        %vm2052 = vcmp.eq.s32.totalorder %v1234, 0
        %v2053 = vstv %s756
        %v2054 = vsel %vm2052, %v2053, 0.0
        %vm2055 = vcmp.eq.s32.totalorder %v1234, 1
        %v2056 = vstv %s807
        %v2057 = vsel %vm2055, %v2056, %v2054
        %vm2058 = vcmp.eq.s32.totalorder %v1234, 2
        %v2059 = vstv %s900
        %v2060 = vsel %vm2058, %v2059, %v2057
        %vm2061 = vcmp.eq.s32.totalorder %v1234, 3
        %v2062 = vstv %s993
        %v2063 = vsel %vm2061, %v2062, %v2060
        %vm2064 = vcmp.eq.s32.totalorder %v1234, 4
        %v2065 = vstv %s1026
        %v2066 = vsel %vm2064, %v2065, %v2063
        %vm2067 = vcmp.eq.s32.totalorder %v1234, 5
        %v2068 = vstv %s1391
        %v2069 = vsel %vm2067, %v2068, %v2066
        %vm2070 = vcmp.eq.s32.totalorder %v1234, 6
        %v2071 = vstv %s1745
        %v2072 = vsel %vm2070, %v2071, %v2069
        %vm2073 = vcmp.eq.s32.totalorder %v1234, 7
        %v2074 = vstv %s2051
        %v2075 = vsel %vm2073, %v2074, %v2072
        %2076 = vst [vmem:[%s560] sm:$0x1] %v2075
        %p2077 = scmp.lt.s32.totalorder %s32, 1
        %s2078 = scalar_select %p2077, %s32, 1
        %s2079 = scalar_lea.vmem %s8, %s2078
        // Predicated region
        $region85: #{retinex_loss.1} parent=51 // pred_check
          %p2080 = pneg %p248
        $region86: #{retinex_loss.1} parent=51 // pred_check_branch
          %2082 = sbr.rel (%p2080) target = $region88
        $region87: #{retinex_loss.1} parent=51 // pred_region
          _
        $region88: #{retinex_loss.1} parent=51 // pred_fallthru
          _
      $region52: #{retinex_loss.1} parent=5 // pred_fallthru
        _
      %p2083 = scmp.le.s32.totalorder 2, %s27
      // Predicated region
      $region89: #{retinex_loss.1} parent=5 // pred_check
        %p2084 = pneg %p2083
      $region90: #{retinex_loss.1} parent=5 // pred_check_branch
        %2086 = sbr.rel (%p2084) target = $region92
      $region91: #{retinex_loss.1} parent=5 // pred_region
        %s2087 = ssub.s32 %s27, 2
        // Predicated region
        $region93: #{retinex_loss.1} parent=91 // pred_check
          %p2088 = pneg %p254
        $region94: #{retinex_loss.1} parent=91 // pred_check_branch
          %2090 = sbr.rel (%p2088) target = $region96
        $region95: #{retinex_loss.1} parent=91 // pred_region
          %p2091 = scmp.lt.s32.totalorder %s33, 1
          %s2092 = scalar_select %p2091, %s33, 1
          %s2093 = scalar_lea.vmem %s8, %s2092
        $region96: #{retinex_loss.1} parent=91 // pred_fallthru
          _
      $region92: #{retinex_loss.1} parent=5 // pred_fallthru
        _
    $region6: #{retinex_loss.1} parent=1 // loop_footer
      %s31 = sadd.s32 1, %s27
    $region7: #{retinex_loss.1} parent=1 // loop_footer_branch
      %26 = sbr.rel target = $region3
    $region8: #{retinex_loss.1} parent=1 // loop_exit
      _
    %2094 = vsyncpa [#allocation4], 1
    %s2095 = scalar_lea.sflag [#allocation4], 1
    %2096 = vsyncpa %s2095, 1
    %2097 = vsyncpa [#allocation6], 1
    %s2098 = scalar_lea.sflag [#allocation6], 1
    %2099 = vsyncpa %s2098, 1
    %2100 = vsyncpa [#allocation9], 1
    %s2101 = scalar_lea.sflag [#allocation9], 1
    %2102 = vsyncpa %s2101, 1
    %2103 = vsyncpa [#allocation12], 1
    %s2104 = scalar_lea.sflag [#allocation12], 1
    %2105 = vsyncpa %s2104, 1
    %2106 = vsyncpa [#allocation15], 1

</llo_original>
